<compile_context>
chip_gen: v7x
topology: tpu7x:2x2x1
jax: 0.10.0
libtpu: 0.0.40
codegen_flags: <defaults>
</compile_context>

<pallas_src>
import functools
import math

import jax
import jax.numpy as jnp
from jax.experimental import pallas as pl
from jax.experimental.pallas import tpu as pltpu


def target_repr_kernel(*refs, block_num, b_tile, seq_len, ksize):
    """One grid step == b_tile examples.

    refs = (ids_ref, table_ref,
            w2_b0_l0, b_b0_l0, w2_b1_l0, b_b1_l0, w2_b1_l1, b_b1_l1, ...,
            w_lin_ref, b_lin_ref, o_ref)
    """
    ids_ref, table_ref = refs[0], refs[1]
    w_lin_ref, b_lin_ref, o_ref = refs[-3], refs[-2], refs[-1]
    conv_refs = refs[2:-3]

    vocab = table_ref.shape[0]
    rows = b_tile * seq_len
    cdt = table_ref.dtype                      # compute dtype (bf16)

    # ---- Embedding: one-hot @ table (table row 0 is zero -> padding_idx=0) --
    ids_col = ids_ref[...]                                        # [rows, 1] i32
    iota_v = jax.lax.broadcasted_iota(jnp.int32, (rows, vocab), 1)
    onehot = jnp.where(iota_v == ids_col, 1.0, 0.0).astype(cdt)   # [rows, V]
    h0 = jnp.dot(onehot, table_ref[...],
                 preferred_element_type=jnp.float32)              # [rows, E] f32

    # ---- StackCNN blocks -----------------------------------------------------
    feats = []
    idx = 0
    for b in range(block_num):
        x = h0                                                    # f32 [rows, cin]
        depth = b + 1
        for _ in range(depth):
            w2_ref = conv_refs[idx]            # [ksize*cin, cout]  (bf16)
            bias_ref = conv_refs[idx + 1]      # [1, cout]          (f32)
            idx += 2
            # im2col: lane-concat the ksize shifted views -> ONE K=ksize*cin
            # matmul per conv layer. Rows that mix adjacent examples are finite
            # garbage and are excluded at the pooling step below.
            zpad = jnp.zeros((ksize - 1, x.shape[-1]), jnp.float32)
            xe = jnp.concatenate([x, zpad], axis=0)               # [rows+k-1, cin]
            patches = jnp.concatenate(
                [xe[k:k + rows, :] for k in range(ksize)],
                axis=-1).astype(cdt)                              # [rows, k*cin]
            y = jnp.dot(patches, w2_ref[...],
                        preferred_element_type=jnp.float32)       # [rows, cout] f32
            x = jnp.maximum(y + bias_ref[...], 0.0)               # ReLU (f32)

        # AdaptiveMaxPool1d(1): per-example max over the valid conv rows only.
        valid_len = seq_len - depth * (ksize - 1)
        pooled = jnp.concatenate(
            [jnp.max(x[e * seq_len:e * seq_len + valid_len, :],
                     axis=0, keepdims=True)
             for e in range(b_tile)], axis=0)                     # [b_tile, cout]
        feats.append(pooled)

    # ---- concat(feats) @ W_lin as ONE matmul (weights are zero-padded). -----
    feat = jnp.concatenate(feats, axis=-1).astype(cdt)            # [b_tile, bn*cout]
    out = jnp.dot(feat, w_lin_ref[...],
                  preferred_element_type=jnp.float32) + b_lin_ref[...]
    o_ref[...] = out.astype(o_ref.dtype)


def _prepare_params(params, cpad=128, compute_dtype=jnp.bfloat16):
    """Pad channels 96->128, reshape conv weights for im2col, cast to bf16."""
    table = params["embed"].astype(jnp.float32)
    table = table.at[0].set(0.0)               # enforce padding_idx=0 semantics
    emb_dim = table.shape[1]
    filters = params["linear"]["b"].shape[-1]
    block_num = len(params["blocks"])
    assert filters <= cpad

    conv = []
    for blk in params["blocks"]:
        for li, layer in enumerate(blk):
            w = layer["w"].astype(jnp.float32)                 # [K, cin, cout]
            k, cin, cout = w.shape
            cin_t = emb_dim if li == 0 else cpad
            w = jnp.pad(w, ((0, 0), (0, cin_t - cin), (0, cpad - cout)))
            w2 = w.reshape(k * cin_t, cpad).astype(compute_dtype)
            bias = jnp.pad(layer["b"].reshape(1, -1).astype(jnp.float32),
                           ((0, 0), (0, cpad - cout)))
            conv.append((w2, bias))

    w_lin = params["linear"]["w"].astype(jnp.float32)          # [bn*filters, filters]
    w_lin_p = jnp.zeros((block_num * cpad, cpad), jnp.float32)
    for b in range(block_num):
        w_lin_p = w_lin_p.at[b * cpad:b * cpad + filters, :filters].set(
            w_lin[b * filters:(b + 1) * filters, :])
    b_lin_p = jnp.pad(params["linear"]["b"].reshape(1, -1).astype(jnp.float32),
                      ((0, 0), (0, cpad - filters)))

    return dict(table=table.astype(compute_dtype), conv=conv,
                w_lin=w_lin_p.astype(compute_dtype), b_lin=b_lin_p)


def target_representation_forward(ids, params, *, b_tile=8):
    """Fused forward pass of TargetRepresentation. ids: [B, L] int tokens."""
    batch, seq_len = ids.shape
    blocks = params["blocks"]
    block_num = len(blocks)
    ksize = blocks[0][0]["w"].shape[0]
    filters = params["linear"]["b"].shape[-1]
    assert seq_len > block_num * (ksize - 1), (
        "sequence too short for the deepest conv stack")
    assert b_tile % 8 == 0, "b_tile must be a multiple of 8 (sublane tile)"

    cpad = 128
    prep = _prepare_params(params, cpad=cpad)

    # Pad batch to a multiple of b_tile (padded rows use token 0, discarded).
    padded_batch = ((batch + b_tile - 1) // b_tile) * b_tile
    ids_i32 = ids.astype(jnp.int32)
    if padded_batch != batch:
        ids_i32 = jnp.pad(ids_i32, ((0, padded_batch - batch), (0, 0)))
    ids_flat = ids_i32.reshape(padded_batch * seq_len, 1)      # contiguous slab

    rows = b_tile * seq_len
    grid = (padded_batch // b_tile,)

    inputs = [ids_flat, prep["table"]]
    in_specs = [
        pl.BlockSpec((rows, 1), lambda i: (i, 0)),             # per-step ids
        pl.BlockSpec(prep["table"].shape, lambda i: (0, 0)),   # resident table
    ]
    for (w2, bias) in prep["conv"]:
        inputs += [w2, bias]
        in_specs += [pl.BlockSpec(w2.shape, lambda i: (0, 0)),
                     pl.BlockSpec(bias.shape, lambda i: (0, 0))]
    inputs += [prep["w_lin"], prep["b_lin"]]
    in_specs += [pl.BlockSpec(prep["w_lin"].shape, lambda i: (0, 0)),
                 pl.BlockSpec(prep["b_lin"].shape, lambda i: (0, 0))]

    kernel = functools.partial(target_repr_kernel, block_num=block_num,
                               b_tile=b_tile, seq_len=seq_len, ksize=ksize)
    out = pl.pallas_call(
        kernel,
        out_shape=jax.ShapeDtypeStruct((padded_batch, cpad), jnp.float32),
        grid=grid,
        in_specs=in_specs,
        out_specs=pl.BlockSpec((b_tile, cpad), lambda i: (i, 0)),
        compiler_params=pltpu.CompilerParams(
            dimension_semantics=("parallel",)),   # shards steps over TCs on v7x
    )(*inputs)
    return out[:batch, :filters]


def init_params(key, block_num, vocab_size, embedding_num, filters=96, ksize=3):
    """Deterministic parameter init; shapes follow the PyTorch module."""
    def nxt():
        nonlocal key
        key, sub = jax.random.split(key)
        return sub

    embed = jax.random.normal(nxt(), (vocab_size, embedding_num), jnp.float32)
    embed = embed.at[0].set(0.0)                 # nn.Embedding padding_idx=0

    blocks = []
    for b in range(block_num):
        layers = []
        cin = embedding_num
        for _ in range(b + 1):
            bound = 1.0 / math.sqrt(cin * ksize)
            w = jax.random.uniform(nxt(), (ksize, cin, filters),
                                   jnp.float32, -bound, bound)
            bias = jax.random.uniform(nxt(), (1, filters),
                                      jnp.float32, -bound, bound)
            layers.append(dict(w=w, b=bias))
            cin = filters
        blocks.append(layers)

    bound = 1.0 / math.sqrt(block_num * filters)
    w_lin = jax.random.uniform(nxt(), (block_num * filters, filters),
                               jnp.float32, -bound, bound)
    b_lin = jax.random.uniform(nxt(), (1, filters), jnp.float32, -bound, bound)
    return dict(embed=embed, blocks=blocks, linear=dict(w=w_lin, b=b_lin))


def reference_forward(ids, params):
    """Pure-JAX f32 reference (lax.conv) to validate the fused kernel."""
    table = params["embed"]
    emb = jnp.take(table, ids, axis=0)             # [B, L, E]
    x = jnp.transpose(emb, (0, 2, 1))              # [B, E, L]  (NCL)
    feats = []
    for blk in params["blocks"]:
        h = x
        for layer in blk:
            w_oik = jnp.transpose(layer["w"], (2, 1, 0))     # [cout, cin, K]
            h = jax.lax.conv_general_dilated(
                h, w_oik, window_strides=(1,), padding="VALID",
                dimension_numbers=("NCH", "OIH", "NCH"))
            h = jnp.maximum(h + layer["b"][0][None, :, None], 0.0)
        feats.append(jnp.max(h, axis=-1))          # AdaptiveMaxPool1d(1)+squeeze
    feat = jnp.concatenate(feats, axis=-1)
    return feat @ params["linear"]["w"] + params["linear"]["b"]


if __name__ == "__main__":
    key = jax.random.PRNGKey(0)
    block_num = 3
    vocab_size = 26
    embedding_num = 128
    seq_len = 32
    batch = 16          # 2 grid steps of 8 examples each (even grid for v7x)
    filters = 96

    key, kp, ki = jax.random.split(key, 3)
    params = init_params(kp, block_num, vocab_size, embedding_num, filters)
    ids = jax.random.randint(ki, (batch, seq_len), 0, vocab_size, jnp.int32)

    out = jax.block_until_ready(target_representation_forward(ids, params))
    ref = jax.block_until_ready(reference_forward(ids, params))

    assert out.shape == (batch, filters), out.shape
    assert bool(jnp.all(jnp.isfinite(out)))
    # Tolerance accounts for bf16 MXU operands (f32 accumulation) in the kernel
    # vs. the pure-f32 reference; a wrong kernel produces O(1) errors.
    max_err = float(jnp.max(jnp.abs(out - ref)))
    assert max_err < 1.5e-1, f"mismatch vs reference, max abs err={max_err}"
    print("KERNEL_OK")
</pallas_src>

<mosaic_0001>
module attributes {stable_mosaic.version = 11 : i64} {
  func.func @target_repr_kernel(%arg0: i32, %arg1: memref<256x1xi32, #tpu.memory_space<vmem>>, %arg2: memref<26x128xbf16, #tpu.memory_space<vmem>>, %arg3: memref<384x128xbf16, #tpu.memory_space<vmem>>, %arg4: memref<1x128xf32, #tpu.memory_space<vmem>>, %arg5: memref<384x128xbf16, #tpu.memory_space<vmem>>, %arg6: memref<1x128xf32, #tpu.memory_space<vmem>>, %arg7: memref<384x128xbf16, #tpu.memory_space<vmem>>, %arg8: memref<1x128xf32, #tpu.memory_space<vmem>>, %arg9: memref<384x128xbf16, #tpu.memory_space<vmem>>, %arg10: memref<1x128xf32, #tpu.memory_space<vmem>>, %arg11: memref<384x128xbf16, #tpu.memory_space<vmem>>, %arg12: memref<1x128xf32, #tpu.memory_space<vmem>>, %arg13: memref<384x128xbf16, #tpu.memory_space<vmem>>, %arg14: memref<1x128xf32, #tpu.memory_space<vmem>>, %arg15: memref<384x128xbf16, #tpu.memory_space<vmem>>, %arg16: memref<1x128xf32, #tpu.memory_space<vmem>>, %arg17: memref<8x128xf32, #tpu.memory_space<vmem>>) attributes {dimension_semantics = [#tpu.dimension_semantics<parallel>], iteration_bounds = array<i64: 2>, scalar_prefetch = 0 : i64, scratch_operands = 0 : i64, tpu.core_type = #tpu.core_type<tc>, window_params = [{transform_indices = @transform_0, window_bounds = array<i64: 256, 1>}, {pipeline_mode = #tpu.pipeline_mode<synchronous>, transform_indices = @transform_1, window_bounds = array<i64: 26, 128>}, {pipeline_mode = #tpu.pipeline_mode<synchronous>, transform_indices = @transform_2, window_bounds = array<i64: 384, 128>}, {pipeline_mode = #tpu.pipeline_mode<synchronous>, transform_indices = @transform_3, window_bounds = array<i64: 1, 128>}, {pipeline_mode = #tpu.pipeline_mode<synchronous>, transform_indices = @transform_4, window_bounds = array<i64: 384, 128>}, {pipeline_mode = #tpu.pipeline_mode<synchronous>, transform_indices = @transform_5, window_bounds = array<i64: 1, 128>}, {pipeline_mode = #tpu.pipeline_mode<synchronous>, transform_indices = @transform_6, window_bounds = array<i64: 384, 128>}, {pipeline_mode = #tpu.pipeline_mode<synchronous>, transform_indices = @transform_7, window_bounds = array<i64: 1, 128>}, {pipeline_mode = #tpu.pipeline_mode<synchronous>, transform_indices = @transform_8, window_bounds = array<i64: 384, 128>}, {pipeline_mode = #tpu.pipeline_mode<synchronous>, transform_indices = @transform_9, window_bounds = array<i64: 1, 128>}, {pipeline_mode = #tpu.pipeline_mode<synchronous>, transform_indices = @transform_10, window_bounds = array<i64: 384, 128>}, {pipeline_mode = #tpu.pipeline_mode<synchronous>, transform_indices = @transform_11, window_bounds = array<i64: 1, 128>}, {pipeline_mode = #tpu.pipeline_mode<synchronous>, transform_indices = @transform_12, window_bounds = array<i64: 384, 128>}, {pipeline_mode = #tpu.pipeline_mode<synchronous>, transform_indices = @transform_13, window_bounds = array<i64: 1, 128>}, {pipeline_mode = #tpu.pipeline_mode<synchronous>, transform_indices = @transform_14, window_bounds = array<i64: 384, 128>}, {pipeline_mode = #tpu.pipeline_mode<synchronous>, transform_indices = @transform_15, window_bounds = array<i64: 1, 128>}, {transform_indices = @transform_16, window_bounds = array<i64: 8, 128>}]} {
    %c0 = arith.constant 0 : index
    %c0_0 = arith.constant 0 : index
    %0 = vector.load %arg1[%c0, %c0_0] : memref<256x1xi32, #tpu.memory_space<vmem>>, vector<256x1xi32>
    %1 = tpu.iota {dimensions = array<i32: 1>} : vector<256x26xi32>
    %2 = vector.broadcast %0 : vector<256x1xi32> to vector<256x26xi32>
    %3 = arith.cmpi eq, %1, %2 : vector<256x26xi32>
    %cst = arith.constant 1.000000e+00 : f32
    %cst_1 = arith.constant 0.000000e+00 : f32
    %4 = vector.broadcast %cst : f32 to vector<256x26xf32>
    %5 = vector.broadcast %cst_1 : f32 to vector<256x26xf32>
    %6 = arith.select %3, %4, %5 : vector<256x26xi1>, vector<256x26xf32>
    %7 = arith.truncf %6 : vector<256x26xf32> to vector<256x26xbf16>
    %c0_2 = arith.constant 0 : index
    %c0_3 = arith.constant 0 : index
    %8 = vector.load %arg2[%c0_2, %c0_3] : memref<26x128xbf16, #tpu.memory_space<vmem>>, vector<26x128xbf16>
    %cst_4 = arith.constant dense<0.000000e+00> : vector<256x128xf32>
    %9 = tpu.matmul %7, %8, %cst_4 {dimension_numbers = #tpu.dot_dimension_numbers<[1], [0], [0], [1], [0, 0, 1, 1], [], []>} : vector<256x26xbf16>, vector<26x128xbf16>, vector<256x128xf32> -> vector<256x128xf32>
    %cst_5 = arith.constant 0.000000e+00 : f32
    %10 = vector.broadcast %cst_5 : f32 to vector<2x128xf32>
    %11 = tpu.concatenate %9, %10 in 0 : vector<256x128xf32>, vector<2x128xf32> -> vector<258x128xf32>
    %12 = vector.extract_strided_slice %11 {offsets = [0, 0], sizes = [256, 128], strides = [1, 1]} : vector<258x128xf32> to vector<256x128xf32>
    %13 = vector.extract_strided_slice %11 {offsets = [1, 0], sizes = [256, 128], strides = [1, 1]} : vector<258x128xf32> to vector<256x128xf32>
    %14 = vector.extract_strided_slice %11 {offsets = [2, 0], sizes = [256, 128], strides = [1, 1]} : vector<258x128xf32> to vector<256x128xf32>
    %15 = tpu.concatenate %12, %13, %14 in 1 : vector<256x128xf32>, vector<256x128xf32>, vector<256x128xf32> -> vector<256x384xf32>
    %16 = arith.truncf %15 : vector<256x384xf32> to vector<256x384xbf16>
    %c0_6 = arith.constant 0 : index
    %c0_7 = arith.constant 0 : index
    %17 = vector.load %arg3[%c0_6, %c0_7] : memref<384x128xbf16, #tpu.memory_space<vmem>>, vector<384x128xbf16>
    %cst_8 = arith.constant dense<0.000000e+00> : vector<256x128xf32>
    %18 = tpu.matmul %16, %17, %cst_8 {dimension_numbers = #tpu.dot_dimension_numbers<[1], [0], [0], [1], [0, 0, 1, 1], [], []>} : vector<256x384xbf16>, vector<384x128xbf16>, vector<256x128xf32> -> vector<256x128xf32>
    %c0_9 = arith.constant 0 : index
    %c0_10 = arith.constant 0 : index
    %19 = vector.load %arg4[%c0_9, %c0_10] : memref<1x128xf32, #tpu.memory_space<vmem>>, vector<1x128xf32>
    %20 = vector.broadcast %19 : vector<1x128xf32> to vector<256x128xf32>
    %21 = arith.addf %18, %20 : vector<256x128xf32>
    %cst_11 = arith.constant 0.000000e+00 : f32
    %22 = vector.broadcast %cst_11 : f32 to vector<256x128xf32>
    %23 = arith.maximumf %21, %22 : vector<256x128xf32>
    %24 = vector.extract_strided_slice %23 {offsets = [0, 0], sizes = [30, 128], strides = [1, 1]} : vector<256x128xf32> to vector<30x128xf32>
    %cst_12 = arith.constant dense<0xFF800000> : vector<128xf32>
    %25 = vector.multi_reduction <maximumf>, %24, %cst_12 [0] : vector<30x128xf32> to vector<128xf32>
    %26 = vector.shape_cast %25 : vector<128xf32> to vector<1x128xf32>
    %27 = vector.extract_strided_slice %23 {offsets = [32, 0], sizes = [30, 128], strides = [1, 1]} : vector<256x128xf32> to vector<30x128xf32>
    %cst_13 = arith.constant dense<0xFF800000> : vector<128xf32>
    %28 = vector.multi_reduction <maximumf>, %27, %cst_13 [0] : vector<30x128xf32> to vector<128xf32>
    %29 = vector.shape_cast %28 : vector<128xf32> to vector<1x128xf32>
    %30 = vector.extract_strided_slice %23 {offsets = [64, 0], sizes = [30, 128], strides = [1, 1]} : vector<256x128xf32> to vector<30x128xf32>
    %cst_14 = arith.constant dense<0xFF800000> : vector<128xf32>
    %31 = vector.multi_reduction <maximumf>, %30, %cst_14 [0] : vector<30x128xf32> to vector<128xf32>
    %32 = vector.shape_cast %31 : vector<128xf32> to vector<1x128xf32>
    %33 = vector.extract_strided_slice %23 {offsets = [96, 0], sizes = [30, 128], strides = [1, 1]} : vector<256x128xf32> to vector<30x128xf32>
    %cst_15 = arith.constant dense<0xFF800000> : vector<128xf32>
    %34 = vector.multi_reduction <maximumf>, %33, %cst_15 [0] : vector<30x128xf32> to vector<128xf32>
    %35 = vector.shape_cast %34 : vector<128xf32> to vector<1x128xf32>
    %36 = vector.extract_strided_slice %23 {offsets = [128, 0], sizes = [30, 128], strides = [1, 1]} : vector<256x128xf32> to vector<30x128xf32>
    %cst_16 = arith.constant dense<0xFF800000> : vector<128xf32>
    %37 = vector.multi_reduction <maximumf>, %36, %cst_16 [0] : vector<30x128xf32> to vector<128xf32>
    %38 = vector.shape_cast %37 : vector<128xf32> to vector<1x128xf32>
    %39 = vector.extract_strided_slice %23 {offsets = [160, 0], sizes = [30, 128], strides = [1, 1]} : vector<256x128xf32> to vector<30x128xf32>
    %cst_17 = arith.constant dense<0xFF800000> : vector<128xf32>
    %40 = vector.multi_reduction <maximumf>, %39, %cst_17 [0] : vector<30x128xf32> to vector<128xf32>
    %41 = vector.shape_cast %40 : vector<128xf32> to vector<1x128xf32>
    %42 = vector.extract_strided_slice %23 {offsets = [192, 0], sizes = [30, 128], strides = [1, 1]} : vector<256x128xf32> to vector<30x128xf32>
    %cst_18 = arith.constant dense<0xFF800000> : vector<128xf32>
    %43 = vector.multi_reduction <maximumf>, %42, %cst_18 [0] : vector<30x128xf32> to vector<128xf32>
    %44 = vector.shape_cast %43 : vector<128xf32> to vector<1x128xf32>
    %45 = vector.extract_strided_slice %23 {offsets = [224, 0], sizes = [30, 128], strides = [1, 1]} : vector<256x128xf32> to vector<30x128xf32>
    %cst_19 = arith.constant dense<0xFF800000> : vector<128xf32>
    %46 = vector.multi_reduction <maximumf>, %45, %cst_19 [0] : vector<30x128xf32> to vector<128xf32>
    %47 = vector.shape_cast %46 : vector<128xf32> to vector<1x128xf32>
    %48 = tpu.concatenate %26, %29, %32, %35, %38, %41, %44, %47 in 0 : vector<1x128xf32>, vector<1x128xf32>, vector<1x128xf32>, vector<1x128xf32>, vector<1x128xf32>, vector<1x128xf32>, vector<1x128xf32>, vector<1x128xf32> -> vector<8x128xf32>
    %cst_20 = arith.constant 0.000000e+00 : f32
    %49 = vector.broadcast %cst_20 : f32 to vector<2x128xf32>
    %50 = tpu.concatenate %9, %49 in 0 : vector<256x128xf32>, vector<2x128xf32> -> vector<258x128xf32>
    %51 = vector.extract_strided_slice %50 {offsets = [0, 0], sizes = [256, 128], strides = [1, 1]} : vector<258x128xf32> to vector<256x128xf32>
    %52 = vector.extract_strided_slice %50 {offsets = [1, 0], sizes = [256, 128], strides = [1, 1]} : vector<258x128xf32> to vector<256x128xf32>
    %53 = vector.extract_strided_slice %50 {offsets = [2, 0], sizes = [256, 128], strides = [1, 1]} : vector<258x128xf32> to vector<256x128xf32>
    %54 = tpu.concatenate %51, %52, %53 in 1 : vector<256x128xf32>, vector<256x128xf32>, vector<256x128xf32> -> vector<256x384xf32>
    %55 = arith.truncf %54 : vector<256x384xf32> to vector<256x384xbf16>
    %c0_21 = arith.constant 0 : index
    %c0_22 = arith.constant 0 : index
    %56 = vector.load %arg5[%c0_21, %c0_22] : memref<384x128xbf16, #tpu.memory_space<vmem>>, vector<384x128xbf16>
    %cst_23 = arith.constant dense<0.000000e+00> : vector<256x128xf32>
    %57 = tpu.matmul %55, %56, %cst_23 {dimension_numbers = #tpu.dot_dimension_numbers<[1], [0], [0], [1], [0, 0, 1, 1], [], []>} : vector<256x384xbf16>, vector<384x128xbf16>, vector<256x128xf32> -> vector<256x128xf32>
    %c0_24 = arith.constant 0 : index
    %c0_25 = arith.constant 0 : index
    %58 = vector.load %arg6[%c0_24, %c0_25] : memref<1x128xf32, #tpu.memory_space<vmem>>, vector<1x128xf32>
    %59 = vector.broadcast %58 : vector<1x128xf32> to vector<256x128xf32>
    %60 = arith.addf %57, %59 : vector<256x128xf32>
    %cst_26 = arith.constant 0.000000e+00 : f32
    %61 = vector.broadcast %cst_26 : f32 to vector<256x128xf32>
    %62 = arith.maximumf %60, %61 : vector<256x128xf32>
    %cst_27 = arith.constant 0.000000e+00 : f32
    %63 = vector.broadcast %cst_27 : f32 to vector<2x128xf32>
    %64 = tpu.concatenate %62, %63 in 0 : vector<256x128xf32>, vector<2x128xf32> -> vector<258x128xf32>
    %65 = vector.extract_strided_slice %64 {offsets = [0, 0], sizes = [256, 128], strides = [1, 1]} : vector<258x128xf32> to vector<256x128xf32>
    %66 = vector.extract_strided_slice %64 {offsets = [1, 0], sizes = [256, 128], strides = [1, 1]} : vector<258x128xf32> to vector<256x128xf32>
    %67 = vector.extract_strided_slice %64 {offsets = [2, 0], sizes = [256, 128], strides = [1, 1]} : vector<258x128xf32> to vector<256x128xf32>
    %68 = tpu.concatenate %65, %66, %67 in 1 : vector<256x128xf32>, vector<256x128xf32>, vector<256x128xf32> -> vector<256x384xf32>
    %69 = arith.truncf %68 : vector<256x384xf32> to vector<256x384xbf16>
    %c0_28 = arith.constant 0 : index
    %c0_29 = arith.constant 0 : index
    %70 = vector.load %arg7[%c0_28, %c0_29] : memref<384x128xbf16, #tpu.memory_space<vmem>>, vector<384x128xbf16>
    %cst_30 = arith.constant dense<0.000000e+00> : vector<256x128xf32>
    %71 = tpu.matmul %69, %70, %cst_30 {dimension_numbers = #tpu.dot_dimension_numbers<[1], [0], [0], [1], [0, 0, 1, 1], [], []>} : vector<256x384xbf16>, vector<384x128xbf16>, vector<256x128xf32> -> vector<256x128xf32>
    %c0_31 = arith.constant 0 : index
    %c0_32 = arith.constant 0 : index
    %72 = vector.load %arg8[%c0_31, %c0_32] : memref<1x128xf32, #tpu.memory_space<vmem>>, vector<1x128xf32>
    %73 = vector.broadcast %72 : vector<1x128xf32> to vector<256x128xf32>
    %74 = arith.addf %71, %73 : vector<256x128xf32>
    %cst_33 = arith.constant 0.000000e+00 : f32
    %75 = vector.broadcast %cst_33 : f32 to vector<256x128xf32>
    %76 = arith.maximumf %74, %75 : vector<256x128xf32>
    %77 = vector.extract_strided_slice %76 {offsets = [0, 0], sizes = [28, 128], strides = [1, 1]} : vector<256x128xf32> to vector<28x128xf32>
    %cst_34 = arith.constant dense<0xFF800000> : vector<128xf32>
    %78 = vector.multi_reduction <maximumf>, %77, %cst_34 [0] : vector<28x128xf32> to vector<128xf32>
    %79 = vector.shape_cast %78 : vector<128xf32> to vector<1x128xf32>
    %80 = vector.extract_strided_slice %76 {offsets = [32, 0], sizes = [28, 128], strides = [1, 1]} : vector<256x128xf32> to vector<28x128xf32>
    %cst_35 = arith.constant dense<0xFF800000> : vector<128xf32>
    %81 = vector.multi_reduction <maximumf>, %80, %cst_35 [0] : vector<28x128xf32> to vector<128xf32>
    %82 = vector.shape_cast %81 : vector<128xf32> to vector<1x128xf32>
    %83 = vector.extract_strided_slice %76 {offsets = [64, 0], sizes = [28, 128], strides = [1, 1]} : vector<256x128xf32> to vector<28x128xf32>
    %cst_36 = arith.constant dense<0xFF800000> : vector<128xf32>
    %84 = vector.multi_reduction <maximumf>, %83, %cst_36 [0] : vector<28x128xf32> to vector<128xf32>
    %85 = vector.shape_cast %84 : vector<128xf32> to vector<1x128xf32>
    %86 = vector.extract_strided_slice %76 {offsets = [96, 0], sizes = [28, 128], strides = [1, 1]} : vector<256x128xf32> to vector<28x128xf32>
    %cst_37 = arith.constant dense<0xFF800000> : vector<128xf32>
    %87 = vector.multi_reduction <maximumf>, %86, %cst_37 [0] : vector<28x128xf32> to vector<128xf32>
    %88 = vector.shape_cast %87 : vector<128xf32> to vector<1x128xf32>
    %89 = vector.extract_strided_slice %76 {offsets = [128, 0], sizes = [28, 128], strides = [1, 1]} : vector<256x128xf32> to vector<28x128xf32>
    %cst_38 = arith.constant dense<0xFF800000> : vector<128xf32>
    %90 = vector.multi_reduction <maximumf>, %89, %cst_38 [0] : vector<28x128xf32> to vector<128xf32>
    %91 = vector.shape_cast %90 : vector<128xf32> to vector<1x128xf32>
    %92 = vector.extract_strided_slice %76 {offsets = [160, 0], sizes = [28, 128], strides = [1, 1]} : vector<256x128xf32> to vector<28x128xf32>
    %cst_39 = arith.constant dense<0xFF800000> : vector<128xf32>
    %93 = vector.multi_reduction <maximumf>, %92, %cst_39 [0] : vector<28x128xf32> to vector<128xf32>
    %94 = vector.shape_cast %93 : vector<128xf32> to vector<1x128xf32>
    %95 = vector.extract_strided_slice %76 {offsets = [192, 0], sizes = [28, 128], strides = [1, 1]} : vector<256x128xf32> to vector<28x128xf32>
    %cst_40 = arith.constant dense<0xFF800000> : vector<128xf32>
    %96 = vector.multi_reduction <maximumf>, %95, %cst_40 [0] : vector<28x128xf32> to vector<128xf32>
    %97 = vector.shape_cast %96 : vector<128xf32> to vector<1x128xf32>
    %98 = vector.extract_strided_slice %76 {offsets = [224, 0], sizes = [28, 128], strides = [1, 1]} : vector<256x128xf32> to vector<28x128xf32>
    %cst_41 = arith.constant dense<0xFF800000> : vector<128xf32>
    %99 = vector.multi_reduction <maximumf>, %98, %cst_41 [0] : vector<28x128xf32> to vector<128xf32>
    %100 = vector.shape_cast %99 : vector<128xf32> to vector<1x128xf32>
    %101 = tpu.concatenate %79, %82, %85, %88, %91, %94, %97, %100 in 0 : vector<1x128xf32>, vector<1x128xf32>, vector<1x128xf32>, vector<1x128xf32>, vector<1x128xf32>, vector<1x128xf32>, vector<1x128xf32>, vector<1x128xf32> -> vector<8x128xf32>
    %cst_42 = arith.constant 0.000000e+00 : f32
    %102 = vector.broadcast %cst_42 : f32 to vector<2x128xf32>
    %103 = tpu.concatenate %9, %102 in 0 : vector<256x128xf32>, vector<2x128xf32> -> vector<258x128xf32>
    %104 = vector.extract_strided_slice %103 {offsets = [0, 0], sizes = [256, 128], strides = [1, 1]} : vector<258x128xf32> to vector<256x128xf32>
    %105 = vector.extract_strided_slice %103 {offsets = [1, 0], sizes = [256, 128], strides = [1, 1]} : vector<258x128xf32> to vector<256x128xf32>
    %106 = vector.extract_strided_slice %103 {offsets = [2, 0], sizes = [256, 128], strides = [1, 1]} : vector<258x128xf32> to vector<256x128xf32>
    %107 = tpu.concatenate %104, %105, %106 in 1 : vector<256x128xf32>, vector<256x128xf32>, vector<256x128xf32> -> vector<256x384xf32>
    %108 = arith.truncf %107 : vector<256x384xf32> to vector<256x384xbf16>
    %c0_43 = arith.constant 0 : index
    %c0_44 = arith.constant 0 : index
    %109 = vector.load %arg9[%c0_43, %c0_44] : memref<384x128xbf16, #tpu.memory_space<vmem>>, vector<384x128xbf16>
    %cst_45 = arith.constant dense<0.000000e+00> : vector<256x128xf32>
    %110 = tpu.matmul %108, %109, %cst_45 {dimension_numbers = #tpu.dot_dimension_numbers<[1], [0], [0], [1], [0, 0, 1, 1], [], []>} : vector<256x384xbf16>, vector<384x128xbf16>, vector<256x128xf32> -> vector<256x128xf32>
    %c0_46 = arith.constant 0 : index
    %c0_47 = arith.constant 0 : index
    %111 = vector.load %arg10[%c0_46, %c0_47] : memref<1x128xf32, #tpu.memory_space<vmem>>, vector<1x128xf32>
    %112 = vector.broadcast %111 : vector<1x128xf32> to vector<256x128xf32>
    %113 = arith.addf %110, %112 : vector<256x128xf32>
    %cst_48 = arith.constant 0.000000e+00 : f32
    %114 = vector.broadcast %cst_48 : f32 to vector<256x128xf32>
    %115 = arith.maximumf %113, %114 : vector<256x128xf32>
    %cst_49 = arith.constant 0.000000e+00 : f32
    %116 = vector.broadcast %cst_49 : f32 to vector<2x128xf32>
    %117 = tpu.concatenate %115, %116 in 0 : vector<256x128xf32>, vector<2x128xf32> -> vector<258x128xf32>
    %118 = vector.extract_strided_slice %117 {offsets = [0, 0], sizes = [256, 128], strides = [1, 1]} : vector<258x128xf32> to vector<256x128xf32>
    %119 = vector.extract_strided_slice %117 {offsets = [1, 0], sizes = [256, 128], strides = [1, 1]} : vector<258x128xf32> to vector<256x128xf32>
    %120 = vector.extract_strided_slice %117 {offsets = [2, 0], sizes = [256, 128], strides = [1, 1]} : vector<258x128xf32> to vector<256x128xf32>
    %121 = tpu.concatenate %118, %119, %120 in 1 : vector<256x128xf32>, vector<256x128xf32>, vector<256x128xf32> -> vector<256x384xf32>
    %122 = arith.truncf %121 : vector<256x384xf32> to vector<256x384xbf16>
    %c0_50 = arith.constant 0 : index
    %c0_51 = arith.constant 0 : index
    %123 = vector.load %arg11[%c0_50, %c0_51] : memref<384x128xbf16, #tpu.memory_space<vmem>>, vector<384x128xbf16>
    %cst_52 = arith.constant dense<0.000000e+00> : vector<256x128xf32>
    %124 = tpu.matmul %122, %123, %cst_52 {dimension_numbers = #tpu.dot_dimension_numbers<[1], [0], [0], [1], [0, 0, 1, 1], [], []>} : vector<256x384xbf16>, vector<384x128xbf16>, vector<256x128xf32> -> vector<256x128xf32>
    %c0_53 = arith.constant 0 : index
    %c0_54 = arith.constant 0 : index
    %125 = vector.load %arg12[%c0_53, %c0_54] : memref<1x128xf32, #tpu.memory_space<vmem>>, vector<1x128xf32>
    %126 = vector.broadcast %125 : vector<1x128xf32> to vector<256x128xf32>
    %127 = arith.addf %124, %126 : vector<256x128xf32>
    %cst_55 = arith.constant 0.000000e+00 : f32
    %128 = vector.broadcast %cst_55 : f32 to vector<256x128xf32>
    %129 = arith.maximumf %127, %128 : vector<256x128xf32>
    %cst_56 = arith.constant 0.000000e+00 : f32
    %130 = vector.broadcast %cst_56 : f32 to vector<2x128xf32>
    %131 = tpu.concatenate %129, %130 in 0 : vector<256x128xf32>, vector<2x128xf32> -> vector<258x128xf32>
    %132 = vector.extract_strided_slice %131 {offsets = [0, 0], sizes = [256, 128], strides = [1, 1]} : vector<258x128xf32> to vector<256x128xf32>
    %133 = vector.extract_strided_slice %131 {offsets = [1, 0], sizes = [256, 128], strides = [1, 1]} : vector<258x128xf32> to vector<256x128xf32>
    %134 = vector.extract_strided_slice %131 {offsets = [2, 0], sizes = [256, 128], strides = [1, 1]} : vector<258x128xf32> to vector<256x128xf32>
    %135 = tpu.concatenate %132, %133, %134 in 1 : vector<256x128xf32>, vector<256x128xf32>, vector<256x128xf32> -> vector<256x384xf32>
    %136 = arith.truncf %135 : vector<256x384xf32> to vector<256x384xbf16>
    %c0_57 = arith.constant 0 : index
    %c0_58 = arith.constant 0 : index
    %137 = vector.load %arg13[%c0_57, %c0_58] : memref<384x128xbf16, #tpu.memory_space<vmem>>, vector<384x128xbf16>
    %cst_59 = arith.constant dense<0.000000e+00> : vector<256x128xf32>
    %138 = tpu.matmul %136, %137, %cst_59 {dimension_numbers = #tpu.dot_dimension_numbers<[1], [0], [0], [1], [0, 0, 1, 1], [], []>} : vector<256x384xbf16>, vector<384x128xbf16>, vector<256x128xf32> -> vector<256x128xf32>
    %c0_60 = arith.constant 0 : index
    %c0_61 = arith.constant 0 : index
    %139 = vector.load %arg14[%c0_60, %c0_61] : memref<1x128xf32, #tpu.memory_space<vmem>>, vector<1x128xf32>
    %140 = vector.broadcast %139 : vector<1x128xf32> to vector<256x128xf32>
    %141 = arith.addf %138, %140 : vector<256x128xf32>
    %cst_62 = arith.constant 0.000000e+00 : f32
    %142 = vector.broadcast %cst_62 : f32 to vector<256x128xf32>
    %143 = arith.maximumf %141, %142 : vector<256x128xf32>
    %144 = vector.extract_strided_slice %143 {offsets = [0, 0], sizes = [26, 128], strides = [1, 1]} : vector<256x128xf32> to vector<26x128xf32>
    %cst_63 = arith.constant dense<0xFF800000> : vector<128xf32>
    %145 = vector.multi_reduction <maximumf>, %144, %cst_63 [0] : vector<26x128xf32> to vector<128xf32>
    %146 = vector.shape_cast %145 : vector<128xf32> to vector<1x128xf32>
    %147 = vector.extract_strided_slice %143 {offsets = [32, 0], sizes = [26, 128], strides = [1, 1]} : vector<256x128xf32> to vector<26x128xf32>
    %cst_64 = arith.constant dense<0xFF800000> : vector<128xf32>
    %148 = vector.multi_reduction <maximumf>, %147, %cst_64 [0] : vector<26x128xf32> to vector<128xf32>
    %149 = vector.shape_cast %148 : vector<128xf32> to vector<1x128xf32>
    %150 = vector.extract_strided_slice %143 {offsets = [64, 0], sizes = [26, 128], strides = [1, 1]} : vector<256x128xf32> to vector<26x128xf32>
    %cst_65 = arith.constant dense<0xFF800000> : vector<128xf32>
    %151 = vector.multi_reduction <maximumf>, %150, %cst_65 [0] : vector<26x128xf32> to vector<128xf32>
    %152 = vector.shape_cast %151 : vector<128xf32> to vector<1x128xf32>
    %153 = vector.extract_strided_slice %143 {offsets = [96, 0], sizes = [26, 128], strides = [1, 1]} : vector<256x128xf32> to vector<26x128xf32>
    %cst_66 = arith.constant dense<0xFF800000> : vector<128xf32>
    %154 = vector.multi_reduction <maximumf>, %153, %cst_66 [0] : vector<26x128xf32> to vector<128xf32>
    %155 = vector.shape_cast %154 : vector<128xf32> to vector<1x128xf32>
    %156 = vector.extract_strided_slice %143 {offsets = [128, 0], sizes = [26, 128], strides = [1, 1]} : vector<256x128xf32> to vector<26x128xf32>
    %cst_67 = arith.constant dense<0xFF800000> : vector<128xf32>
    %157 = vector.multi_reduction <maximumf>, %156, %cst_67 [0] : vector<26x128xf32> to vector<128xf32>
    %158 = vector.shape_cast %157 : vector<128xf32> to vector<1x128xf32>
    %159 = vector.extract_strided_slice %143 {offsets = [160, 0], sizes = [26, 128], strides = [1, 1]} : vector<256x128xf32> to vector<26x128xf32>
    %cst_68 = arith.constant dense<0xFF800000> : vector<128xf32>
    %160 = vector.multi_reduction <maximumf>, %159, %cst_68 [0] : vector<26x128xf32> to vector<128xf32>
    %161 = vector.shape_cast %160 : vector<128xf32> to vector<1x128xf32>
    %162 = vector.extract_strided_slice %143 {offsets = [192, 0], sizes = [26, 128], strides = [1, 1]} : vector<256x128xf32> to vector<26x128xf32>
    %cst_69 = arith.constant dense<0xFF800000> : vector<128xf32>
    %163 = vector.multi_reduction <maximumf>, %162, %cst_69 [0] : vector<26x128xf32> to vector<128xf32>
    %164 = vector.shape_cast %163 : vector<128xf32> to vector<1x128xf32>
    %165 = vector.extract_strided_slice %143 {offsets = [224, 0], sizes = [26, 128], strides = [1, 1]} : vector<256x128xf32> to vector<26x128xf32>
    %cst_70 = arith.constant dense<0xFF800000> : vector<128xf32>
    %166 = vector.multi_reduction <maximumf>, %165, %cst_70 [0] : vector<26x128xf32> to vector<128xf32>
    %167 = vector.shape_cast %166 : vector<128xf32> to vector<1x128xf32>
    %168 = tpu.concatenate %146, %149, %152, %155, %158, %161, %164, %167 in 0 : vector<1x128xf32>, vector<1x128xf32>, vector<1x128xf32>, vector<1x128xf32>, vector<1x128xf32>, vector<1x128xf32>, vector<1x128xf32>, vector<1x128xf32> -> vector<8x128xf32>
    %169 = tpu.concatenate %48, %101, %168 in 1 : vector<8x128xf32>, vector<8x128xf32>, vector<8x128xf32> -> vector<8x384xf32>
    %170 = arith.truncf %169 : vector<8x384xf32> to vector<8x384xbf16>
    %c0_71 = arith.constant 0 : index
    %c0_72 = arith.constant 0 : index
    %171 = vector.load %arg15[%c0_71, %c0_72] : memref<384x128xbf16, #tpu.memory_space<vmem>>, vector<384x128xbf16>
    %cst_73 = arith.constant dense<0.000000e+00> : vector<8x128xf32>
    %172 = tpu.matmul %170, %171, %cst_73 {dimension_numbers = #tpu.dot_dimension_numbers<[1], [0], [0], [1], [0, 0, 1, 1], [], []>} : vector<8x384xbf16>, vector<384x128xbf16>, vector<8x128xf32> -> vector<8x128xf32>
    %c0_74 = arith.constant 0 : index
    %c0_75 = arith.constant 0 : index
    %173 = vector.load %arg16[%c0_74, %c0_75] : memref<1x128xf32, #tpu.memory_space<vmem>>, vector<1x128xf32>
    %174 = vector.broadcast %173 : vector<1x128xf32> to vector<8x128xf32>
    %175 = arith.addf %172, %174 : vector<8x128xf32>
    %c0_76 = arith.constant 0 : index
    %c0_77 = arith.constant 0 : index
    %176 = vector.load %arg17[%c0_76, %c0_77] : memref<8x128xf32, #tpu.memory_space<vmem>>, vector<8x128xf32>
    tpu.vector_store %arg17[%c0_76, %c0_77], %175 {strides = array<i32>} : memref<8x128xf32, #tpu.memory_space<vmem>>, vector<8x128xf32>,
    return
  }
  func.func @transform_0(%arg0: i32) -> (i32, i32) {
    %c0_i32 = arith.constant 0 : i32
    %c0_i32_0 = arith.constant 0 : i32
    return %arg0, %c0_i32 : i32, i32
  }
  func.func @transform_1(%arg0: i32) -> (i32, i32) {
    %c0_i32 = arith.constant 0 : i32
    %c0_i32_0 = arith.constant 0 : i32
    %c0_i32_1 = arith.constant 0 : i32
    return %c0_i32, %c0_i32_0 : i32, i32
  }
  func.func @transform_2(%arg0: i32) -> (i32, i32) {
    %c0_i32 = arith.constant 0 : i32
    %c0_i32_0 = arith.constant 0 : i32
    %c0_i32_1 = arith.constant 0 : i32
    return %c0_i32, %c0_i32_0 : i32, i32
  }
  func.func @transform_3(%arg0: i32) -> (i32, i32) {
    %c0_i32 = arith.constant 0 : i32
    %c0_i32_0 = arith.constant 0 : i32
    %c0_i32_1 = arith.constant 0 : i32
    return %c0_i32, %c0_i32_0 : i32, i32
  }
  func.func @transform_4(%arg0: i32) -> (i32, i32) {
    %c0_i32 = arith.constant 0 : i32
    %c0_i32_0 = arith.constant 0 : i32
    %c0_i32_1 = arith.constant 0 : i32
    return %c0_i32, %c0_i32_0 : i32, i32
  }
  func.func @transform_5(%arg0: i32) -> (i32, i32) {
    %c0_i32 = arith.constant 0 : i32
    %c0_i32_0 = arith.constant 0 : i32
    %c0_i32_1 = arith.constant 0 : i32
    return %c0_i32, %c0_i32_0 : i32, i32
  }
  func.func @transform_6(%arg0: i32) -> (i32, i32) {
    %c0_i32 = arith.constant 0 : i32
    %c0_i32_0 = arith.constant 0 : i32
    %c0_i32_1 = arith.constant 0 : i32
    return %c0_i32, %c0_i32_0 : i32, i32
  }
  func.func @transform_7(%arg0: i32) -> (i32, i32) {
    %c0_i32 = arith.constant 0 : i32
    %c0_i32_0 = arith.constant 0 : i32
    %c0_i32_1 = arith.constant 0 : i32
    return %c0_i32, %c0_i32_0 : i32, i32
  }
  func.func @transform_8(%arg0: i32) -> (i32, i32) {
    %c0_i32 = arith.constant 0 : i32
    %c0_i32_0 = arith.constant 0 : i32
    %c0_i32_1 = arith.constant 0 : i32
    return %c0_i32, %c0_i32_0 : i32, i32
  }
  func.func @transform_9(%arg0: i32) -> (i32, i32) {
    %c0_i32 = arith.constant 0 : i32
    %c0_i32_0 = arith.constant 0 : i32
    %c0_i32_1 = arith.constant 0 : i32
    return %c0_i32, %c0_i32_0 : i32, i32
  }
  func.func @transform_10(%arg0: i32) -> (i32, i32) {
    %c0_i32 = arith.constant 0 : i32
    %c0_i32_0 = arith.constant 0 : i32
    %c0_i32_1 = arith.constant 0 : i32
    return %c0_i32, %c0_i32_0 : i32, i32
  }
  func.func @transform_11(%arg0: i32) -> (i32, i32) {
    %c0_i32 = arith.constant 0 : i32
    %c0_i32_0 = arith.constant 0 : i32
    %c0_i32_1 = arith.constant 0 : i32
    return %c0_i32, %c0_i32_0 : i32, i32
  }
  func.func @transform_12(%arg0: i32) -> (i32, i32) {
    %c0_i32 = arith.constant 0 : i32
    %c0_i32_0 = arith.constant 0 : i32
    %c0_i32_1 = arith.constant 0 : i32
    return %c0_i32, %c0_i32_0 : i32, i32
  }
  func.func @transform_13(%arg0: i32) -> (i32, i32) {
    %c0_i32 = arith.constant 0 : i32
    %c0_i32_0 = arith.constant 0 : i32
    %c0_i32_1 = arith.constant 0 : i32
    return %c0_i32, %c0_i32_0 : i32, i32
  }
  func.func @transform_14(%arg0: i32) -> (i32, i32) {
    %c0_i32 = arith.constant 0 : i32
    %c0_i32_0 = arith.constant 0 : i32
    %c0_i32_1 = arith.constant 0 : i32
    return %c0_i32, %c0_i32_0 : i32, i32
  }
  func.func @transform_15(%arg0: i32) -> (i32, i32) {
    %c0_i32 = arith.constant 0 : i32
    %c0_i32_0 = arith.constant 0 : i32
    %c0_i32_1 = arith.constant 0 : i32
    return %c0_i32, %c0_i32_0 : i32, i32
  }
  func.func @transform_16(%arg0: i32) -> (i32, i32) {
    %c0_i32 = arith.constant 0 : i32
    %c0_i32_0 = arith.constant 0 : i32
    return %arg0, %c0_i32 : i32, i32
  }
}

</mosaic_0001>

<llo_original>
// kernel: tpu_custom_call.1
$region0: #{tpu_custom_call.1}
  #allocation0 [shape = 'u32[]', space=smem, size = 0x4, offset = 0x4, fixed_abs, tag = 'smem constant byte address 0x4 - core index']
  #allocation1 [shape = 'u32[144,128]{1,0:T(1,128)}', space=vmem, size = 0x12000, scoped, tag = 'internal scratch']
  %s0 = inlined_call_operand.vmem [shape: s32[512,1], index: 0, kind: input, shape index: {}]
  %s1 = inlined_call_operand.vmem [shape: bf16[26,128], index: 1, kind: input, shape index: {}]
  %s2 = inlined_call_operand.vmem [shape: bf16[384,128], index: 2, kind: input, shape index: {}]
  %s3 = inlined_call_operand.vmem [shape: f32[1,128], index: 3, kind: input, shape index: {}]
  %s4 = inlined_call_operand.vmem [shape: bf16[384,128], index: 4, kind: input, shape index: {}]
  %s5 = inlined_call_operand.vmem [shape: f32[1,128], index: 5, kind: input, shape index: {}]
  %s6 = inlined_call_operand.hbm [shape: bf16[384,128], index: 6, kind: input, shape index: {}]
  %s7 = inlined_call_operand.vmem [shape: f32[1,128], index: 7, kind: input, shape index: {}]
  %s8 = inlined_call_operand.hbm [shape: bf16[384,128], index: 8, kind: input, shape index: {}]
  %s9 = inlined_call_operand.vmem [shape: f32[1,128], index: 9, kind: input, shape index: {}]
  %s10 = inlined_call_operand.hbm [shape: bf16[384,128], index: 10, kind: input, shape index: {}]
  %s11 = inlined_call_operand.vmem [shape: f32[1,128], index: 11, kind: input, shape index: {}]
  %s12 = inlined_call_operand.hbm [shape: bf16[384,128], index: 12, kind: input, shape index: {}]
  %s13 = inlined_call_operand.vmem [shape: f32[1,128], index: 13, kind: input, shape index: {}]
  %s14 = inlined_call_operand.hbm [shape: bf16[384,128], index: 14, kind: input, shape index: {}]
  %s15 = inlined_call_operand.vmem [shape: f32[1,128], index: 15, kind: input, shape index: {}]
  %s16 = inlined_call_operand.hbm [shape: f32[16,128], index: 16, kind: output, shape index: {}]
  %s17 = sld [smem:[#allocation0]]
  $region117: #{tpu_custom_call.1} parent=0
    _
  %s19 = ssub.s32 1, %s17
  %s20 = scalar_select 0, %s19, %s17
  $region1: #{tpu_custom_call.1} parent=0
    #allocation2 [shape = 'u8[98304]{0}', space=vmem, size = 0x18000, scoped, tag = 'input window, operand 6, single buffered']
    #allocation3 [shape = 's32[2]{0}', space=sflag, size = 0x8, scoped, tag = 'scoped memory for tpu_custom_call.1']
    #allocation4 [shape = 's32[2]{0}', space=sflag, size = 0x8, scoped, tag = 'scoped memory for tpu_custom_call.1']
    #allocation5 [shape = 'u8[98304]{0}', space=vmem, size = 0x18000, scoped, tag = 'input window, operand 8, single buffered']
    #allocation6 [shape = 's32[1]{0}', space=sflag, size = 0x4, scoped, tag = 'scoped memory for tpu_custom_call.1']
    #allocation7 [shape = 'u8[98304]{0}', space=vmem, size = 0x18000, scoped, tag = 'input window, operand 10, single buffered']
    #allocation8 [shape = 'u8[98304]{0}', space=vmem, size = 0x18000, scoped, tag = 'input window, operand 12, single buffered']
    #allocation9 [shape = 's32[1]{0}', space=sflag, size = 0x4, scoped, tag = 'scoped memory for tpu_custom_call.1']
    #allocation10 [shape = 'u8[98304]{0}', space=vmem, size = 0x18000, scoped, tag = 'input window, operand 14, single buffered']
    #allocation11 [shape = 'u8[8192]{0}', space=vmem, size = 0x2000, scoped, tag = 'output window, operand 0']
    %21 = vsyncpa [#allocation3], 0
    %22 = vsyncpa [#allocation6], 0
    %23 = vsyncpa [#allocation9], 0
    %24 = vsyncpa [#allocation4], 0
    %s25 = scalar_lea.sflag [#allocation4], 1
    %26 = vsyncpa %s25, 0
    loop: start=0, step=1, limit=4
    $region2: #{tpu_custom_call.1} parent=1 // loop_pre_header
      _
    $region3: #{tpu_custom_call.1} parent=1 // loop_header
      %s28 = sphi 0, %s32
      %p29 = scmp.ge.s32.totalorder %s28, 4
      %s38 = sphi 0, %s40
      %s41 = sphi 0, %s38
      %s42 = sphi 0, %s41
      %s58 = sphi 0, %s42
      %s62 = sphi 0, %s62
      %s64 = sphi 0, %s62
      %s65 = sphi 0, %s64
      %s79 = sphi 0, %s65
      %s83 = sphi 0, %s83
      %s85 = sphi 0, %s83
      %s86 = sphi 0, %s85
      %s100 = sphi 0, %s86
      %s104 = sphi 0, %s104
      %s106 = sphi 0, %s104
      %s107 = sphi 0, %s106
      %s121 = sphi 0, %s107
      %s125 = sphi 0, %s125
      %s127 = sphi 0, %s125
      %s128 = sphi 0, %s127
      %s142 = sphi 0, %s128
      %s146 = sphi 0, %s146
      %s148 = sphi 0, %s146
      %s149 = sphi 0, %s148
      %s163 = sphi 0, %s149
      %s167 = sphi 0, %s167
      %s169 = sphi 0, %s167
      %s170 = sphi 0, %s169
      %s184 = sphi 0, %s170
      %s188 = sphi 0, %s188
      %s190 = sphi 0, %s188
      %s191 = sphi 0, %s190
      %s205 = sphi 0, %s191
      %s209 = sphi 0, %s209
      %s211 = sphi 0, %s209
      %s212 = sphi 0, %s211
      %s226 = sphi 0, %s212
      %s230 = sphi 0, %s230
      %s232 = sphi 0, %s230
      %s233 = sphi 0, %s232
      %s247 = sphi 0, %s233
      %s251 = sphi 0, %s251
      %s253 = sphi 0, %s251
      %s254 = sphi 0, %s253
      %s268 = sphi 0, %s254
      %s272 = sphi 0, %s272
      %s274 = sphi 0, %s272
      %s275 = sphi 0, %s274
      %s289 = sphi 0, %s275
      %s293 = sphi 0, %s293
      %s295 = sphi 0, %s293
      %s296 = sphi 0, %s295
      %s310 = sphi 0, %s296
      %s314 = sphi 0, %s314
      %s316 = sphi 0, %s314
      %s317 = sphi 0, %s316
      %s331 = sphi 0, %s317
      %s335 = sphi 0, %s335
      %s337 = sphi 0, %s335
      %s338 = sphi 0, %s337
      %s352 = sphi 0, %s338
      %s356 = sphi 0, %s356
      %s358 = sphi 0, %s356
      %s359 = sphi 0, %s358
      %s373 = sphi 0, %s359
      %s379 = sphi 0, %s381
      %s382 = sphi 0, %s379
      %s383 = sphi 0, %s382
      %s399 = sphi 0, %s383
    $region4: #{tpu_custom_call.1} parent=1 // loop_header_branch
      %31 = sbr.rel (%p29) target = $region8
    $region5: #{tpu_custom_call.1} parent=1 // loop_body
      %s33 = ssub.s32 %s28, 1
      %s34 = ssub.s32 %s28, 2
      %s35 = sadd.s32 %s28, 1
      %s36 = ssub.s32 %s28, %s35
      %p37 = scmp.eq.s32.totalorder %s36, 0
      %s39 = sadd.s32 %s38, 1
      %s40 = scalar_select %p37, %s38, %s39
      %p43 = pneg %p37
      %p44 = scmp.eq.s32.totalorder %s28, 1
      %p45 = por %p43, %p44
      %p46 = scmp.ne.s32.totalorder %s38, %s41
      %p47 = scmp.eq.s32.totalorder %s28, 0
      %p48 = por %p46, %p47
      %p49 = scmp.ne.s32.totalorder %s38, %s41
      %p50 = scmp.eq.s32.totalorder %s33, 1
      %p51 = por %p49, %p50
      %p52 = scmp.ne.s32.totalorder %s41, %s42
      %p53 = scmp.eq.s32.totalorder %s33, 0
      %p54 = por %p52, %p53
      %p55 = scmp.ne.s32.totalorder %s41, %s42
      %p56 = scmp.eq.s32.totalorder %s34, 1
      %p57 = por %p55, %p56
      %p59 = scmp.ne.s32.totalorder %s42, %s58
      %p60 = scmp.eq.s32.totalorder %s34, 0
      %p61 = por %p59, %p60
      %s63 = sadd.s32 %s62, 1
      %p66 = scmp.eq.s32.totalorder %s28, 1
      %p67 = scmp.ne.s32.totalorder %s62, %s64
      %p68 = scmp.eq.s32.totalorder %s28, 0
      %p69 = por %p67, %p68
      %p70 = scmp.ne.s32.totalorder %s62, %s64
      %p71 = scmp.eq.s32.totalorder %s33, 1
      %p72 = por %p70, %p71
      %p73 = scmp.ne.s32.totalorder %s64, %s65
      %p74 = scmp.eq.s32.totalorder %s33, 0
      %p75 = por %p73, %p74
      %p76 = scmp.ne.s32.totalorder %s64, %s65
      %p77 = scmp.eq.s32.totalorder %s34, 1
      %p78 = por %p76, %p77
      %p80 = scmp.ne.s32.totalorder %s65, %s79
      %p81 = scmp.eq.s32.totalorder %s34, 0
      %p82 = por %p80, %p81
      %s84 = sadd.s32 %s83, 1
      %p87 = scmp.eq.s32.totalorder %s28, 1
      %p88 = scmp.ne.s32.totalorder %s83, %s85
      %p89 = scmp.eq.s32.totalorder %s28, 0
      %p90 = por %p88, %p89
      %p91 = scmp.ne.s32.totalorder %s83, %s85
      %p92 = scmp.eq.s32.totalorder %s33, 1
      %p93 = por %p91, %p92
      %p94 = scmp.ne.s32.totalorder %s85, %s86
      %p95 = scmp.eq.s32.totalorder %s33, 0
      %p96 = por %p94, %p95
      %p97 = scmp.ne.s32.totalorder %s85, %s86
      %p98 = scmp.eq.s32.totalorder %s34, 1
      %p99 = por %p97, %p98
      %p101 = scmp.ne.s32.totalorder %s86, %s100
      %p102 = scmp.eq.s32.totalorder %s34, 0
      %p103 = por %p101, %p102
      %s105 = sadd.s32 %s104, 1
      %p108 = scmp.eq.s32.totalorder %s28, 1
      %p109 = scmp.ne.s32.totalorder %s104, %s106
      %p110 = scmp.eq.s32.totalorder %s28, 0
      %p111 = por %p109, %p110
      %p112 = scmp.ne.s32.totalorder %s104, %s106
      %p113 = scmp.eq.s32.totalorder %s33, 1
      %p114 = por %p112, %p113
      %p115 = scmp.ne.s32.totalorder %s106, %s107
      %p116 = scmp.eq.s32.totalorder %s33, 0
      %p117 = por %p115, %p116
      %p118 = scmp.ne.s32.totalorder %s106, %s107
      %p119 = scmp.eq.s32.totalorder %s34, 1
      %p120 = por %p118, %p119
      %p122 = scmp.ne.s32.totalorder %s107, %s121
      %p123 = scmp.eq.s32.totalorder %s34, 0
      %p124 = por %p122, %p123
      %s126 = sadd.s32 %s125, 1
      %p129 = scmp.eq.s32.totalorder %s28, 1
      %p130 = scmp.ne.s32.totalorder %s125, %s127
      %p131 = scmp.eq.s32.totalorder %s28, 0
      %p132 = por %p130, %p131
      %p133 = scmp.ne.s32.totalorder %s125, %s127
      %p134 = scmp.eq.s32.totalorder %s33, 1
      %p135 = por %p133, %p134
      %p136 = scmp.ne.s32.totalorder %s127, %s128
      %p137 = scmp.eq.s32.totalorder %s33, 0
      %p138 = por %p136, %p137
      %p139 = scmp.ne.s32.totalorder %s127, %s128
      %p140 = scmp.eq.s32.totalorder %s34, 1
      %p141 = por %p139, %p140
      %p143 = scmp.ne.s32.totalorder %s128, %s142
      %p144 = scmp.eq.s32.totalorder %s34, 0
      %p145 = por %p143, %p144
      %s147 = sadd.s32 %s146, 1
      %p150 = scmp.eq.s32.totalorder %s28, 1
      %p151 = scmp.ne.s32.totalorder %s146, %s148
      %p152 = scmp.eq.s32.totalorder %s28, 0
      %p153 = por %p151, %p152
      %p154 = scmp.ne.s32.totalorder %s146, %s148
      %p155 = scmp.eq.s32.totalorder %s33, 1
      %p156 = por %p154, %p155
      %p157 = scmp.ne.s32.totalorder %s148, %s149
      %p158 = scmp.eq.s32.totalorder %s33, 0
      %p159 = por %p157, %p158
      %p160 = scmp.ne.s32.totalorder %s148, %s149
      %p161 = scmp.eq.s32.totalorder %s34, 1
      %p162 = por %p160, %p161
      %p164 = scmp.ne.s32.totalorder %s149, %s163
      %p165 = scmp.eq.s32.totalorder %s34, 0
      %p166 = por %p164, %p165
      %s168 = sadd.s32 %s167, 1
      %p171 = scmp.eq.s32.totalorder %s28, 1
      %p172 = scmp.ne.s32.totalorder %s167, %s169
      %p173 = scmp.eq.s32.totalorder %s28, 0
      %p174 = por %p172, %p173
      %p175 = scmp.ne.s32.totalorder %s167, %s169
      %p176 = scmp.eq.s32.totalorder %s33, 1
      %p177 = por %p175, %p176
      %p178 = scmp.ne.s32.totalorder %s169, %s170
      %p179 = scmp.eq.s32.totalorder %s33, 0
      %p180 = por %p178, %p179
      %p181 = scmp.ne.s32.totalorder %s169, %s170
      %p182 = scmp.eq.s32.totalorder %s34, 1
      %p183 = por %p181, %p182
      %p185 = scmp.ne.s32.totalorder %s170, %s184
      %p186 = scmp.eq.s32.totalorder %s34, 0
      %p187 = por %p185, %p186
      %s189 = sadd.s32 %s188, 1
      %p192 = scmp.eq.s32.totalorder %s28, 1
      %p193 = scmp.ne.s32.totalorder %s188, %s190
      %p194 = scmp.eq.s32.totalorder %s28, 0
      %p195 = por %p193, %p194
      %p196 = scmp.ne.s32.totalorder %s188, %s190
      %p197 = scmp.eq.s32.totalorder %s33, 1
      %p198 = por %p196, %p197
      %p199 = scmp.ne.s32.totalorder %s190, %s191
      %p200 = scmp.eq.s32.totalorder %s33, 0
      %p201 = por %p199, %p200
      %p202 = scmp.ne.s32.totalorder %s190, %s191
      %p203 = scmp.eq.s32.totalorder %s34, 1
      %p204 = por %p202, %p203
      %p206 = scmp.ne.s32.totalorder %s191, %s205
      %p207 = scmp.eq.s32.totalorder %s34, 0
      %p208 = por %p206, %p207
      %s210 = sadd.s32 %s209, 1
      %p213 = scmp.eq.s32.totalorder %s28, 1
      %p214 = scmp.ne.s32.totalorder %s209, %s211
      %p215 = scmp.eq.s32.totalorder %s28, 0
      %p216 = por %p214, %p215
      %p217 = scmp.ne.s32.totalorder %s209, %s211
      %p218 = scmp.eq.s32.totalorder %s33, 1
      %p219 = por %p217, %p218
      %p220 = scmp.ne.s32.totalorder %s211, %s212
      %p221 = scmp.eq.s32.totalorder %s33, 0
      %p222 = por %p220, %p221
      %p223 = scmp.ne.s32.totalorder %s211, %s212
      %p224 = scmp.eq.s32.totalorder %s34, 1
      %p225 = por %p223, %p224
      %p227 = scmp.ne.s32.totalorder %s212, %s226
      %p228 = scmp.eq.s32.totalorder %s34, 0
      %p229 = por %p227, %p228
      %s231 = sadd.s32 %s230, 1
      %p234 = scmp.eq.s32.totalorder %s28, 1
      %p235 = scmp.ne.s32.totalorder %s230, %s232
      %p236 = scmp.eq.s32.totalorder %s28, 0
      %p237 = por %p235, %p236
      %p238 = scmp.ne.s32.totalorder %s230, %s232
      %p239 = scmp.eq.s32.totalorder %s33, 1
      %p240 = por %p238, %p239
      %p241 = scmp.ne.s32.totalorder %s232, %s233
      %p242 = scmp.eq.s32.totalorder %s33, 0
      %p243 = por %p241, %p242
      %p244 = scmp.ne.s32.totalorder %s232, %s233
      %p245 = scmp.eq.s32.totalorder %s34, 1
      %p246 = por %p244, %p245
      %p248 = scmp.ne.s32.totalorder %s233, %s247
      %p249 = scmp.eq.s32.totalorder %s34, 0
      %p250 = por %p248, %p249
      %s252 = sadd.s32 %s251, 1
      %p255 = scmp.eq.s32.totalorder %s28, 1
      %p256 = scmp.ne.s32.totalorder %s251, %s253
      %p257 = scmp.eq.s32.totalorder %s28, 0
      %p258 = por %p256, %p257
      %p259 = scmp.ne.s32.totalorder %s251, %s253
      %p260 = scmp.eq.s32.totalorder %s33, 1
      %p261 = por %p259, %p260
      %p262 = scmp.ne.s32.totalorder %s253, %s254
      %p263 = scmp.eq.s32.totalorder %s33, 0
      %p264 = por %p262, %p263
      %p265 = scmp.ne.s32.totalorder %s253, %s254
      %p266 = scmp.eq.s32.totalorder %s34, 1
      %p267 = por %p265, %p266
      %p269 = scmp.ne.s32.totalorder %s254, %s268
      %p270 = scmp.eq.s32.totalorder %s34, 0
      %p271 = por %p269, %p270
      %s273 = sadd.s32 %s272, 1
      %p276 = scmp.eq.s32.totalorder %s28, 1
      %p277 = scmp.ne.s32.totalorder %s272, %s274
      %p278 = scmp.eq.s32.totalorder %s28, 0
      %p279 = por %p277, %p278
      %p280 = scmp.ne.s32.totalorder %s272, %s274
      %p281 = scmp.eq.s32.totalorder %s33, 1
      %p282 = por %p280, %p281
      %p283 = scmp.ne.s32.totalorder %s274, %s275
      %p284 = scmp.eq.s32.totalorder %s33, 0
      %p285 = por %p283, %p284
      %p286 = scmp.ne.s32.totalorder %s274, %s275
      %p287 = scmp.eq.s32.totalorder %s34, 1
      %p288 = por %p286, %p287
      %p290 = scmp.ne.s32.totalorder %s275, %s289
      %p291 = scmp.eq.s32.totalorder %s34, 0
      %p292 = por %p290, %p291
      %s294 = sadd.s32 %s293, 1
      %p297 = scmp.eq.s32.totalorder %s28, 1
      %p298 = scmp.ne.s32.totalorder %s293, %s295
      %p299 = scmp.eq.s32.totalorder %s28, 0
      %p300 = por %p298, %p299
      %p301 = scmp.ne.s32.totalorder %s293, %s295
      %p302 = scmp.eq.s32.totalorder %s33, 1
      %p303 = por %p301, %p302
      %p304 = scmp.ne.s32.totalorder %s295, %s296
      %p305 = scmp.eq.s32.totalorder %s33, 0
      %p306 = por %p304, %p305
      %p307 = scmp.ne.s32.totalorder %s295, %s296
      %p308 = scmp.eq.s32.totalorder %s34, 1
      %p309 = por %p307, %p308
      %p311 = scmp.ne.s32.totalorder %s296, %s310
      %p312 = scmp.eq.s32.totalorder %s34, 0
      %p313 = por %p311, %p312
      %s315 = sadd.s32 %s314, 1
      %p318 = scmp.eq.s32.totalorder %s28, 1
      %p319 = scmp.ne.s32.totalorder %s314, %s316
      %p320 = scmp.eq.s32.totalorder %s28, 0
      %p321 = por %p319, %p320
      %p322 = scmp.ne.s32.totalorder %s314, %s316
      %p323 = scmp.eq.s32.totalorder %s33, 1
      %p324 = por %p322, %p323
      %p325 = scmp.ne.s32.totalorder %s316, %s317
      %p326 = scmp.eq.s32.totalorder %s33, 0
      %p327 = por %p325, %p326
      %p328 = scmp.ne.s32.totalorder %s316, %s317
      %p329 = scmp.eq.s32.totalorder %s34, 1
      %p330 = por %p328, %p329
      %p332 = scmp.ne.s32.totalorder %s317, %s331
      %p333 = scmp.eq.s32.totalorder %s34, 0
      %p334 = por %p332, %p333
      %s336 = sadd.s32 %s335, 1
      %p339 = scmp.eq.s32.totalorder %s28, 1
      %p340 = scmp.ne.s32.totalorder %s335, %s337
      %p341 = scmp.eq.s32.totalorder %s28, 0
      %p342 = por %p340, %p341
      %p343 = scmp.ne.s32.totalorder %s335, %s337
      %p344 = scmp.eq.s32.totalorder %s33, 1
      %p345 = por %p343, %p344
      %p346 = scmp.ne.s32.totalorder %s337, %s338
      %p347 = scmp.eq.s32.totalorder %s33, 0
      %p348 = por %p346, %p347
      %p349 = scmp.ne.s32.totalorder %s337, %s338
      %p350 = scmp.eq.s32.totalorder %s34, 1
      %p351 = por %p349, %p350
      %p353 = scmp.ne.s32.totalorder %s338, %s352
      %p354 = scmp.eq.s32.totalorder %s34, 0
      %p355 = por %p353, %p354
      %s357 = sadd.s32 %s356, 1
      %p360 = scmp.eq.s32.totalorder %s28, 1
      %p361 = scmp.ne.s32.totalorder %s356, %s358
      %p362 = scmp.eq.s32.totalorder %s28, 0
      %p363 = por %p361, %p362
      %p364 = scmp.ne.s32.totalorder %s356, %s358
      %p365 = scmp.eq.s32.totalorder %s33, 1
      %p366 = por %p364, %p365
      %p367 = scmp.ne.s32.totalorder %s358, %s359
      %p368 = scmp.eq.s32.totalorder %s33, 0
      %p369 = por %p367, %p368
      %p370 = scmp.ne.s32.totalorder %s358, %s359
      %p371 = scmp.eq.s32.totalorder %s34, 1
      %p372 = por %p370, %p371
      %p374 = scmp.ne.s32.totalorder %s359, %s373
      %p375 = scmp.eq.s32.totalorder %s34, 0
      %p376 = por %p374, %p375
      %s377 = ssub.s32 %s28, %s35
      %p378 = scmp.eq.s32.totalorder %s377, 0
      %s380 = sadd.s32 %s379, 1
      %s381 = scalar_select %p378, %s379, %s380
      %p384 = pneg %p378
      %p385 = scmp.eq.s32.totalorder %s28, 1
      %p386 = por %p384, %p385
      %p387 = scmp.ne.s32.totalorder %s379, %s382
      %p388 = scmp.eq.s32.totalorder %s28, 0
      %p389 = por %p387, %p388
      %p390 = scmp.ne.s32.totalorder %s379, %s382
      %p391 = scmp.eq.s32.totalorder %s33, 1
      %p392 = por %p390, %p391
      %p393 = scmp.ne.s32.totalorder %s382, %s383
      %p394 = scmp.eq.s32.totalorder %s33, 0
      %p395 = por %p393, %p394
      %p396 = scmp.ne.s32.totalorder %s382, %s383
      %p397 = scmp.eq.s32.totalorder %s34, 1
      %p398 = por %p396, %p397
      %p400 = scmp.ne.s32.totalorder %s383, %s399
      %p401 = scmp.eq.s32.totalorder %s34, 0
      %p402 = por %p400, %p401
      %p403 = scmp.le.s32.totalorder 1, %s28
      %p404 = scmp.lt.s32.totalorder %s28, 3
      %p405 = pnand %p403, %p404
      %p406 = pneg %p405
      // Predicated region
      $region9: #{tpu_custom_call.1} parent=5 // pred_check
        _
      $region10: #{tpu_custom_call.1} parent=5 // pred_check_branch
        %408 = sbr.rel (%p405) target = $region12
      $region11: #{tpu_custom_call.1} parent=5 // pred_region
        %s409 = ssub.s32 %s28, 1
        // Predicated region
        $region13: #{tpu_custom_call.1} parent=11 // pred_check
          %p410 = pneg %p75
        $region14: #{tpu_custom_call.1} parent=11 // pred_check_branch
          %412 = sbr.rel (%p410) target = $region16
        $region15: #{tpu_custom_call.1} parent=11 // pred_region
          _
        $region16: #{tpu_custom_call.1} parent=11 // pred_fallthru
          _
        // Predicated region
        $region17: #{tpu_custom_call.1} parent=11 // pred_check
          %p413 = pneg %p96
        $region18: #{tpu_custom_call.1} parent=11 // pred_check_branch
          %415 = sbr.rel (%p413) target = $region20
        $region19: #{tpu_custom_call.1} parent=11 // pred_region
          _
        $region20: #{tpu_custom_call.1} parent=11 // pred_fallthru
          _
        // Predicated region
        $region21: #{tpu_custom_call.1} parent=11 // pred_check
          %p416 = pneg %p117
        $region22: #{tpu_custom_call.1} parent=11 // pred_check_branch
          %418 = sbr.rel (%p416) target = $region24
        $region23: #{tpu_custom_call.1} parent=11 // pred_region
          _
        $region24: #{tpu_custom_call.1} parent=11 // pred_fallthru
          _
        // Predicated region
        $region25: #{tpu_custom_call.1} parent=11 // pred_check
          %p419 = pneg %p138
        $region26: #{tpu_custom_call.1} parent=11 // pred_check_branch
          %421 = sbr.rel (%p419) target = $region28
        $region27: #{tpu_custom_call.1} parent=11 // pred_region
          _
        $region28: #{tpu_custom_call.1} parent=11 // pred_fallthru
          _
        // Predicated region
        $region29: #{tpu_custom_call.1} parent=11 // pred_check
          %p422 = pneg %p159
        $region30: #{tpu_custom_call.1} parent=11 // pred_check_branch
          %424 = sbr.rel (%p422) target = $region32
        $region31: #{tpu_custom_call.1} parent=11 // pred_region
          _
        $region32: #{tpu_custom_call.1} parent=11 // pred_fallthru
          _
        // Predicated region
        $region33: #{tpu_custom_call.1} parent=11 // pred_check
          %p425 = pneg %p180
        $region34: #{tpu_custom_call.1} parent=11 // pred_check_branch
          %427 = sbr.rel (%p425) target = $region36
        $region35: #{tpu_custom_call.1} parent=11 // pred_region
          %s429 = ssub.s32 3072, 3072
          %430 = vsyncadd [#allocation3], %s429
          %s431 = sshll.u32 [#allocation2], 4
          %s432 = int_to_ptr.vmem [resolvable:$true] %s431
          %437 = dma.hbm_to_vmem [thread:$0]  %s6, 3072, %s432, [#allocation3], 64, 64, 4
        $region36: #{tpu_custom_call.1} parent=11 // pred_fallthru
          _
        // Predicated region
        $region37: #{tpu_custom_call.1} parent=11 // pred_check
          %p438 = pneg %p201
        $region38: #{tpu_custom_call.1} parent=11 // pred_check_branch
          %440 = sbr.rel (%p438) target = $region40
        $region39: #{tpu_custom_call.1} parent=11 // pred_region
          _
        $region40: #{tpu_custom_call.1} parent=11 // pred_fallthru
          _
        // Predicated region
        $region41: #{tpu_custom_call.1} parent=11 // pred_check
          %p441 = pneg %p222
        $region42: #{tpu_custom_call.1} parent=11 // pred_check_branch
          %443 = sbr.rel (%p441) target = $region44
        $region43: #{tpu_custom_call.1} parent=11 // pred_region
          %s445 = ssub.s32 3072, 3072
          %446 = vsyncadd [#allocation6], %s445
          %s447 = sshll.u32 [#allocation5], 4
          %s448 = int_to_ptr.vmem [resolvable:$true] %s447
          %453 = dma.hbm_to_vmem [thread:$0]  %s8, 3072, %s448, [#allocation6], 64, 64, 4
        $region44: #{tpu_custom_call.1} parent=11 // pred_fallthru
          _
        // Predicated region
        $region45: #{tpu_custom_call.1} parent=11 // pred_check
          %p454 = pneg %p243
        $region46: #{tpu_custom_call.1} parent=11 // pred_check_branch
          %456 = sbr.rel (%p454) target = $region48
        $region47: #{tpu_custom_call.1} parent=11 // pred_region
          _
        $region48: #{tpu_custom_call.1} parent=11 // pred_fallthru
          _
        // Predicated region
        $region49: #{tpu_custom_call.1} parent=11 // pred_check
          %p457 = pneg %p264
        $region50: #{tpu_custom_call.1} parent=11 // pred_check_branch
          %459 = sbr.rel (%p457) target = $region52
        $region51: #{tpu_custom_call.1} parent=11 // pred_region
          %s461 = ssub.s32 3072, 3072
          %462 = vsyncadd [#allocation6], %s461
          %s463 = sshll.u32 [#allocation7], 4
          %s464 = int_to_ptr.vmem [resolvable:$true] %s463
          %469 = dma.hbm_to_vmem [thread:$0]  %s10, 3072, %s464, [#allocation6], 64, 64, 4
        $region52: #{tpu_custom_call.1} parent=11 // pred_fallthru
          _
        // Predicated region
        $region53: #{tpu_custom_call.1} parent=11 // pred_check
          %p470 = pneg %p285
        $region54: #{tpu_custom_call.1} parent=11 // pred_check_branch
          %472 = sbr.rel (%p470) target = $region56
        $region55: #{tpu_custom_call.1} parent=11 // pred_region
          _
        $region56: #{tpu_custom_call.1} parent=11 // pred_fallthru
          _
        // Predicated region
        $region57: #{tpu_custom_call.1} parent=11 // pred_check
          %p473 = pneg %p306
        $region58: #{tpu_custom_call.1} parent=11 // pred_check_branch
          %475 = sbr.rel (%p473) target = $region60
        $region59: #{tpu_custom_call.1} parent=11 // pred_region
          %s477 = ssub.s32 3072, 3072
          %478 = vsyncadd [#allocation9], %s477
          %s479 = sshll.u32 [#allocation8], 4
          %s480 = int_to_ptr.vmem [resolvable:$true] %s479
          %485 = dma.hbm_to_vmem [thread:$0]  %s12, 3072, %s480, [#allocation9], 64, 64, 4
        $region60: #{tpu_custom_call.1} parent=11 // pred_fallthru
          _
        // Predicated region
        $region61: #{tpu_custom_call.1} parent=11 // pred_check
          %p486 = pneg %p327
        $region62: #{tpu_custom_call.1} parent=11 // pred_check_branch
          %488 = sbr.rel (%p486) target = $region64
        $region63: #{tpu_custom_call.1} parent=11 // pred_region
          _
        $region64: #{tpu_custom_call.1} parent=11 // pred_fallthru
          _
        // Predicated region
        $region65: #{tpu_custom_call.1} parent=11 // pred_check
          %p489 = pneg %p348
        $region66: #{tpu_custom_call.1} parent=11 // pred_check_branch
          %491 = sbr.rel (%p489) target = $region68
        $region67: #{tpu_custom_call.1} parent=11 // pred_region
          %s493 = ssub.s32 3072, 3072
          %494 = vsyncadd [#allocation9], %s493
          %s495 = sshll.u32 [#allocation10], 4
          %s496 = int_to_ptr.vmem [resolvable:$true] %s495
          %501 = dma.hbm_to_vmem [thread:$0]  %s14, 3072, %s496, [#allocation9], 64, 64, 4
        $region68: #{tpu_custom_call.1} parent=11 // pred_fallthru
          _
        // Predicated region
        $region69: #{tpu_custom_call.1} parent=11 // pred_check
          %p502 = pneg %p369
        $region70: #{tpu_custom_call.1} parent=11 // pred_check_branch
          %504 = sbr.rel (%p502) target = $region72
        $region71: #{tpu_custom_call.1} parent=11 // pred_region
          _
        $region72: #{tpu_custom_call.1} parent=11 // pred_fallthru
          _
      $region12: #{tpu_custom_call.1} parent=5 // pred_fallthru
        _
      %p505 = scmp.lt.s32.totalorder %s28, 2
      // Predicated region
      $region73: #{tpu_custom_call.1} parent=5 // pred_check
        %p506 = pneg %p505
      $region74: #{tpu_custom_call.1} parent=5 // pred_check_branch
        %508 = sbr.rel (%p506) target = $region76
      $region75: #{tpu_custom_call.1} parent=5 // pred_region
        // Predicated region
        $region77: #{tpu_custom_call.1} parent=75 // pred_check
          %p509 = pneg %p48
        $region78: #{tpu_custom_call.1} parent=75 // pred_check_branch
          %511 = sbr.rel (%p509) target = $region80
        $region79: #{tpu_custom_call.1} parent=75 // pred_region
          %s512 = smul.u32 32, %s28
          %p513 = scmp.lt.s32.totalorder %s512, 63
          %s514 = scalar_select %p513, %s512, 63
          %s515 = smul.addr %s514, 8
          %s516 = scalar_lea.vmem %s0, %s515
          %s517 = smul.u32 32, %s28
        $region80: #{tpu_custom_call.1} parent=75 // pred_fallthru
          _
      $region76: #{tpu_custom_call.1} parent=5 // pred_fallthru
        _
      %p518 = scmp.le.s32.totalorder 1, %s28
      %p519 = scmp.lt.s32.totalorder %s28, 3
      %p520 = pnand %p518, %p519
      %p521 = pneg %p520
      // Predicated region
      $region81: #{tpu_custom_call.1} parent=5 // pred_check
        _
      $region82: #{tpu_custom_call.1} parent=5 // pred_check_branch
        %523 = sbr.rel (%p520) target = $region84
      $region83: #{tpu_custom_call.1} parent=5 // pred_region
        %s524 = ssub.s32 %s28, 1
        // Predicated region
        $region85: #{tpu_custom_call.1} parent=83 // pred_check
          %p525 = pneg %p180
        $region86: #{tpu_custom_call.1} parent=83 // pred_check_branch
          %527 = sbr.rel (%p525) target = $region88
        $region87: #{tpu_custom_call.1} parent=83 // pred_region
          %528 = dma.done [#allocation3], 3072
        $region88: #{tpu_custom_call.1} parent=83 // pred_fallthru
          _
        // Predicated region
        $region89: #{tpu_custom_call.1} parent=83 // pred_check
          %p529 = pneg %p222
        $region90: #{tpu_custom_call.1} parent=83 // pred_check_branch
          %531 = sbr.rel (%p529) target = $region92
        $region91: #{tpu_custom_call.1} parent=83 // pred_region
          %532 = dma.done [#allocation6], 3072
        $region92: #{tpu_custom_call.1} parent=83 // pred_fallthru
          _
        // Predicated region
        $region93: #{tpu_custom_call.1} parent=83 // pred_check
          %p533 = pneg %p264
        $region94: #{tpu_custom_call.1} parent=83 // pred_check_branch
          %535 = sbr.rel (%p533) target = $region96
        $region95: #{tpu_custom_call.1} parent=83 // pred_region
          %536 = dma.done [#allocation6], 3072
        $region96: #{tpu_custom_call.1} parent=83 // pred_fallthru
          _
        // Predicated region
        $region97: #{tpu_custom_call.1} parent=83 // pred_check
          %p537 = pneg %p306
        $region98: #{tpu_custom_call.1} parent=83 // pred_check_branch
          %539 = sbr.rel (%p537) target = $region100
        $region99: #{tpu_custom_call.1} parent=83 // pred_region
          %540 = dma.done [#allocation9], 3072
        $region100: #{tpu_custom_call.1} parent=83 // pred_fallthru
          _
        // Predicated region
        $region101: #{tpu_custom_call.1} parent=83 // pred_check
          %p541 = pneg %p348
        $region102: #{tpu_custom_call.1} parent=83 // pred_check_branch
          %543 = sbr.rel (%p541) target = $region104
        $region103: #{tpu_custom_call.1} parent=83 // pred_region
          %544 = dma.done [#allocation9], 3072
        $region104: #{tpu_custom_call.1} parent=83 // pred_fallthru
          _
        %s545 = smul.u32 32, %s33
        %p546 = scmp.lt.s32.totalorder %s545, 63
        %s547 = scalar_select %p546, %s545, 63
        %s548 = smul.addr %s547, 8
        %s549 = scalar_lea.vmem %s0, %s548
        %p550 = pneg %p54
        %p551 = pneg %p51
        %p552 = pneg %p75
        %p553 = pneg %p72
        %p554 = pneg %p96
        %p555 = pneg %p93
        %p556 = pneg %p117
        %p557 = pneg %p114
        %p558 = pneg %p138
        %p559 = pneg %p135
        %p560 = pneg %p159
        %p561 = pneg %p156
        %p562 = pneg %p180
        %p563 = pneg %p177
        %p564 = pneg %p201
        %p565 = pneg %p198
        %p566 = pneg %p222
        %p567 = pneg %p219
        %p568 = pneg %p243
        %p569 = pneg %p240
        %p570 = pneg %p264
        %p571 = pneg %p261
        %p572 = pneg %p285
        %p573 = pneg %p282
        %p574 = pneg %p306
        %p575 = pneg %p303
        %p576 = pneg %p327
        %p577 = pneg %p324
        %p578 = pneg %p348
        %p579 = pneg %p345
        %p580 = pneg %p369
        %p581 = pneg %p366
        %p582 = pneg %p395
        %p583 = pneg %p392
        %s584 = sand.u32 %s382, 1
        %s585 = scalar_lea.sflag [#allocation4], %s584
        %s586 = sand.u32 %s382, 1
        %s587 = smul.addr %s586, 8
        %s588 = scalar_lea.vmem [#allocation11], %s587
        %s589 = smul.u32 32, %s33
        %p590 = scmp.lt.s32.totalorder %s589, 63
        %s591 = scalar_select %p590, %s589, 63
        %s592 = smul.addr %s591, 8
        %s593 = scalar_lea.vmem %s0, %s592
        %s594 = smul.u32 32, %s33
        %v596 = vld [vmem:[%s593] sm:$0xff]
        %v597 = vld [vmem:[%s593 + $0x8] sm:$0xff]
        %v598 = vld [vmem:[%s593 + $0x10] sm:$0xff]
        %v599 = vld [vmem:[%s593 + $0x18] sm:$0xff]
        %v600 = vld [vmem:[%s593 + $0x20] sm:$0xff]
        %v601 = vld [vmem:[%s593 + $0x28] sm:$0xff]
        %v602 = vld [vmem:[%s593 + $0x30] sm:$0xff]
        %v603 = vld [vmem:[%s593 + $0x38] sm:$0xff]
        %v604 = vld [vmem:[%s593 + $0x40] sm:$0xff]
        %v605 = vld [vmem:[%s593 + $0x48] sm:$0xff]
        %v606 = vld [vmem:[%s593 + $0x50] sm:$0xff]
        %v607 = vld [vmem:[%s593 + $0x58] sm:$0xff]
        %v608 = vld [vmem:[%s593 + $0x60] sm:$0xff]
        %v609 = vld [vmem:[%s593 + $0x68] sm:$0xff]
        %v610 = vld [vmem:[%s593 + $0x70] sm:$0xff]
        %v611 = vld [vmem:[%s593 + $0x78] sm:$0xff]
        %v612 = vld [vmem:[%s593 + $0x80] sm:$0xff]
        %v613 = vld [vmem:[%s593 + $0x88] sm:$0xff]
        %v614 = vld [vmem:[%s593 + $0x90] sm:$0xff]
        %v615 = vld [vmem:[%s593 + $0x98] sm:$0xff]
        %v616 = vld [vmem:[%s593 + $0xa0] sm:$0xff]
        %v617 = vld [vmem:[%s593 + $0xa8] sm:$0xff]
        %v618 = vld [vmem:[%s593 + $0xb0] sm:$0xff]
        %v619 = vld [vmem:[%s593 + $0xb8] sm:$0xff]
        %v620 = vld [vmem:[%s593 + $0xc0] sm:$0xff]
        %v621 = vld [vmem:[%s593 + $0xc8] sm:$0xff]
        %v622 = vld [vmem:[%s593 + $0xd0] sm:$0xff]
        %v623 = vld [vmem:[%s593 + $0xd8] sm:$0xff]
        %v624 = vld [vmem:[%s593 + $0xe0] sm:$0xff]
        %v625 = vld [vmem:[%s593 + $0xe8] sm:$0xff]
        %v626 = vld [vmem:[%s593 + $0xf0] sm:$0xff]
        %v627 = vld [vmem:[%s593 + $0xf8] sm:$0xff]
        %v628 = vlaneseq
        %v629 = vand.u32 %v628, 127
        %630 = vset.pattern.permute.xlu0 0
        %631 = vperm.xlu0 %630, %v596
        %v632 = vpop.permute.xlu0 %631
        %633 = vset.pattern.permute.xlu0 0
        %634 = vperm.xlu0 %633, %v597
        %v635 = vpop.permute.xlu0 %634
        %636 = vset.pattern.permute.xlu0 0
        %637 = vperm.xlu0 %636, %v598
        %v638 = vpop.permute.xlu0 %637
        %639 = vset.pattern.permute.xlu0 0
        %640 = vperm.xlu0 %639, %v599
        %v641 = vpop.permute.xlu0 %640
        %642 = vset.pattern.permute.xlu0 0
        %643 = vperm.xlu0 %642, %v600
        %v644 = vpop.permute.xlu0 %643
        %645 = vset.pattern.permute.xlu0 0
        %646 = vperm.xlu0 %645, %v601
        %v647 = vpop.permute.xlu0 %646
        %648 = vset.pattern.permute.xlu0 0
        %649 = vperm.xlu0 %648, %v602
        %v650 = vpop.permute.xlu0 %649
        %651 = vset.pattern.permute.xlu0 0
        %652 = vperm.xlu0 %651, %v603
        %v653 = vpop.permute.xlu0 %652
        %654 = vset.pattern.permute.xlu0 0
        %655 = vperm.xlu0 %654, %v604
        %v656 = vpop.permute.xlu0 %655
        %657 = vset.pattern.permute.xlu0 0
        %658 = vperm.xlu0 %657, %v605
        %v659 = vpop.permute.xlu0 %658
        %660 = vset.pattern.permute.xlu0 0
        %661 = vperm.xlu0 %660, %v606
        %v662 = vpop.permute.xlu0 %661
        %663 = vset.pattern.permute.xlu0 0
        %664 = vperm.xlu0 %663, %v607
        %v665 = vpop.permute.xlu0 %664
        %666 = vset.pattern.permute.xlu0 0
        %667 = vperm.xlu0 %666, %v608
        %v668 = vpop.permute.xlu0 %667
        %669 = vset.pattern.permute.xlu0 0
        %670 = vperm.xlu0 %669, %v609
        %v671 = vpop.permute.xlu0 %670
        %672 = vset.pattern.permute.xlu0 0
        %673 = vperm.xlu0 %672, %v610
        %v674 = vpop.permute.xlu0 %673
        %675 = vset.pattern.permute.xlu0 0
        %676 = vperm.xlu0 %675, %v611
        %v677 = vpop.permute.xlu0 %676
        %678 = vset.pattern.permute.xlu0 0
        %679 = vperm.xlu0 %678, %v612
        %v680 = vpop.permute.xlu0 %679
        %681 = vset.pattern.permute.xlu0 0
        %682 = vperm.xlu0 %681, %v613
        %v683 = vpop.permute.xlu0 %682
        %684 = vset.pattern.permute.xlu0 0
        %685 = vperm.xlu0 %684, %v614
        %v686 = vpop.permute.xlu0 %685
        %687 = vset.pattern.permute.xlu0 0
        %688 = vperm.xlu0 %687, %v615
        %v689 = vpop.permute.xlu0 %688
        %690 = vset.pattern.permute.xlu0 0
        %691 = vperm.xlu0 %690, %v616
        %v692 = vpop.permute.xlu0 %691
        %693 = vset.pattern.permute.xlu0 0
        %694 = vperm.xlu0 %693, %v617
        %v695 = vpop.permute.xlu0 %694
        %696 = vset.pattern.permute.xlu0 0
        %697 = vperm.xlu0 %696, %v618
        %v698 = vpop.permute.xlu0 %697
        %699 = vset.pattern.permute.xlu0 0
        %700 = vperm.xlu0 %699, %v619
        %v701 = vpop.permute.xlu0 %700
        %702 = vset.pattern.permute.xlu0 0
        %703 = vperm.xlu0 %702, %v620
        %v704 = vpop.permute.xlu0 %703
        %705 = vset.pattern.permute.xlu0 0
        %706 = vperm.xlu0 %705, %v621
        %v707 = vpop.permute.xlu0 %706
        %708 = vset.pattern.permute.xlu0 0
        %709 = vperm.xlu0 %708, %v622
        %v710 = vpop.permute.xlu0 %709
        %711 = vset.pattern.permute.xlu0 0
        %712 = vperm.xlu0 %711, %v623
        %v713 = vpop.permute.xlu0 %712
        %714 = vset.pattern.permute.xlu0 0
        %715 = vperm.xlu0 %714, %v624
        %v716 = vpop.permute.xlu0 %715
        %717 = vset.pattern.permute.xlu0 0
        %718 = vperm.xlu0 %717, %v625
        %v719 = vpop.permute.xlu0 %718
        %720 = vset.pattern.permute.xlu0 0
        %721 = vperm.xlu0 %720, %v626
        %v722 = vpop.permute.xlu0 %721
        %723 = vset.pattern.permute.xlu0 0
        %724 = vperm.xlu0 %723, %v627
        %v725 = vpop.permute.xlu0 %724
        %vm726 = vcmp.eq.s32.totalorder %v629, %v632
        %vm727 = vcmp.eq.s32.totalorder %v629, %v635
        %vm728 = vcmp.eq.s32.totalorder %v629, %v638
        %vm729 = vcmp.eq.s32.totalorder %v629, %v641
        %vm730 = vcmp.eq.s32.totalorder %v629, %v644
        %vm731 = vcmp.eq.s32.totalorder %v629, %v647
        %vm732 = vcmp.eq.s32.totalorder %v629, %v650
        %vm733 = vcmp.eq.s32.totalorder %v629, %v653
        %vm734 = vcmp.eq.s32.totalorder %v629, %v656
        %vm735 = vcmp.eq.s32.totalorder %v629, %v659
        %vm736 = vcmp.eq.s32.totalorder %v629, %v662
        %vm737 = vcmp.eq.s32.totalorder %v629, %v665
        %vm738 = vcmp.eq.s32.totalorder %v629, %v668
        %vm739 = vcmp.eq.s32.totalorder %v629, %v671
        %vm740 = vcmp.eq.s32.totalorder %v629, %v674
        %vm741 = vcmp.eq.s32.totalorder %v629, %v677
        %vm742 = vcmp.eq.s32.totalorder %v629, %v680
        %vm743 = vcmp.eq.s32.totalorder %v629, %v683
        %vm744 = vcmp.eq.s32.totalorder %v629, %v686
        %vm745 = vcmp.eq.s32.totalorder %v629, %v689
        %vm746 = vcmp.eq.s32.totalorder %v629, %v692
        %vm747 = vcmp.eq.s32.totalorder %v629, %v695
        %vm748 = vcmp.eq.s32.totalorder %v629, %v698
        %vm749 = vcmp.eq.s32.totalorder %v629, %v701
        %vm750 = vcmp.eq.s32.totalorder %v629, %v704
        %vm751 = vcmp.eq.s32.totalorder %v629, %v707
        %vm752 = vcmp.eq.s32.totalorder %v629, %v710
        %vm753 = vcmp.eq.s32.totalorder %v629, %v713
        %vm754 = vcmp.eq.s32.totalorder %v629, %v716
        %vm755 = vcmp.eq.s32.totalorder %v629, %v719
        %vm756 = vcmp.eq.s32.totalorder %v629, %v722
        %vm757 = vcmp.eq.s32.totalorder %v629, %v725
        %v758 = vsel %vm726, 1.0, 0.0
        %v759 = vsel %vm727, 1.0, 0.0
        %v760 = vsel %vm728, 1.0, 0.0
        %v761 = vsel %vm729, 1.0, 0.0
        %v762 = vsel %vm730, 1.0, 0.0
        %v763 = vsel %vm731, 1.0, 0.0
        %v764 = vsel %vm732, 1.0, 0.0
        %v765 = vsel %vm733, 1.0, 0.0
        %v766 = vsel %vm734, 1.0, 0.0
        %v767 = vsel %vm735, 1.0, 0.0
        %v768 = vsel %vm736, 1.0, 0.0
        %v769 = vsel %vm737, 1.0, 0.0
        %v770 = vsel %vm738, 1.0, 0.0
        %v771 = vsel %vm739, 1.0, 0.0
        %v772 = vsel %vm740, 1.0, 0.0
        %v773 = vsel %vm741, 1.0, 0.0
        %v774 = vsel %vm742, 1.0, 0.0
        %v775 = vsel %vm743, 1.0, 0.0
        %v776 = vsel %vm744, 1.0, 0.0
        %v777 = vsel %vm745, 1.0, 0.0
        %v778 = vsel %vm746, 1.0, 0.0
        %v779 = vsel %vm747, 1.0, 0.0
        %v780 = vsel %vm748, 1.0, 0.0
        %v781 = vsel %vm749, 1.0, 0.0
        %v782 = vsel %vm750, 1.0, 0.0
        %v783 = vsel %vm751, 1.0, 0.0
        %v784 = vsel %vm752, 1.0, 0.0
        %v785 = vsel %vm753, 1.0, 0.0
        %v786 = vsel %vm754, 1.0, 0.0
        %v787 = vsel %vm755, 1.0, 0.0
        %v788 = vsel %vm756, 1.0, 0.0
        %v789 = vsel %vm757, 1.0, 0.0
        %v790 = vpack.c.bf16 %v759, %v758
        %v791 = vpack.c.bf16 %v761, %v760
        %v792 = vpack.c.bf16 %v763, %v762
        %v793 = vpack.c.bf16 %v765, %v764
        %v794 = vpack.c.bf16 %v767, %v766
        %v795 = vpack.c.bf16 %v769, %v768
        %v796 = vpack.c.bf16 %v771, %v770
        %v797 = vpack.c.bf16 %v773, %v772
        %v798 = vpack.c.bf16 %v775, %v774
        %v799 = vpack.c.bf16 %v777, %v776
        %v800 = vpack.c.bf16 %v779, %v778
        %v801 = vpack.c.bf16 %v781, %v780
        %v802 = vpack.c.bf16 %v783, %v782
        %v803 = vpack.c.bf16 %v785, %v784
        %v804 = vpack.c.bf16 %v787, %v786
        %v805 = vpack.c.bf16 %v789, %v788
        %v806 = vld [vmem:[%s1] sm:$0xf]
        %v807 = vld [vmem:[%s1 + $0x4] sm:$0xf]
        %v808 = vld [vmem:[%s1 + $0x8] sm:$0xf]
        %v809 = vld [vmem:[%s1 + $0xc] sm:$0x1]
        %v814 = vunpack.c.l.b16 %v806
        %v815 = vunpack.c.l.b16 %v807
        %v816 = vunpack.c.l.b16 %v808
        %v817 = vunpack.c.l.b16 %v809
        %v818 = vpack.c.b16 %v815, %v814
        %v819 = vpack.c.b16 %v817, %v816
        %vm821 = vcmask 211968
        %v823 = vsel %vm821, %v790, 0
        %v826 = vsel %vm821, %v791, 0
        %v829 = vsel %vm821, %v792, 0
        %v832 = vsel %vm821, %v793, 0
        %v835 = vsel %vm821, %v794, 0
        %v838 = vsel %vm821, %v795, 0
        %v841 = vsel %vm821, %v796, 0
        %v844 = vsel %vm821, %v797, 0
        %v847 = vsel %vm821, %v798, 0
        %v850 = vsel %vm821, %v799, 0
        %v853 = vsel %vm821, %v800, 0
        %v856 = vsel %vm821, %v801, 0
        %v859 = vsel %vm821, %v802, 0
        %v862 = vsel %vm821, %v803, 0
        %v865 = vsel %vm821, %v804, 0
        %v868 = vsel %vm821, %v805, 0
        %vm870 = vcmask 1044480
        %v872 = vsel %vm870, %v819, 0
        %874 = vmatprep.subr.bf16.mxu0 0
        %875 = vmatpush1.bf16.msra.mxu0 %v818
        %876 = vmatprep.subr.bf16.mxu0 0
        %877 = vmatpush1.bf16.msra.mxu0 %v872
        %878 = vmatprep.subr.bf16.mxu0 0
        %879 = vmatpush1.bf16.msra.mxu0 0
        %880 = vmatprep.subr.bf16.mxu0 0
        %881 = vmatpush1.bf16.msra.mxu0 0
        %882 = vmatprep.subr.bf16.mxu0 0
        %883 = vmatpush1.bf16.msra.mxu0 0
        %884 = vmatprep.subr.bf16.mxu0 0
        %885 = vmatpush1.bf16.msra.mxu0 0
        %886 = vmatprep.subr.bf16.mxu0 0
        %887 = vmatpush1.bf16.msra.mxu0 0
        %888 = vmatprep.subr.bf16.mxu0 0
        %889 = vmatpush1.bf16.msra.mxu0 0
        %890 = vmatprep.subr.bf16.mxu0 0
        %891 = vmatpush1.bf16.msra.mxu0 0
        %892 = vmatprep.subr.bf16.mxu0 0
        %893 = vmatpush1.bf16.msra.mxu0 0
        %894 = vmatprep.subr.bf16.mxu0 0
        %895 = vmatpush1.bf16.msra.mxu0 0
        %896 = vmatprep.subr.bf16.mxu0 0
        %897 = vmatpush1.bf16.msra.mxu0 0
        %898 = vmatprep.subr.bf16.mxu0 0
        %899 = vmatpush1.bf16.msra.mxu0 0
        %900 = vmatprep.subr.bf16.mxu0 0
        %901 = vmatpush1.bf16.msra.mxu0 0
        %902 = vmatprep.subr.bf16.mxu0 0
        %903 = vmatpush1.bf16.msra.mxu0 0
        %904 = vmatprep.subr.bf16.mxu0 0
        %905 = vmatpush1.bf16.msra.mxu0 0
        %906 = vmatprep.mubr.bf16.mxu0 0
        %907 = vmatmul.mubr.bf16.gmra.mrb[0].mxu0 %v823
        %v908 = vpop.f32.mrb[0].mxu0
        %v909 = vadd.f32 0.0, %v908
        %v910 = vpop.f32.mrb[0].mxu0
        %v911 = vpop.f32.mrb[0].mxu0
        %v912 = vadd.f32 0.0, %v911
        %v913 = vpop.f32.mrb[0].mxu0
        %914 = vmatprep.mubr.bf16.mxu0 0
        %915 = vmatmul.mubr.bf16.gmra.mrb[0].mxu0 %v826
        %v916 = vpop.f32.mrb[0].mxu0
        %v917 = vadd.f32 0.0, %v916
        %v918 = vpop.f32.mrb[0].mxu0
        %v919 = vpop.f32.mrb[0].mxu0
        %v920 = vadd.f32 0.0, %v919
        %v921 = vpop.f32.mrb[0].mxu0
        %922 = vmatprep.mubr.bf16.mxu0 0
        %923 = vmatmul.mubr.bf16.gmra.mrb[0].mxu0 %v829
        %v924 = vpop.f32.mrb[0].mxu0
        %v925 = vadd.f32 0.0, %v924
        %v926 = vpop.f32.mrb[0].mxu0
        %v927 = vpop.f32.mrb[0].mxu0
        %v928 = vadd.f32 0.0, %v927
        %v929 = vpop.f32.mrb[0].mxu0
        %930 = vmatprep.mubr.bf16.mxu0 0
        %931 = vmatmul.mubr.bf16.gmra.mrb[0].mxu0 %v832
        %v932 = vpop.f32.mrb[0].mxu0
        %v933 = vadd.f32 0.0, %v932
        %v934 = vpop.f32.mrb[0].mxu0
        %v935 = vpop.f32.mrb[0].mxu0
        %v936 = vadd.f32 0.0, %v935
        %v937 = vpop.f32.mrb[0].mxu0
        %938 = vmatprep.mubr.bf16.mxu0 0
        %939 = vmatmul.mubr.bf16.gmra.mrb[0].mxu0 %v835
        %v940 = vpop.f32.mrb[0].mxu0
        %v941 = vadd.f32 0.0, %v940
        %v942 = vpop.f32.mrb[0].mxu0
        %v943 = vpop.f32.mrb[0].mxu0
        %v944 = vadd.f32 0.0, %v943
        %v945 = vpop.f32.mrb[0].mxu0
        %946 = vmatprep.mubr.bf16.mxu0 0
        %947 = vmatmul.mubr.bf16.gmra.mrb[0].mxu0 %v838
        %v948 = vpop.f32.mrb[0].mxu0
        %v949 = vadd.f32 0.0, %v948
        %v950 = vpop.f32.mrb[0].mxu0
        %v951 = vpop.f32.mrb[0].mxu0
        %v952 = vadd.f32 0.0, %v951
        %v953 = vpop.f32.mrb[0].mxu0
        %954 = vmatprep.mubr.bf16.mxu0 0
        %955 = vmatmul.mubr.bf16.gmra.mrb[0].mxu0 %v841
        %v956 = vpop.f32.mrb[0].mxu0
        %v957 = vadd.f32 0.0, %v956
        %v958 = vpop.f32.mrb[0].mxu0
        %v959 = vpop.f32.mrb[0].mxu0
        %v960 = vadd.f32 0.0, %v959
        %v961 = vpop.f32.mrb[0].mxu0
        %962 = vmatprep.mubr.bf16.mxu0 0
        %963 = vmatmul.mubr.bf16.gmra.mrb[0].mxu0 %v844
        %v964 = vpop.f32.mrb[0].mxu0
        %v965 = vadd.f32 0.0, %v964
        %v966 = vpop.f32.mrb[0].mxu0
        %v967 = vpop.f32.mrb[0].mxu0
        %v968 = vadd.f32 0.0, %v967
        %v969 = vpop.f32.mrb[0].mxu0
        %970 = vmatprep.mubr.bf16.mxu0 0
        %971 = vmatmul.mubr.bf16.gmra.mrb[0].mxu0 %v847
        %v972 = vpop.f32.mrb[0].mxu0
        %v973 = vadd.f32 0.0, %v972
        %v974 = vpop.f32.mrb[0].mxu0
        %v975 = vpop.f32.mrb[0].mxu0
        %v976 = vadd.f32 0.0, %v975
        %v977 = vpop.f32.mrb[0].mxu0
        %978 = vmatprep.mubr.bf16.mxu0 0
        %979 = vmatmul.mubr.bf16.gmra.mrb[0].mxu0 %v850
        %v980 = vpop.f32.mrb[0].mxu0
        %v981 = vadd.f32 0.0, %v980
        %v982 = vpop.f32.mrb[0].mxu0
        %v983 = vpop.f32.mrb[0].mxu0
        %v984 = vadd.f32 0.0, %v983
        %v985 = vpop.f32.mrb[0].mxu0
        %986 = vmatprep.mubr.bf16.mxu0 0
        %987 = vmatmul.mubr.bf16.gmra.mrb[0].mxu0 %v853
        %v988 = vpop.f32.mrb[0].mxu0
        %v989 = vadd.f32 0.0, %v988
        %v990 = vpop.f32.mrb[0].mxu0
        %v991 = vpop.f32.mrb[0].mxu0
        %v992 = vadd.f32 0.0, %v991
        %v993 = vpop.f32.mrb[0].mxu0
        %994 = vmatprep.mubr.bf16.mxu0 0
        %995 = vmatmul.mubr.bf16.gmra.mrb[0].mxu0 %v856
        %v996 = vpop.f32.mrb[0].mxu0
        %v997 = vadd.f32 0.0, %v996
        %v998 = vpop.f32.mrb[0].mxu0
        %v999 = vpop.f32.mrb[0].mxu0
        %v1000 = vadd.f32 0.0, %v999
        %v1001 = vpop.f32.mrb[0].mxu0
        %1002 = vmatprep.mubr.bf16.mxu0 0
        %1003 = vmatmul.mubr.bf16.gmra.mrb[0].mxu0 %v859
        %v1004 = vpop.f32.mrb[0].mxu0
        %v1005 = vadd.f32 0.0, %v1004
        %v1006 = vpop.f32.mrb[0].mxu0
        %v1007 = vpop.f32.mrb[0].mxu0
        %v1008 = vadd.f32 0.0, %v1007
        %v1009 = vpop.f32.mrb[0].mxu0
        %1010 = vmatprep.mubr.bf16.mxu0 0
        %1011 = vmatmul.mubr.bf16.gmra.mrb[0].mxu0 %v862
        %v1012 = vpop.f32.mrb[0].mxu0
        %v1013 = vadd.f32 0.0, %v1012
        %v1014 = vpop.f32.mrb[0].mxu0
        %v1015 = vpop.f32.mrb[0].mxu0
        %v1016 = vadd.f32 0.0, %v1015
        %v1017 = vpop.f32.mrb[0].mxu0
        %1018 = vmatprep.mubr.bf16.mxu0 0
        %1019 = vmatmul.mubr.bf16.gmra.mrb[0].mxu0 %v865
        %v1020 = vpop.f32.mrb[0].mxu0
        %v1021 = vadd.f32 0.0, %v1020
        %v1022 = vpop.f32.mrb[0].mxu0
        %v1023 = vpop.f32.mrb[0].mxu0
        %v1024 = vadd.f32 0.0, %v1023
        %v1025 = vpop.f32.mrb[0].mxu0
        %1026 = vmatprep.mubr.bf16.mxu0 0
        %1027 = vmatmul.mubr.bf16.gmra.mrb[0].mxu0 %v868
        %v1028 = vpop.f32.mrb[0].mxu0
        %v1029 = vadd.f32 0.0, %v1028
        %v1030 = vpop.f32.mrb[0].mxu0
        %v1031 = vpop.f32.mrb[0].mxu0
        %v1032 = vadd.f32 0.0, %v1031
        %v1033 = vpop.f32.mrb[0].mxu0
        %1034 = vdwg.mxu0
        %vm1068 = vcmask 1046528
        %v1069 = vrot.slane %v909, 1
        %v1070 = vrot.slane %v912, 1
        %v1071 = vsel %vm1068, %v1069, %v1070
        %v1072 = vrot.slane %v917, 1
        %v1073 = vsel %vm1068, %v1070, %v1072
        %v1074 = vrot.slane %v920, 1
        %v1075 = vsel %vm1068, %v1072, %v1074
        %v1076 = vrot.slane %v925, 1
        %v1077 = vsel %vm1068, %v1074, %v1076
        %v1078 = vrot.slane %v928, 1
        %v1079 = vsel %vm1068, %v1076, %v1078
        %v1080 = vrot.slane %v933, 1
        %v1081 = vsel %vm1068, %v1078, %v1080
        %v1082 = vrot.slane %v936, 1
        %v1083 = vsel %vm1068, %v1080, %v1082
        %v1084 = vrot.slane %v941, 1
        %v1085 = vsel %vm1068, %v1082, %v1084
        %v1086 = vrot.slane %v944, 1
        %v1087 = vsel %vm1068, %v1084, %v1086
        %v1088 = vrot.slane %v949, 1
        %v1089 = vsel %vm1068, %v1086, %v1088
        %v1090 = vrot.slane %v952, 1
        %v1091 = vsel %vm1068, %v1088, %v1090
        %v1092 = vrot.slane %v957, 1
        %v1093 = vsel %vm1068, %v1090, %v1092
        %v1094 = vrot.slane %v960, 1
        %v1095 = vsel %vm1068, %v1092, %v1094
        %v1096 = vrot.slane %v965, 1
        %v1097 = vsel %vm1068, %v1094, %v1096
        %v1098 = vrot.slane %v968, 1
        %v1099 = vsel %vm1068, %v1096, %v1098
        %v1100 = vrot.slane %v973, 1
        %v1101 = vsel %vm1068, %v1098, %v1100
        %v1102 = vrot.slane %v976, 1
        %v1103 = vsel %vm1068, %v1100, %v1102
        %v1104 = vrot.slane %v981, 1
        %v1105 = vsel %vm1068, %v1102, %v1104
        %v1106 = vrot.slane %v984, 1
        %v1107 = vsel %vm1068, %v1104, %v1106
        %v1108 = vrot.slane %v989, 1
        %v1109 = vsel %vm1068, %v1106, %v1108
        %v1110 = vrot.slane %v992, 1
        %v1111 = vsel %vm1068, %v1108, %v1110
        %v1112 = vrot.slane %v997, 1
        %v1113 = vsel %vm1068, %v1110, %v1112
        %v1114 = vrot.slane %v1000, 1
        %v1115 = vsel %vm1068, %v1112, %v1114
        %v1116 = vrot.slane %v1005, 1
        %v1117 = vsel %vm1068, %v1114, %v1116
        %v1118 = vrot.slane %v1008, 1
        %v1119 = vsel %vm1068, %v1116, %v1118
        %v1120 = vrot.slane %v1013, 1
        %v1121 = vsel %vm1068, %v1118, %v1120
        %v1122 = vrot.slane %v1016, 1
        %v1123 = vsel %vm1068, %v1120, %v1122
        %v1124 = vrot.slane %v1021, 1
        %v1125 = vsel %vm1068, %v1122, %v1124
        %v1126 = vrot.slane %v1024, 1
        %v1127 = vsel %vm1068, %v1124, %v1126
        %v1128 = vrot.slane %v1029, 1
        %v1129 = vsel %vm1068, %v1126, %v1128
        %v1130 = vrot.slane %v1032, 1
        %v1131 = vsel %vm1068, %v1128, %v1130
        %v1132 = vrot.slane 0.0, 1
        %v1133 = vsel %vm1068, %v1130, %v1132
        %vm1166 = vcmask 1045504
        %v1167 = vrot.slane %v909, 2
        %v1168 = vrot.slane %v912, 2
        %v1169 = vsel %vm1166, %v1167, %v1168
        %v1170 = vrot.slane %v917, 2
        %v1171 = vsel %vm1166, %v1168, %v1170
        %v1172 = vrot.slane %v920, 2
        %v1173 = vsel %vm1166, %v1170, %v1172
        %v1174 = vrot.slane %v925, 2
        %v1175 = vsel %vm1166, %v1172, %v1174
        %v1176 = vrot.slane %v928, 2
        %v1177 = vsel %vm1166, %v1174, %v1176
        %v1178 = vrot.slane %v933, 2
        %v1179 = vsel %vm1166, %v1176, %v1178
        %v1180 = vrot.slane %v936, 2
        %v1181 = vsel %vm1166, %v1178, %v1180
        %v1182 = vrot.slane %v941, 2
        %v1183 = vsel %vm1166, %v1180, %v1182
        %v1184 = vrot.slane %v944, 2
        %v1185 = vsel %vm1166, %v1182, %v1184
        %v1186 = vrot.slane %v949, 2
        %v1187 = vsel %vm1166, %v1184, %v1186
        %v1188 = vrot.slane %v952, 2
        %v1189 = vsel %vm1166, %v1186, %v1188
        %v1190 = vrot.slane %v957, 2
        %v1191 = vsel %vm1166, %v1188, %v1190
        %v1192 = vrot.slane %v960, 2
        %v1193 = vsel %vm1166, %v1190, %v1192
        %v1194 = vrot.slane %v965, 2
        %v1195 = vsel %vm1166, %v1192, %v1194
        %v1196 = vrot.slane %v968, 2
        %v1197 = vsel %vm1166, %v1194, %v1196
        %v1198 = vrot.slane %v973, 2
        %v1199 = vsel %vm1166, %v1196, %v1198
        %v1200 = vrot.slane %v976, 2
        %v1201 = vsel %vm1166, %v1198, %v1200
        %v1202 = vrot.slane %v981, 2
        %v1203 = vsel %vm1166, %v1200, %v1202
        %v1204 = vrot.slane %v984, 2
        %v1205 = vsel %vm1166, %v1202, %v1204
        %v1206 = vrot.slane %v989, 2
        %v1207 = vsel %vm1166, %v1204, %v1206
        %v1208 = vrot.slane %v992, 2
        %v1209 = vsel %vm1166, %v1206, %v1208
        %v1210 = vrot.slane %v997, 2
        %v1211 = vsel %vm1166, %v1208, %v1210
        %v1212 = vrot.slane %v1000, 2
        %v1213 = vsel %vm1166, %v1210, %v1212
        %v1214 = vrot.slane %v1005, 2
        %v1215 = vsel %vm1166, %v1212, %v1214
        %v1216 = vrot.slane %v1008, 2
        %v1217 = vsel %vm1166, %v1214, %v1216
        %v1218 = vrot.slane %v1013, 2
        %v1219 = vsel %vm1166, %v1216, %v1218
        %v1220 = vrot.slane %v1016, 2
        %v1221 = vsel %vm1166, %v1218, %v1220
        %v1222 = vrot.slane %v1021, 2
        %v1223 = vsel %vm1166, %v1220, %v1222
        %v1224 = vrot.slane %v1024, 2
        %v1225 = vsel %vm1166, %v1222, %v1224
        %v1226 = vrot.slane %v1029, 2
        %v1227 = vsel %vm1166, %v1224, %v1226
        %v1228 = vrot.slane %v1032, 2
        %v1229 = vsel %vm1166, %v1226, %v1228
        %v1230 = vrot.slane 0.0, 2
        %v1231 = vsel %vm1166, %v1228, %v1230
        %v1264 = vpack.c.bf16 %v912, %v909
        %v1265 = vpack.c.bf16 %v1073, %v1071
        %v1266 = vpack.c.bf16 %v1171, %v1169
        %v1267 = vpack.c.bf16 %v920, %v917
        %v1268 = vpack.c.bf16 %v1077, %v1075
        %v1269 = vpack.c.bf16 %v1175, %v1173
        %v1270 = vpack.c.bf16 %v928, %v925
        %v1271 = vpack.c.bf16 %v1081, %v1079
        %v1272 = vpack.c.bf16 %v1179, %v1177
        %v1273 = vpack.c.bf16 %v936, %v933
        %v1274 = vpack.c.bf16 %v1085, %v1083
        %v1275 = vpack.c.bf16 %v1183, %v1181
        %v1276 = vpack.c.bf16 %v944, %v941
        %v1277 = vpack.c.bf16 %v1089, %v1087
        %v1278 = vpack.c.bf16 %v1187, %v1185
        %v1279 = vpack.c.bf16 %v952, %v949
        %v1280 = vpack.c.bf16 %v1093, %v1091
        %v1281 = vpack.c.bf16 %v1191, %v1189
        %v1282 = vpack.c.bf16 %v960, %v957
        %v1283 = vpack.c.bf16 %v1097, %v1095
        %v1284 = vpack.c.bf16 %v1195, %v1193
        %v1285 = vpack.c.bf16 %v968, %v965
        %v1286 = vpack.c.bf16 %v1101, %v1099
        %v1287 = vpack.c.bf16 %v1199, %v1197
        %v1288 = vpack.c.bf16 %v976, %v973
        %v1289 = vpack.c.bf16 %v1105, %v1103
        %v1290 = vpack.c.bf16 %v1203, %v1201
        %v1291 = vpack.c.bf16 %v984, %v981
        %v1292 = vpack.c.bf16 %v1109, %v1107
        %v1293 = vpack.c.bf16 %v1207, %v1205
        %v1294 = vpack.c.bf16 %v992, %v989
        %v1295 = vpack.c.bf16 %v1113, %v1111
        %v1296 = vpack.c.bf16 %v1211, %v1209
        %v1297 = vpack.c.bf16 %v1000, %v997
        %v1298 = vpack.c.bf16 %v1117, %v1115
        %v1299 = vpack.c.bf16 %v1215, %v1213
        %v1300 = vpack.c.bf16 %v1008, %v1005
        %v1301 = vpack.c.bf16 %v1121, %v1119
        %v1302 = vpack.c.bf16 %v1219, %v1217
        %v1303 = vpack.c.bf16 %v1016, %v1013
        %v1304 = vpack.c.bf16 %v1125, %v1123
        %v1305 = vpack.c.bf16 %v1223, %v1221
        %v1306 = vpack.c.bf16 %v1024, %v1021
        %v1307 = vpack.c.bf16 %v1129, %v1127
        %v1308 = vpack.c.bf16 %v1227, %v1225
        %v1309 = vpack.c.bf16 %v1032, %v1029
        %v1310 = vpack.c.bf16 %v1133, %v1131
        %v1311 = vpack.c.bf16 %v1231, %v1229
        %v1312 = vld [vmem:[%s2] sm:$0xf]
        %v1313 = vld [vmem:[%s2 + $0x4] sm:$0xf]
        %v1314 = vld [vmem:[%s2 + $0x8] sm:$0xf]
        %v1315 = vld [vmem:[%s2 + $0xc] sm:$0xf]
        %v1316 = vld [vmem:[%s2 + $0x10] sm:$0xf]
        %v1317 = vld [vmem:[%s2 + $0x14] sm:$0xf]
        %v1318 = vld [vmem:[%s2 + $0x18] sm:$0xf]
        %v1319 = vld [vmem:[%s2 + $0x1c] sm:$0xf]
        %v1320 = vld [vmem:[%s2 + $0x20] sm:$0xf]
        %v1321 = vld [vmem:[%s2 + $0x24] sm:$0xf]
        %v1322 = vld [vmem:[%s2 + $0x28] sm:$0xf]
        %v1323 = vld [vmem:[%s2 + $0x2c] sm:$0xf]
        %v1324 = vld [vmem:[%s2 + $0x30] sm:$0xf]
        %v1325 = vld [vmem:[%s2 + $0x34] sm:$0xf]
        %v1326 = vld [vmem:[%s2 + $0x38] sm:$0xf]
        %v1327 = vld [vmem:[%s2 + $0x3c] sm:$0xf]
        %v1328 = vld [vmem:[%s2 + $0x40] sm:$0xf]
        %v1329 = vld [vmem:[%s2 + $0x44] sm:$0xf]
        %v1330 = vld [vmem:[%s2 + $0x48] sm:$0xf]
        %v1331 = vld [vmem:[%s2 + $0x4c] sm:$0xf]
        %v1332 = vld [vmem:[%s2 + $0x50] sm:$0xf]
        %v1333 = vld [vmem:[%s2 + $0x54] sm:$0xf]
        %v1334 = vld [vmem:[%s2 + $0x58] sm:$0xf]
        %v1335 = vld [vmem:[%s2 + $0x5c] sm:$0xf]
        %v1336 = vld [vmem:[%s2 + $0x60] sm:$0xf]
        %v1337 = vld [vmem:[%s2 + $0x64] sm:$0xf]
        %v1338 = vld [vmem:[%s2 + $0x68] sm:$0xf]
        %v1339 = vld [vmem:[%s2 + $0x6c] sm:$0xf]
        %v1340 = vld [vmem:[%s2 + $0x70] sm:$0xf]
        %v1341 = vld [vmem:[%s2 + $0x74] sm:$0xf]
        %v1342 = vld [vmem:[%s2 + $0x78] sm:$0xf]
        %v1343 = vld [vmem:[%s2 + $0x7c] sm:$0xf]
        %v1344 = vld [vmem:[%s2 + $0x80] sm:$0xf]
        %v1345 = vld [vmem:[%s2 + $0x84] sm:$0xf]
        %v1346 = vld [vmem:[%s2 + $0x88] sm:$0xf]
        %v1347 = vld [vmem:[%s2 + $0x8c] sm:$0xf]
        %v1348 = vld [vmem:[%s2 + $0x90] sm:$0xf]
        %v1349 = vld [vmem:[%s2 + $0x94] sm:$0xf]
        %v1350 = vld [vmem:[%s2 + $0x98] sm:$0xf]
        %v1351 = vld [vmem:[%s2 + $0x9c] sm:$0xf]
        %v1352 = vld [vmem:[%s2 + $0xa0] sm:$0xf]
        %v1353 = vld [vmem:[%s2 + $0xa4] sm:$0xf]
        %v1354 = vld [vmem:[%s2 + $0xa8] sm:$0xf]
        %v1355 = vld [vmem:[%s2 + $0xac] sm:$0xf]
        %v1356 = vld [vmem:[%s2 + $0xb0] sm:$0xf]
        %v1357 = vld [vmem:[%s2 + $0xb4] sm:$0xf]
        %v1358 = vld [vmem:[%s2 + $0xb8] sm:$0xf]
        %v1359 = vld [vmem:[%s2 + $0xbc] sm:$0xf]
        %v1360 = vld [vmem:[%s3] sm:$0x1]
        %v1362 = vlaneseq
        %v1363 = vshrl.u32 %v1362, 7
        %v1364 = vsub.s32 0, %v1363
        %v1365 = vrot.slane %v1360, %v1364
        %v1415 = vunpack.c.l.b16 %v1312
        %v1416 = vunpack.c.l.b16 %v1313
        %v1417 = vunpack.c.l.b16 %v1314
        %v1418 = vunpack.c.l.b16 %v1315
        %v1419 = vunpack.c.l.b16 %v1316
        %v1420 = vunpack.c.l.b16 %v1317
        %v1421 = vunpack.c.l.b16 %v1318
        %v1422 = vunpack.c.l.b16 %v1319
        %v1423 = vunpack.c.l.b16 %v1320
        %v1424 = vunpack.c.l.b16 %v1321
        %v1425 = vunpack.c.l.b16 %v1322
        %v1426 = vunpack.c.l.b16 %v1323
        %v1427 = vunpack.c.l.b16 %v1324
        %v1428 = vunpack.c.l.b16 %v1325
        %v1429 = vunpack.c.l.b16 %v1326
        %v1430 = vunpack.c.l.b16 %v1327
        %v1431 = vunpack.c.l.b16 %v1328
        %v1432 = vunpack.c.l.b16 %v1329
        %v1433 = vunpack.c.l.b16 %v1330
        %v1434 = vunpack.c.l.b16 %v1331
        %v1435 = vunpack.c.l.b16 %v1332
        %v1436 = vunpack.c.l.b16 %v1333
        %v1437 = vunpack.c.l.b16 %v1334
        %v1438 = vunpack.c.l.b16 %v1335
        %v1439 = vunpack.c.l.b16 %v1336
        %v1440 = vunpack.c.l.b16 %v1337
        %v1441 = vunpack.c.l.b16 %v1338
        %v1442 = vunpack.c.l.b16 %v1339
        %v1443 = vunpack.c.l.b16 %v1340
        %v1444 = vunpack.c.l.b16 %v1341
        %v1445 = vunpack.c.l.b16 %v1342
        %v1446 = vunpack.c.l.b16 %v1343
        %v1447 = vunpack.c.l.b16 %v1344
        %v1448 = vunpack.c.l.b16 %v1345
        %v1449 = vunpack.c.l.b16 %v1346
        %v1450 = vunpack.c.l.b16 %v1347
        %v1451 = vunpack.c.l.b16 %v1348
        %v1452 = vunpack.c.l.b16 %v1349
        %v1453 = vunpack.c.l.b16 %v1350
        %v1454 = vunpack.c.l.b16 %v1351
        %v1455 = vunpack.c.l.b16 %v1352
        %v1456 = vunpack.c.l.b16 %v1353
        %v1457 = vunpack.c.l.b16 %v1354
        %v1458 = vunpack.c.l.b16 %v1355
        %v1459 = vunpack.c.l.b16 %v1356
        %v1460 = vunpack.c.l.b16 %v1357
        %v1461 = vunpack.c.l.b16 %v1358
        %v1462 = vunpack.c.l.b16 %v1359
        %v1463 = vpack.c.b16 %v1416, %v1415
        %v1464 = vpack.c.b16 %v1418, %v1417
        %v1465 = vpack.c.b16 %v1420, %v1419
        %v1466 = vpack.c.b16 %v1422, %v1421
        %v1467 = vpack.c.b16 %v1424, %v1423
        %v1468 = vpack.c.b16 %v1426, %v1425
        %v1469 = vpack.c.b16 %v1428, %v1427
        %v1470 = vpack.c.b16 %v1430, %v1429
        %v1471 = vpack.c.b16 %v1432, %v1431
        %v1472 = vpack.c.b16 %v1434, %v1433
        %v1473 = vpack.c.b16 %v1436, %v1435
        %v1474 = vpack.c.b16 %v1438, %v1437
        %v1475 = vpack.c.b16 %v1440, %v1439
        %v1476 = vpack.c.b16 %v1442, %v1441
        %v1477 = vpack.c.b16 %v1444, %v1443
        %v1478 = vpack.c.b16 %v1446, %v1445
        %v1479 = vpack.c.b16 %v1448, %v1447
        %v1480 = vpack.c.b16 %v1450, %v1449
        %v1481 = vpack.c.b16 %v1452, %v1451
        %v1482 = vpack.c.b16 %v1454, %v1453
        %v1483 = vpack.c.b16 %v1456, %v1455
        %v1484 = vpack.c.b16 %v1458, %v1457
        %v1485 = vpack.c.b16 %v1460, %v1459
        %v1486 = vpack.c.b16 %v1462, %v1461
        %1511 = vmatprep.subr.bf16.mxu0 0
        %1512 = vmatpush1.bf16.msra.mxu0 %v1463
        %1513 = vmatprep.subr.bf16.mxu0 0
        %1514 = vmatpush1.bf16.msra.mxu0 %v1464
        %1515 = vmatprep.subr.bf16.mxu0 0
        %1516 = vmatpush1.bf16.msra.mxu0 %v1465
        %1517 = vmatprep.subr.bf16.mxu0 0
        %1518 = vmatpush1.bf16.msra.mxu0 %v1466
        %1519 = vmatprep.subr.bf16.mxu0 0
        %1520 = vmatpush1.bf16.msra.mxu0 %v1467
        %1521 = vmatprep.subr.bf16.mxu0 0
        %1522 = vmatpush1.bf16.msra.mxu0 %v1468
        %1523 = vmatprep.subr.bf16.mxu0 0
        %1524 = vmatpush1.bf16.msra.mxu0 %v1469
        %1525 = vmatprep.subr.bf16.mxu0 0
        %1526 = vmatpush1.bf16.msra.mxu0 %v1470
        %1527 = vmatprep.subr.bf16.mxu0 0
        %1528 = vmatpush1.bf16.msra.mxu0 %v1471
        %1529 = vmatprep.subr.bf16.mxu0 0
        %1530 = vmatpush1.bf16.msra.mxu0 %v1472
        %1531 = vmatprep.subr.bf16.mxu0 0
        %1532 = vmatpush1.bf16.msra.mxu0 %v1473
        %1533 = vmatprep.subr.bf16.mxu0 0
        %1534 = vmatpush1.bf16.msra.mxu0 %v1474
        %1535 = vmatprep.subr.bf16.mxu0 0
        %1536 = vmatpush1.bf16.msra.mxu0 %v1475
        %1537 = vmatprep.subr.bf16.mxu0 0
        %1538 = vmatpush1.bf16.msra.mxu0 %v1476
        %1539 = vmatprep.subr.bf16.mxu0 0
        %1540 = vmatpush1.bf16.msra.mxu0 %v1477
        %1541 = vmatprep.subr.bf16.mxu0 0
        %1542 = vmatpush1.bf16.msra.mxu0 %v1478
        %1543 = vmatprep.mubr.bf16.mxu0 %v1265
        %1544 = vmatmul.mubr.bf16.gmra.mrb[0].mxu0 %v1264
        %v1545 = vpop.f32.mrb[0].mxu0
        %v1546 = vadd.f32 %v1365, %v1545
        %v1547 = vpop.f32.mrb[0].mxu0
        %v1548 = vpop.f32.mrb[0].mxu0
        %v1549 = vadd.f32 %v1365, %v1548
        %v1550 = vpop.f32.mrb[0].mxu0
        %1551 = vmatprep.mubr.bf16.mxu0 %v1268
        %1552 = vmatmul.mubr.bf16.gmra.mrb[0].mxu0 %v1267
        %v1553 = vpop.f32.mrb[0].mxu0
        %v1554 = vadd.f32 %v1365, %v1553
        %v1555 = vpop.f32.mrb[0].mxu0
        %v1556 = vpop.f32.mrb[0].mxu0
        %v1557 = vadd.f32 %v1365, %v1556
        %v1558 = vpop.f32.mrb[0].mxu0
        %1559 = vmatprep.mubr.bf16.mxu0 %v1271
        %1560 = vmatmul.mubr.bf16.gmra.mrb[0].mxu0 %v1270
        %v1561 = vpop.f32.mrb[0].mxu0
        %v1562 = vadd.f32 %v1365, %v1561
        %v1563 = vpop.f32.mrb[0].mxu0
        %v1564 = vpop.f32.mrb[0].mxu0
        %v1565 = vadd.f32 %v1365, %v1564
        %v1566 = vpop.f32.mrb[0].mxu0
        %1567 = vmatprep.mubr.bf16.mxu0 %v1274
        %1568 = vmatmul.mubr.bf16.gmra.mrb[0].mxu0 %v1273
        %v1569 = vpop.f32.mrb[0].mxu0
        %v1570 = vadd.f32 %v1365, %v1569
        %v1571 = vpop.f32.mrb[0].mxu0
        %v1572 = vpop.f32.mrb[0].mxu0
        %v1573 = vadd.f32 %v1365, %v1572
        %v1574 = vpop.f32.mrb[0].mxu0
        %1575 = vmatprep.mubr.bf16.mxu0 %v1277
        %1576 = vmatmul.mubr.bf16.gmra.mrb[0].mxu0 %v1276
        %v1577 = vpop.f32.mrb[0].mxu0
        %v1578 = vadd.f32 %v1365, %v1577
        %v1579 = vpop.f32.mrb[0].mxu0
        %v1580 = vpop.f32.mrb[0].mxu0
        %v1581 = vadd.f32 %v1365, %v1580
        %v1582 = vpop.f32.mrb[0].mxu0
        %1583 = vmatprep.mubr.bf16.mxu0 %v1280
        %1584 = vmatmul.mubr.bf16.gmra.mrb[0].mxu0 %v1279
        %v1585 = vpop.f32.mrb[0].mxu0
        %v1586 = vadd.f32 %v1365, %v1585
        %v1587 = vpop.f32.mrb[0].mxu0
        %v1588 = vpop.f32.mrb[0].mxu0
        %v1589 = vadd.f32 %v1365, %v1588
        %v1590 = vpop.f32.mrb[0].mxu0
        %1591 = vmatprep.mubr.bf16.mxu0 %v1283
        %1592 = vmatmul.mubr.bf16.gmra.mrb[0].mxu0 %v1282
        %v1593 = vpop.f32.mrb[0].mxu0
        %v1594 = vadd.f32 %v1365, %v1593
        %v1595 = vpop.f32.mrb[0].mxu0
        %v1596 = vpop.f32.mrb[0].mxu0
        %v1597 = vadd.f32 %v1365, %v1596
        %v1598 = vpop.f32.mrb[0].mxu0
        %1599 = vmatprep.mubr.bf16.mxu0 %v1286
        %1600 = vmatmul.mubr.bf16.gmra.mrb[0].mxu0 %v1285
        %v1601 = vpop.f32.mrb[0].mxu0
        %v1602 = vadd.f32 %v1365, %v1601
        %v1603 = vpop.f32.mrb[0].mxu0
        %v1604 = vpop.f32.mrb[0].mxu0
        %v1605 = vadd.f32 %v1365, %v1604
        %v1606 = vpop.f32.mrb[0].mxu0
        %1607 = vmatprep.mubr.bf16.mxu0 %v1289
        %1608 = vmatmul.mubr.bf16.gmra.mrb[0].mxu0 %v1288
        %v1609 = vpop.f32.mrb[0].mxu0
        %v1610 = vadd.f32 %v1365, %v1609
        %v1611 = vpop.f32.mrb[0].mxu0
        %v1612 = vpop.f32.mrb[0].mxu0
        %v1613 = vadd.f32 %v1365, %v1612
        %v1614 = vpop.f32.mrb[0].mxu0
        %1615 = vmatprep.mubr.bf16.mxu0 %v1292
        %1616 = vmatmul.mubr.bf16.gmra.mrb[0].mxu0 %v1291
        %v1617 = vpop.f32.mrb[0].mxu0
        %v1618 = vadd.f32 %v1365, %v1617
        %v1619 = vpop.f32.mrb[0].mxu0
        %v1620 = vpop.f32.mrb[0].mxu0
        %v1621 = vadd.f32 %v1365, %v1620
        %v1622 = vpop.f32.mrb[0].mxu0
        %1623 = vmatprep.mubr.bf16.mxu0 %v1295
        %1624 = vmatmul.mubr.bf16.gmra.mrb[0].mxu0 %v1294
        %v1625 = vpop.f32.mrb[0].mxu0
        %v1626 = vadd.f32 %v1365, %v1625
        %v1627 = vpop.f32.mrb[0].mxu0
        %v1628 = vpop.f32.mrb[0].mxu0
        %v1629 = vadd.f32 %v1365, %v1628
        %v1630 = vpop.f32.mrb[0].mxu0
        %1631 = vmatprep.mubr.bf16.mxu0 %v1298
        %1632 = vmatmul.mubr.bf16.gmra.mrb[0].mxu0 %v1297
        %v1633 = vpop.f32.mrb[0].mxu0
        %v1634 = vadd.f32 %v1365, %v1633
        %v1635 = vpop.f32.mrb[0].mxu0
        %v1636 = vpop.f32.mrb[0].mxu0
        %v1637 = vadd.f32 %v1365, %v1636
        %v1638 = vpop.f32.mrb[0].mxu0
        %1639 = vmatprep.mubr.bf16.mxu0 %v1301
        %1640 = vmatmul.mubr.bf16.gmra.mrb[0].mxu0 %v1300
        %v1641 = vpop.f32.mrb[0].mxu0
        %v1642 = vadd.f32 %v1365, %v1641
        %v1643 = vpop.f32.mrb[0].mxu0
        %v1644 = vpop.f32.mrb[0].mxu0
        %v1645 = vadd.f32 %v1365, %v1644
        %v1646 = vpop.f32.mrb[0].mxu0
        %1647 = vmatprep.mubr.bf16.mxu0 %v1304
        %1648 = vmatmul.mubr.bf16.gmra.mrb[0].mxu0 %v1303
        %v1649 = vpop.f32.mrb[0].mxu0
        %v1650 = vadd.f32 %v1365, %v1649
        %v1651 = vpop.f32.mrb[0].mxu0
        %v1652 = vpop.f32.mrb[0].mxu0
        %v1653 = vadd.f32 %v1365, %v1652
        %v1654 = vpop.f32.mrb[0].mxu0
        %1655 = vmatprep.mubr.bf16.mxu0 %v1307
        %1656 = vmatmul.mubr.bf16.gmra.mrb[0].mxu0 %v1306
        %v1657 = vpop.f32.mrb[0].mxu0
        %v1658 = vadd.f32 %v1365, %v1657
        %v1659 = vpop.f32.mrb[0].mxu0
        %v1660 = vpop.f32.mrb[0].mxu0
        %v1661 = vadd.f32 %v1365, %v1660
        %v1662 = vpop.f32.mrb[0].mxu0
        %1663 = vmatprep.mubr.bf16.mxu0 %v1310
        %1664 = vmatmul.mubr.bf16.gmra.mrb[0].mxu0 %v1309
        %v1665 = vpop.f32.mrb[0].mxu0
        %v1666 = vadd.f32 %v1365, %v1665
        %v1667 = vpop.f32.mrb[0].mxu0
        %v1668 = vpop.f32.mrb[0].mxu0
        %v1669 = vadd.f32 %v1365, %v1668
        %v1670 = vpop.f32.mrb[0].mxu0
        %1671 = vdwg.mxu0
        %1672 = vmatprep.subr.bf16.mxu0 0
        %1673 = vmatpush1.bf16.msra.mxu0 %v1479
        %1674 = vmatprep.subr.bf16.mxu0 0
        %1675 = vmatpush1.bf16.msra.mxu0 %v1480
        %1676 = vmatprep.subr.bf16.mxu0 0
        %1677 = vmatpush1.bf16.msra.mxu0 %v1481
        %1678 = vmatprep.subr.bf16.mxu0 0
        %1679 = vmatpush1.bf16.msra.mxu0 %v1482
        %1680 = vmatprep.subr.bf16.mxu0 0
        %1681 = vmatpush1.bf16.msra.mxu0 %v1483
        %1682 = vmatprep.subr.bf16.mxu0 0
        %1683 = vmatpush1.bf16.msra.mxu0 %v1484
        %1684 = vmatprep.subr.bf16.mxu0 0
        %1685 = vmatpush1.bf16.msra.mxu0 %v1485
        %1686 = vmatprep.subr.bf16.mxu0 0
        %1687 = vmatpush1.bf16.msra.mxu0 %v1486
        %1688 = vmatprep.subr.bf16.mxu0 0
        %1689 = vmatpush1.bf16.msra.mxu0 0
        %1690 = vmatprep.subr.bf16.mxu0 0
        %1691 = vmatpush1.bf16.msra.mxu0 0
        %1692 = vmatprep.subr.bf16.mxu0 0
        %1693 = vmatpush1.bf16.msra.mxu0 0
        %1694 = vmatprep.subr.bf16.mxu0 0
        %1695 = vmatpush1.bf16.msra.mxu0 0
        %1696 = vmatprep.subr.bf16.mxu0 0
        %1697 = vmatpush1.bf16.msra.mxu0 0
        %1698 = vmatprep.subr.bf16.mxu0 0
        %1699 = vmatpush1.bf16.msra.mxu0 0
        %1700 = vmatprep.subr.bf16.mxu0 0
        %1701 = vmatpush1.bf16.msra.mxu0 0
        %1702 = vmatprep.subr.bf16.mxu0 0
        %1703 = vmatpush1.bf16.msra.mxu0 0
        %1704 = vmatprep.mubr.bf16.mxu0 0
        %1705 = vmatmul.mubr.bf16.gmra.mrb[0].mxu0 %v1266
        %v1706 = vpop.f32.mrb[0].mxu0
        %v1707 = vadd.f32 %v1546, %v1706
        %v1708 = vpop.f32.mrb[0].mxu0
        %v1709 = vpop.f32.mrb[0].mxu0
        %v1710 = vadd.f32 %v1549, %v1709
        %v1711 = vpop.f32.mrb[0].mxu0
        %1712 = vmatprep.mubr.bf16.mxu0 0
        %1713 = vmatmul.mubr.bf16.gmra.mrb[0].mxu0 %v1269
        %v1714 = vpop.f32.mrb[0].mxu0
        %v1715 = vadd.f32 %v1554, %v1714
        %v1716 = vpop.f32.mrb[0].mxu0
        %v1717 = vpop.f32.mrb[0].mxu0
        %v1718 = vadd.f32 %v1557, %v1717
        %v1719 = vpop.f32.mrb[0].mxu0
        %1720 = vmatprep.mubr.bf16.mxu0 0
        %1721 = vmatmul.mubr.bf16.gmra.mrb[0].mxu0 %v1272
        %v1722 = vpop.f32.mrb[0].mxu0
        %v1723 = vadd.f32 %v1562, %v1722
        %v1724 = vpop.f32.mrb[0].mxu0
        %v1725 = vpop.f32.mrb[0].mxu0
        %v1726 = vadd.f32 %v1565, %v1725
        %v1727 = vpop.f32.mrb[0].mxu0
        %1728 = vmatprep.mubr.bf16.mxu0 0
        %1729 = vmatmul.mubr.bf16.gmra.mrb[0].mxu0 %v1275
        %v1730 = vpop.f32.mrb[0].mxu0
        %v1731 = vadd.f32 %v1570, %v1730
        %v1732 = vpop.f32.mrb[0].mxu0
        %v1733 = vpop.f32.mrb[0].mxu0
        %v1734 = vadd.f32 %v1573, %v1733
        %v1735 = vpop.f32.mrb[0].mxu0
        %1736 = vmatprep.mubr.bf16.mxu0 0
        %1737 = vmatmul.mubr.bf16.gmra.mrb[0].mxu0 %v1278
        %v1738 = vpop.f32.mrb[0].mxu0
        %v1739 = vadd.f32 %v1578, %v1738
        %v1740 = vpop.f32.mrb[0].mxu0
        %v1741 = vpop.f32.mrb[0].mxu0
        %v1742 = vadd.f32 %v1581, %v1741
        %v1743 = vpop.f32.mrb[0].mxu0
        %1744 = vmatprep.mubr.bf16.mxu0 0
        %1745 = vmatmul.mubr.bf16.gmra.mrb[0].mxu0 %v1281
        %v1746 = vpop.f32.mrb[0].mxu0
        %v1747 = vadd.f32 %v1586, %v1746
        %v1748 = vpop.f32.mrb[0].mxu0
        %v1749 = vpop.f32.mrb[0].mxu0
        %v1750 = vadd.f32 %v1589, %v1749
        %v1751 = vpop.f32.mrb[0].mxu0
        %1752 = vmatprep.mubr.bf16.mxu0 0
        %1753 = vmatmul.mubr.bf16.gmra.mrb[0].mxu0 %v1284
        %v1754 = vpop.f32.mrb[0].mxu0
        %v1755 = vadd.f32 %v1594, %v1754
        %v1756 = vpop.f32.mrb[0].mxu0
        %v1757 = vpop.f32.mrb[0].mxu0
        %v1758 = vadd.f32 %v1597, %v1757
        %v1759 = vpop.f32.mrb[0].mxu0
        %1760 = vmatprep.mubr.bf16.mxu0 0
        %1761 = vmatmul.mubr.bf16.gmra.mrb[0].mxu0 %v1287
        %v1762 = vpop.f32.mrb[0].mxu0
        %v1763 = vadd.f32 %v1602, %v1762
        %v1764 = vpop.f32.mrb[0].mxu0
        %v1765 = vpop.f32.mrb[0].mxu0
        %v1766 = vadd.f32 %v1605, %v1765
        %v1767 = vpop.f32.mrb[0].mxu0
        %1768 = vmatprep.mubr.bf16.mxu0 0
        %1769 = vmatmul.mubr.bf16.gmra.mrb[0].mxu0 %v1290
        %v1770 = vpop.f32.mrb[0].mxu0
        %v1771 = vadd.f32 %v1610, %v1770
        %v1772 = vpop.f32.mrb[0].mxu0
        %v1773 = vpop.f32.mrb[0].mxu0
        %v1774 = vadd.f32 %v1613, %v1773
        %v1775 = vpop.f32.mrb[0].mxu0
        %1776 = vmatprep.mubr.bf16.mxu0 0
        %1777 = vmatmul.mubr.bf16.gmra.mrb[0].mxu0 %v1293
        %v1778 = vpop.f32.mrb[0].mxu0
        %v1779 = vadd.f32 %v1618, %v1778
        %v1780 = vpop.f32.mrb[0].mxu0
        %v1781 = vpop.f32.mrb[0].mxu0
        %v1782 = vadd.f32 %v1621, %v1781
        %v1783 = vpop.f32.mrb[0].mxu0
        %1784 = vmatprep.mubr.bf16.mxu0 0
        %1785 = vmatmul.mubr.bf16.gmra.mrb[0].mxu0 %v1296
        %v1786 = vpop.f32.mrb[0].mxu0
        %v1787 = vadd.f32 %v1626, %v1786
        %v1788 = vpop.f32.mrb[0].mxu0
        %v1789 = vpop.f32.mrb[0].mxu0
        %v1790 = vadd.f32 %v1629, %v1789
        %v1791 = vpop.f32.mrb[0].mxu0
        %1792 = vmatprep.mubr.bf16.mxu0 0
        %1793 = vmatmul.mubr.bf16.gmra.mrb[0].mxu0 %v1299
        %v1794 = vpop.f32.mrb[0].mxu0
        %v1795 = vadd.f32 %v1634, %v1794
        %v1796 = vpop.f32.mrb[0].mxu0
        %v1797 = vpop.f32.mrb[0].mxu0
        %v1798 = vadd.f32 %v1637, %v1797
        %v1799 = vpop.f32.mrb[0].mxu0
        %1800 = vmatprep.mubr.bf16.mxu0 0
        %1801 = vmatmul.mubr.bf16.gmra.mrb[0].mxu0 %v1302
        %v1802 = vpop.f32.mrb[0].mxu0
        %v1803 = vadd.f32 %v1642, %v1802
        %v1804 = vpop.f32.mrb[0].mxu0
        %v1805 = vpop.f32.mrb[0].mxu0
        %v1806 = vadd.f32 %v1645, %v1805
        %v1807 = vpop.f32.mrb[0].mxu0
        %1808 = vmatprep.mubr.bf16.mxu0 0
        %1809 = vmatmul.mubr.bf16.gmra.mrb[0].mxu0 %v1305
        %v1810 = vpop.f32.mrb[0].mxu0
        %v1811 = vadd.f32 %v1650, %v1810
        %v1812 = vpop.f32.mrb[0].mxu0
        %v1813 = vpop.f32.mrb[0].mxu0
        %v1814 = vadd.f32 %v1653, %v1813
        %v1815 = vpop.f32.mrb[0].mxu0
        %1816 = vmatprep.mubr.bf16.mxu0 0
        %1817 = vmatmul.mubr.bf16.gmra.mrb[0].mxu0 %v1308
        %v1818 = vpop.f32.mrb[0].mxu0
        %v1819 = vadd.f32 %v1658, %v1818
        %v1820 = vpop.f32.mrb[0].mxu0
        %v1821 = vpop.f32.mrb[0].mxu0
        %v1822 = vadd.f32 %v1661, %v1821
        %v1823 = vpop.f32.mrb[0].mxu0
        %1824 = vmatprep.mubr.bf16.mxu0 0
        %1825 = vmatmul.mubr.bf16.gmra.mrb[0].mxu0 %v1311
        %v1826 = vpop.f32.mrb[0].mxu0
        %v1827 = vadd.f32 %v1666, %v1826
        %v1828 = vpop.f32.mrb[0].mxu0
        %v1829 = vpop.f32.mrb[0].mxu0
        %v1830 = vadd.f32 %v1669, %v1829
        %v1831 = vpop.f32.mrb[0].mxu0
        %1832 = vdwg.mxu0
        %v1833 = vmax.f32 %v1707, 0.0
        %v1834 = vmax.f32 %v1710, 0.0
        %v1835 = vmax.f32 %v1715, 0.0
        %v1836 = vmax.f32 %v1718, 0.0
        %v1837 = vmax.f32 %v1723, 0.0
        %v1838 = vmax.f32 %v1726, 0.0
        %v1839 = vmax.f32 %v1731, 0.0
        %v1840 = vmax.f32 %v1734, 0.0
        %v1841 = vmax.f32 %v1739, 0.0
        %v1842 = vmax.f32 %v1742, 0.0
        %v1843 = vmax.f32 %v1747, 0.0
        %v1844 = vmax.f32 %v1750, 0.0
        %v1845 = vmax.f32 %v1755, 0.0
        %v1846 = vmax.f32 %v1758, 0.0
        %v1847 = vmax.f32 %v1763, 0.0
        %v1848 = vmax.f32 %v1766, 0.0
        %v1849 = vmax.f32 %v1771, 0.0
        %v1850 = vmax.f32 %v1774, 0.0
        %v1851 = vmax.f32 %v1779, 0.0
        %v1852 = vmax.f32 %v1782, 0.0
        %v1853 = vmax.f32 %v1787, 0.0
        %v1854 = vmax.f32 %v1790, 0.0
        %v1855 = vmax.f32 %v1795, 0.0
        %v1856 = vmax.f32 %v1798, 0.0
        %v1857 = vmax.f32 %v1803, 0.0
        %v1858 = vmax.f32 %v1806, 0.0
        %v1859 = vmax.f32 %v1811, 0.0
        %v1860 = vmax.f32 %v1814, 0.0
        %v1861 = vmax.f32 %v1819, 0.0
        %v1862 = vmax.f32 %v1822, 0.0
        %v1863 = vmax.f32 %v1827, 0.0
        %v1864 = vmax.f32 %v1830, 0.0
        %v1865 = vsel %vm1166, %v1836, -inf
        %v1866 = vmax.f32 %v1833, %v1834
        %v1867 = vmax.f32 %v1835, %v1865
        %v1868 = vmax.f32 %v1866, %v1867
        %v1869 = vrot.slane %v1868, 4
        %v1870 = vmax.f32 %v1868, %v1869
        %v1871 = vrot.slane %v1870, 2
        %v1872 = vmax.f32 %v1870, %v1871
        %v1873 = vrot.slane %v1872, 1
        %v1874 = vmax.f32 %v1872, %v1873
        %v1875 = vsel %vm1166, %v1840, -inf
        %v1876 = vmax.f32 %v1837, %v1838
        %v1877 = vmax.f32 %v1839, %v1875
        %v1878 = vmax.f32 %v1876, %v1877
        %v1879 = vrot.slane %v1878, 4
        %v1880 = vmax.f32 %v1878, %v1879
        %v1881 = vrot.slane %v1880, 2
        %v1882 = vmax.f32 %v1880, %v1881
        %v1883 = vrot.slane %v1882, 1
        %v1884 = vmax.f32 %v1882, %v1883
        %v1885 = vsel %vm1166, %v1844, -inf
        %v1886 = vmax.f32 %v1841, %v1842
        %v1887 = vmax.f32 %v1843, %v1885
        %v1888 = vmax.f32 %v1886, %v1887
        %v1889 = vrot.slane %v1888, 4
        %v1890 = vmax.f32 %v1888, %v1889
        %v1891 = vrot.slane %v1890, 2
        %v1892 = vmax.f32 %v1890, %v1891
        %v1893 = vrot.slane %v1892, 1
        %v1894 = vmax.f32 %v1892, %v1893
        %v1895 = vsel %vm1166, %v1848, -inf
        %v1896 = vmax.f32 %v1845, %v1846
        %v1897 = vmax.f32 %v1847, %v1895
        %v1898 = vmax.f32 %v1896, %v1897
        %v1899 = vrot.slane %v1898, 4
        %v1900 = vmax.f32 %v1898, %v1899
        %v1901 = vrot.slane %v1900, 2
        %v1902 = vmax.f32 %v1900, %v1901
        %v1903 = vrot.slane %v1902, 1
        %v1904 = vmax.f32 %v1902, %v1903
        %v1905 = vsel %vm1166, %v1852, -inf
        %v1906 = vmax.f32 %v1849, %v1850
        %v1907 = vmax.f32 %v1851, %v1905
        %v1908 = vmax.f32 %v1906, %v1907
        %v1909 = vrot.slane %v1908, 4
        %v1910 = vmax.f32 %v1908, %v1909
        %v1911 = vrot.slane %v1910, 2
        %v1912 = vmax.f32 %v1910, %v1911
        %v1913 = vrot.slane %v1912, 1
        %v1914 = vmax.f32 %v1912, %v1913
        %v1915 = vsel %vm1166, %v1856, -inf
        %v1916 = vmax.f32 %v1853, %v1854
        %v1917 = vmax.f32 %v1855, %v1915
        %v1918 = vmax.f32 %v1916, %v1917
        %v1919 = vrot.slane %v1918, 4
        %v1920 = vmax.f32 %v1918, %v1919
        %v1921 = vrot.slane %v1920, 2
        %v1922 = vmax.f32 %v1920, %v1921
        %v1923 = vrot.slane %v1922, 1
        %v1924 = vmax.f32 %v1922, %v1923
        %v1925 = vsel %vm1166, %v1860, -inf
        %v1926 = vmax.f32 %v1857, %v1858
        %v1927 = vmax.f32 %v1859, %v1925
        %v1928 = vmax.f32 %v1926, %v1927
        %v1929 = vrot.slane %v1928, 4
        %v1930 = vmax.f32 %v1928, %v1929
        %v1931 = vrot.slane %v1930, 2
        %v1932 = vmax.f32 %v1930, %v1931
        %v1933 = vrot.slane %v1932, 1
        %v1934 = vmax.f32 %v1932, %v1933
        %v1935 = vsel %vm1166, %v1864, -inf
        %v1936 = vmax.f32 %v1861, %v1862
        %v1937 = vmax.f32 %v1863, %v1935
        %v1938 = vmax.f32 %v1936, %v1937
        %v1939 = vrot.slane %v1938, 4
        %v1940 = vmax.f32 %v1938, %v1939
        %v1941 = vrot.slane %v1940, 2
        %v1942 = vmax.f32 %v1940, %v1941
        %v1943 = vrot.slane %v1942, 1
        %v1944 = vmax.f32 %v1942, %v1943
        %vm1945 = vcmask 1040384
        %v1946 = vsel %vm1945, %v1874, %v1884
        %vm1947 = vcmask 1041408
        %v1948 = vsel %vm1947, %v1946, %v1894
        %vm1949 = vcmask 1042432
        %v1950 = vsel %vm1949, %v1948, %v1904
        %vm1951 = vcmask 1043456
        %v1952 = vsel %vm1951, %v1950, %v1914
        %v1953 = vsel %vm870, %v1952, %v1924
        %v1954 = vsel %vm1166, %v1953, %v1934
        %v1955 = vsel %vm1068, %v1954, %v1944
        %v1956 = vld [vmem:[%s4] sm:$0xf]
        %v1957 = vld [vmem:[%s4 + $0x4] sm:$0xf]
        %v1958 = vld [vmem:[%s4 + $0x8] sm:$0xf]
        %v1959 = vld [vmem:[%s4 + $0xc] sm:$0xf]
        %v1960 = vld [vmem:[%s4 + $0x10] sm:$0xf]
        %v1961 = vld [vmem:[%s4 + $0x14] sm:$0xf]
        %v1962 = vld [vmem:[%s4 + $0x18] sm:$0xf]
        %v1963 = vld [vmem:[%s4 + $0x1c] sm:$0xf]
        %v1964 = vld [vmem:[%s4 + $0x20] sm:$0xf]
        %v1965 = vld [vmem:[%s4 + $0x24] sm:$0xf]
        %v1966 = vld [vmem:[%s4 + $0x28] sm:$0xf]
        %v1967 = vld [vmem:[%s4 + $0x2c] sm:$0xf]
        %v1968 = vld [vmem:[%s4 + $0x30] sm:$0xf]
        %v1969 = vld [vmem:[%s4 + $0x34] sm:$0xf]
        %v1970 = vld [vmem:[%s4 + $0x38] sm:$0xf]
        %v1971 = vld [vmem:[%s4 + $0x3c] sm:$0xf]
        %v1972 = vld [vmem:[%s4 + $0x40] sm:$0xf]
        %v1973 = vld [vmem:[%s4 + $0x44] sm:$0xf]
        %v1974 = vld [vmem:[%s4 + $0x48] sm:$0xf]
        %v1975 = vld [vmem:[%s4 + $0x4c] sm:$0xf]
        %v1976 = vld [vmem:[%s4 + $0x50] sm:$0xf]
        %v1977 = vld [vmem:[%s4 + $0x54] sm:$0xf]
        %v1978 = vld [vmem:[%s4 + $0x58] sm:$0xf]
        %v1979 = vld [vmem:[%s4 + $0x5c] sm:$0xf]
        %v1980 = vld [vmem:[%s4 + $0x60] sm:$0xf]
        %v1981 = vld [vmem:[%s4 + $0x64] sm:$0xf]
        %v1982 = vld [vmem:[%s4 + $0x68] sm:$0xf]
        %v1983 = vld [vmem:[%s4 + $0x6c] sm:$0xf]
        %v1984 = vld [vmem:[%s4 + $0x70] sm:$0xf]
        %v1985 = vld [vmem:[%s4 + $0x74] sm:$0xf]
        %v1986 = vld [vmem:[%s4 + $0x78] sm:$0xf]
        %v1987 = vld [vmem:[%s4 + $0x7c] sm:$0xf]
        %v1988 = vld [vmem:[%s4 + $0x80] sm:$0xf]
        %v1989 = vld [vmem:[%s4 + $0x84] sm:$0xf]
        %v1990 = vld [vmem:[%s4 + $0x88] sm:$0xf]
        %v1991 = vld [vmem:[%s4 + $0x8c] sm:$0xf]
        %v1992 = vld [vmem:[%s4 + $0x90] sm:$0xf]
        %v1993 = vld [vmem:[%s4 + $0x94] sm:$0xf]
        %v1994 = vld [vmem:[%s4 + $0x98] sm:$0xf]
        %v1995 = vld [vmem:[%s4 + $0x9c] sm:$0xf]
        %v1996 = vld [vmem:[%s4 + $0xa0] sm:$0xf]
        %v1997 = vld [vmem:[%s4 + $0xa4] sm:$0xf]
        %v1998 = vld [vmem:[%s4 + $0xa8] sm:$0xf]
        %v1999 = vld [vmem:[%s4 + $0xac] sm:$0xf]
        %v2000 = vld [vmem:[%s4 + $0xb0] sm:$0xf]
        %v2001 = vld [vmem:[%s4 + $0xb4] sm:$0xf]
        %v2002 = vld [vmem:[%s4 + $0xb8] sm:$0xf]
        %v2003 = vld [vmem:[%s4 + $0xbc] sm:$0xf]
        %v2004 = vld [vmem:[%s5] sm:$0x1]
        %v2006 = vlaneseq
        %v2007 = vshrl.u32 %v2006, 7
        %v2008 = vsub.s32 0, %v2007
        %v2009 = vrot.slane %v2004, %v2008
        %v2059 = vunpack.c.l.b16 %v1956
        %v2060 = vunpack.c.l.b16 %v1957
        %v2061 = vunpack.c.l.b16 %v1958
        %v2062 = vunpack.c.l.b16 %v1959
        %v2063 = vunpack.c.l.b16 %v1960
        %v2064 = vunpack.c.l.b16 %v1961
        %v2065 = vunpack.c.l.b16 %v1962
        %v2066 = vunpack.c.l.b16 %v1963
        %v2067 = vunpack.c.l.b16 %v1964
        %v2068 = vunpack.c.l.b16 %v1965
        %v2069 = vunpack.c.l.b16 %v1966
        %v2070 = vunpack.c.l.b16 %v1967
        %v2071 = vunpack.c.l.b16 %v1968
        %v2072 = vunpack.c.l.b16 %v1969
        %v2073 = vunpack.c.l.b16 %v1970
        %v2074 = vunpack.c.l.b16 %v1971
        %v2075 = vunpack.c.l.b16 %v1972
        %v2076 = vunpack.c.l.b16 %v1973
        %v2077 = vunpack.c.l.b16 %v1974
        %v2078 = vunpack.c.l.b16 %v1975
        %v2079 = vunpack.c.l.b16 %v1976
        %v2080 = vunpack.c.l.b16 %v1977
        %v2081 = vunpack.c.l.b16 %v1978
        %v2082 = vunpack.c.l.b16 %v1979
        %v2083 = vunpack.c.l.b16 %v1980
        %v2084 = vunpack.c.l.b16 %v1981
        %v2085 = vunpack.c.l.b16 %v1982
        %v2086 = vunpack.c.l.b16 %v1983
        %v2087 = vunpack.c.l.b16 %v1984
        %v2088 = vunpack.c.l.b16 %v1985
        %v2089 = vunpack.c.l.b16 %v1986
        %v2090 = vunpack.c.l.b16 %v1987
        %v2091 = vunpack.c.l.b16 %v1988
        %v2092 = vunpack.c.l.b16 %v1989
        %v2093 = vunpack.c.l.b16 %v1990
        %v2094 = vunpack.c.l.b16 %v1991
        %v2095 = vunpack.c.l.b16 %v1992
        %v2096 = vunpack.c.l.b16 %v1993
        %v2097 = vunpack.c.l.b16 %v1994
        %v2098 = vunpack.c.l.b16 %v1995
        %v2099 = vunpack.c.l.b16 %v1996
        %v2100 = vunpack.c.l.b16 %v1997
        %v2101 = vunpack.c.l.b16 %v1998
        %v2102 = vunpack.c.l.b16 %v1999
        %v2103 = vunpack.c.l.b16 %v2000
        %v2104 = vunpack.c.l.b16 %v2001
        %v2105 = vunpack.c.l.b16 %v2002
        %v2106 = vunpack.c.l.b16 %v2003
        %v2107 = vpack.c.b16 %v2060, %v2059
        %v2108 = vpack.c.b16 %v2062, %v2061
        %v2109 = vpack.c.b16 %v2064, %v2063
        %v2110 = vpack.c.b16 %v2066, %v2065
        %v2111 = vpack.c.b16 %v2068, %v2067
        %v2112 = vpack.c.b16 %v2070, %v2069
        %v2113 = vpack.c.b16 %v2072, %v2071
        %v2114 = vpack.c.b16 %v2074, %v2073
        %v2115 = vpack.c.b16 %v2076, %v2075
        %v2116 = vpack.c.b16 %v2078, %v2077
        %v2117 = vpack.c.b16 %v2080, %v2079
        %v2118 = vpack.c.b16 %v2082, %v2081
        %v2119 = vpack.c.b16 %v2084, %v2083
        %v2120 = vpack.c.b16 %v2086, %v2085
        %v2121 = vpack.c.b16 %v2088, %v2087
        %v2122 = vpack.c.b16 %v2090, %v2089
        %v2123 = vpack.c.b16 %v2092, %v2091
        %v2124 = vpack.c.b16 %v2094, %v2093
        %v2125 = vpack.c.b16 %v2096, %v2095
        %v2126 = vpack.c.b16 %v2098, %v2097
        %v2127 = vpack.c.b16 %v2100, %v2099
        %v2128 = vpack.c.b16 %v2102, %v2101
        %v2129 = vpack.c.b16 %v2104, %v2103
        %v2130 = vpack.c.b16 %v2106, %v2105
        %2155 = vmatprep.subr.bf16.mxu0 0
        %2156 = vmatpush1.bf16.msra.mxu0 %v2107
        %2157 = vmatprep.subr.bf16.mxu0 0
        %2158 = vmatpush1.bf16.msra.mxu0 %v2108
        %2159 = vmatprep.subr.bf16.mxu0 0
        %2160 = vmatpush1.bf16.msra.mxu0 %v2109
        %2161 = vmatprep.subr.bf16.mxu0 0
        %2162 = vmatpush1.bf16.msra.mxu0 %v2110
        %2163 = vmatprep.subr.bf16.mxu0 0
        %2164 = vmatpush1.bf16.msra.mxu0 %v2111
        %2165 = vmatprep.subr.bf16.mxu0 0
        %2166 = vmatpush1.bf16.msra.mxu0 %v2112
        %2167 = vmatprep.subr.bf16.mxu0 0
        %2168 = vmatpush1.bf16.msra.mxu0 %v2113
        %2169 = vmatprep.subr.bf16.mxu0 0
        %2170 = vmatpush1.bf16.msra.mxu0 %v2114
        %2171 = vmatprep.subr.bf16.mxu0 0
        %2172 = vmatpush1.bf16.msra.mxu0 %v2115
        %2173 = vmatprep.subr.bf16.mxu0 0
        %2174 = vmatpush1.bf16.msra.mxu0 %v2116
        %2175 = vmatprep.subr.bf16.mxu0 0
        %2176 = vmatpush1.bf16.msra.mxu0 %v2117
        %2177 = vmatprep.subr.bf16.mxu0 0
        %2178 = vmatpush1.bf16.msra.mxu0 %v2118
        %2179 = vmatprep.subr.bf16.mxu0 0
        %2180 = vmatpush1.bf16.msra.mxu0 %v2119
        %2181 = vmatprep.subr.bf16.mxu0 0
        %2182 = vmatpush1.bf16.msra.mxu0 %v2120
        %2183 = vmatprep.subr.bf16.mxu0 0
        %2184 = vmatpush1.bf16.msra.mxu0 %v2121
        %2185 = vmatprep.subr.bf16.mxu0 0
        %2186 = vmatpush1.bf16.msra.mxu0 %v2122
        %2187 = vmatprep.mubr.bf16.mxu0 %v1265
        %2188 = vmatmul.mubr.bf16.gmra.mrb[0].mxu0 %v1264
        %v2189 = vpop.f32.mrb[0].mxu0
        %v2190 = vadd.f32 %v2009, %v2189
        %v2191 = vpop.f32.mrb[0].mxu0
        %v2192 = vpop.f32.mrb[0].mxu0
        %v2193 = vadd.f32 %v2009, %v2192
        %v2194 = vpop.f32.mrb[0].mxu0
        %2195 = vmatprep.mubr.bf16.mxu0 %v1268
        %2196 = vmatmul.mubr.bf16.gmra.mrb[0].mxu0 %v1267
        %v2197 = vpop.f32.mrb[0].mxu0
        %v2198 = vadd.f32 %v2009, %v2197
        %v2199 = vpop.f32.mrb[0].mxu0
        %v2200 = vpop.f32.mrb[0].mxu0
        %v2201 = vadd.f32 %v2009, %v2200
        %v2202 = vpop.f32.mrb[0].mxu0
        %2203 = vmatprep.mubr.bf16.mxu0 %v1271
        %2204 = vmatmul.mubr.bf16.gmra.mrb[0].mxu0 %v1270
        %v2205 = vpop.f32.mrb[0].mxu0
        %v2206 = vadd.f32 %v2009, %v2205
        %v2207 = vpop.f32.mrb[0].mxu0
        %v2208 = vpop.f32.mrb[0].mxu0
        %v2209 = vadd.f32 %v2009, %v2208
        %v2210 = vpop.f32.mrb[0].mxu0
        %2211 = vmatprep.mubr.bf16.mxu0 %v1274
        %2212 = vmatmul.mubr.bf16.gmra.mrb[0].mxu0 %v1273
        %v2213 = vpop.f32.mrb[0].mxu0
        %v2214 = vadd.f32 %v2009, %v2213
        %v2215 = vpop.f32.mrb[0].mxu0
        %v2216 = vpop.f32.mrb[0].mxu0
        %v2217 = vadd.f32 %v2009, %v2216
        %v2218 = vpop.f32.mrb[0].mxu0
        %2219 = vmatprep.mubr.bf16.mxu0 %v1277
        %2220 = vmatmul.mubr.bf16.gmra.mrb[0].mxu0 %v1276
        %v2221 = vpop.f32.mrb[0].mxu0
        %v2222 = vadd.f32 %v2009, %v2221
        %v2223 = vpop.f32.mrb[0].mxu0
        %v2224 = vpop.f32.mrb[0].mxu0
        %v2225 = vadd.f32 %v2009, %v2224
        %v2226 = vpop.f32.mrb[0].mxu0
        %2227 = vmatprep.mubr.bf16.mxu0 %v1280
        %2228 = vmatmul.mubr.bf16.gmra.mrb[0].mxu0 %v1279
        %v2229 = vpop.f32.mrb[0].mxu0
        %v2230 = vadd.f32 %v2009, %v2229
        %v2231 = vpop.f32.mrb[0].mxu0
        %v2232 = vpop.f32.mrb[0].mxu0
        %v2233 = vadd.f32 %v2009, %v2232
        %v2234 = vpop.f32.mrb[0].mxu0
        %2235 = vmatprep.mubr.bf16.mxu0 %v1283
        %2236 = vmatmul.mubr.bf16.gmra.mrb[0].mxu0 %v1282
        %v2237 = vpop.f32.mrb[0].mxu0
        %v2238 = vadd.f32 %v2009, %v2237
        %v2239 = vpop.f32.mrb[0].mxu0
        %v2240 = vpop.f32.mrb[0].mxu0
        %v2241 = vadd.f32 %v2009, %v2240
        %v2242 = vpop.f32.mrb[0].mxu0
        %2243 = vmatprep.mubr.bf16.mxu0 %v1286
        %2244 = vmatmul.mubr.bf16.gmra.mrb[0].mxu0 %v1285
        %v2245 = vpop.f32.mrb[0].mxu0
        %v2246 = vadd.f32 %v2009, %v2245
        %v2247 = vpop.f32.mrb[0].mxu0
        %v2248 = vpop.f32.mrb[0].mxu0
        %v2249 = vadd.f32 %v2009, %v2248
        %v2250 = vpop.f32.mrb[0].mxu0
        %2251 = vmatprep.mubr.bf16.mxu0 %v1289
        %2252 = vmatmul.mubr.bf16.gmra.mrb[0].mxu0 %v1288
        %v2253 = vpop.f32.mrb[0].mxu0
        %v2254 = vadd.f32 %v2009, %v2253
        %v2255 = vpop.f32.mrb[0].mxu0
        %v2256 = vpop.f32.mrb[0].mxu0
        %v2257 = vadd.f32 %v2009, %v2256
        %v2258 = vpop.f32.mrb[0].mxu0
        %2259 = vmatprep.mubr.bf16.mxu0 %v1292
        %2260 = vmatmul.mubr.bf16.gmra.mrb[0].mxu0 %v1291
        %v2261 = vpop.f32.mrb[0].mxu0
        %v2262 = vadd.f32 %v2009, %v2261
        %v2263 = vpop.f32.mrb[0].mxu0
        %v2264 = vpop.f32.mrb[0].mxu0
        %v2265 = vadd.f32 %v2009, %v2264
        %v2266 = vpop.f32.mrb[0].mxu0
        %2267 = vmatprep.mubr.bf16.mxu0 %v1295
        %2268 = vmatmul.mubr.bf16.gmra.mrb[0].mxu0 %v1294
        %v2269 = vpop.f32.mrb[0].mxu0
        %v2270 = vadd.f32 %v2009, %v2269
        %v2271 = vpop.f32.mrb[0].mxu0
        %v2272 = vpop.f32.mrb[0].mxu0
        %v2273 = vadd.f32 %v2009, %v2272
        %v2274 = vpop.f32.mrb[0].mxu0
        %2275 = vmatprep.mubr.bf16.mxu0 %v1298
        %2276 = vmatmul.mubr.bf16.gmra.mrb[0].mxu0 %v1297
        %v2277 = vpop.f32.mrb[0].mxu0
        %v2278 = vadd.f32 %v2009, %v2277
        %v2279 = vpop.f32.mrb[0].mxu0
        %v2280 = vpop.f32.mrb[0].mxu0
        %v2281 = vadd.f32 %v2009, %v2280
        %v2282 = vpop.f32.mrb[0].mxu0
        %2283 = vmatprep.mubr.bf16.mxu0 %v1301
        %2284 = vmatmul.mubr.bf16.gmra.mrb[0].mxu0 %v1300
        %v2285 = vpop.f32.mrb[0].mxu0
        %v2286 = vadd.f32 %v2009, %v2285
        %v2287 = vpop.f32.mrb[0].mxu0
        %v2288 = vpop.f32.mrb[0].mxu0
        %v2289 = vadd.f32 %v2009, %v2288
        %v2290 = vpop.f32.mrb[0].mxu0
        %2291 = vmatprep.mubr.bf16.mxu0 %v1304
        %2292 = vmatmul.mubr.bf16.gmra.mrb[0].mxu0 %v1303
        %v2293 = vpop.f32.mrb[0].mxu0
        %v2294 = vadd.f32 %v2009, %v2293
        %v2295 = vpop.f32.mrb[0].mxu0
        %v2296 = vpop.f32.mrb[0].mxu0
        %v2297 = vadd.f32 %v2009, %v2296
        %v2298 = vpop.f32.mrb[0].mxu0
        %2299 = vmatprep.mubr.bf16.mxu0 %v1307
        %2300 = vmatmul.mubr.bf16.gmra.mrb[0].mxu0 %v1306
        %v2301 = vpop.f32.mrb[0].mxu0
        %v2302 = vadd.f32 %v2009, %v2301
        %v2303 = vpop.f32.mrb[0].mxu0
        %v2304 = vpop.f32.mrb[0].mxu0
        %v2305 = vadd.f32 %v2009, %v2304
        %v2306 = vpop.f32.mrb[0].mxu0
        %2307 = vmatprep.mubr.bf16.mxu0 %v1310
        %2308 = vmatmul.mubr.bf16.gmra.mrb[0].mxu0 %v1309
        %v2309 = vpop.f32.mrb[0].mxu0
        %v2310 = vadd.f32 %v2009, %v2309
        %v2311 = vpop.f32.mrb[0].mxu0
        %v2312 = vpop.f32.mrb[0].mxu0
        %v2313 = vadd.f32 %v2009, %v2312
        %v2314 = vpop.f32.mrb[0].mxu0
        %2315 = vdwg.mxu0
        %2316 = vmatprep.subr.bf16.mxu0 0
        %2317 = vmatpush1.bf16.msra.mxu0 %v2123
        %2318 = vmatprep.subr.bf16.mxu0 0
        %2319 = vmatpush1.bf16.msra.mxu0 %v2124
        %2320 = vmatprep.subr.bf16.mxu0 0
        %2321 = vmatpush1.bf16.msra.mxu0 %v2125
        %2322 = vmatprep.subr.bf16.mxu0 0
        %2323 = vmatpush1.bf16.msra.mxu0 %v2126
        %2324 = vmatprep.subr.bf16.mxu0 0
        %2325 = vmatpush1.bf16.msra.mxu0 %v2127
        %2326 = vmatprep.subr.bf16.mxu0 0
        %2327 = vmatpush1.bf16.msra.mxu0 %v2128
        %2328 = vmatprep.subr.bf16.mxu0 0
        %2329 = vmatpush1.bf16.msra.mxu0 %v2129
        %2330 = vmatprep.subr.bf16.mxu0 0
        %2331 = vmatpush1.bf16.msra.mxu0 %v2130
        %2332 = vmatprep.subr.bf16.mxu0 0
        %2333 = vmatpush1.bf16.msra.mxu0 0
        %2334 = vmatprep.subr.bf16.mxu0 0
        %2335 = vmatpush1.bf16.msra.mxu0 0
        %2336 = vmatprep.subr.bf16.mxu0 0
        %2337 = vmatpush1.bf16.msra.mxu0 0
        %2338 = vmatprep.subr.bf16.mxu0 0
        %2339 = vmatpush1.bf16.msra.mxu0 0
        %2340 = vmatprep.subr.bf16.mxu0 0
        %2341 = vmatpush1.bf16.msra.mxu0 0
        %2342 = vmatprep.subr.bf16.mxu0 0
        %2343 = vmatpush1.bf16.msra.mxu0 0
        %2344 = vmatprep.subr.bf16.mxu0 0
        %2345 = vmatpush1.bf16.msra.mxu0 0
        %2346 = vmatprep.subr.bf16.mxu0 0
        %2347 = vmatpush1.bf16.msra.mxu0 0
        %2348 = vmatprep.mubr.bf16.mxu0 0
        %2349 = vmatmul.mubr.bf16.gmra.mrb[0].mxu0 %v1266
        %v2350 = vpop.f32.mrb[0].mxu0
        %v2351 = vadd.f32 %v2190, %v2350
        %v2352 = vpop.f32.mrb[0].mxu0
        %v2353 = vpop.f32.mrb[0].mxu0
        %v2354 = vadd.f32 %v2193, %v2353
        %v2355 = vpop.f32.mrb[0].mxu0
        %2356 = vmatprep.mubr.bf16.mxu0 0
        %2357 = vmatmul.mubr.bf16.gmra.mrb[0].mxu0 %v1269
        %v2358 = vpop.f32.mrb[0].mxu0
        %v2359 = vadd.f32 %v2198, %v2358
        %v2360 = vpop.f32.mrb[0].mxu0
        %v2361 = vpop.f32.mrb[0].mxu0
        %v2362 = vadd.f32 %v2201, %v2361
        %v2363 = vpop.f32.mrb[0].mxu0
        %2364 = vmatprep.mubr.bf16.mxu0 0
        %2365 = vmatmul.mubr.bf16.gmra.mrb[0].mxu0 %v1272
        %v2366 = vpop.f32.mrb[0].mxu0
        %v2367 = vadd.f32 %v2206, %v2366
        %v2368 = vpop.f32.mrb[0].mxu0
        %v2369 = vpop.f32.mrb[0].mxu0
        %v2370 = vadd.f32 %v2209, %v2369
        %v2371 = vpop.f32.mrb[0].mxu0
        %2372 = vmatprep.mubr.bf16.mxu0 0
        %2373 = vmatmul.mubr.bf16.gmra.mrb[0].mxu0 %v1275
        %v2374 = vpop.f32.mrb[0].mxu0
        %v2375 = vadd.f32 %v2214, %v2374
        %v2376 = vpop.f32.mrb[0].mxu0
        %v2377 = vpop.f32.mrb[0].mxu0
        %v2378 = vadd.f32 %v2217, %v2377
        %v2379 = vpop.f32.mrb[0].mxu0
        %2380 = vmatprep.mubr.bf16.mxu0 0
        %2381 = vmatmul.mubr.bf16.gmra.mrb[0].mxu0 %v1278
        %v2382 = vpop.f32.mrb[0].mxu0
        %v2383 = vadd.f32 %v2222, %v2382
        %v2384 = vpop.f32.mrb[0].mxu0
        %v2385 = vpop.f32.mrb[0].mxu0
        %v2386 = vadd.f32 %v2225, %v2385
        %v2387 = vpop.f32.mrb[0].mxu0
        %2388 = vmatprep.mubr.bf16.mxu0 0
        %2389 = vmatmul.mubr.bf16.gmra.mrb[0].mxu0 %v1281
        %v2390 = vpop.f32.mrb[0].mxu0
        %v2391 = vadd.f32 %v2230, %v2390
        %v2392 = vpop.f32.mrb[0].mxu0
        %v2393 = vpop.f32.mrb[0].mxu0
        %v2394 = vadd.f32 %v2233, %v2393
        %v2395 = vpop.f32.mrb[0].mxu0
        %2396 = vmatprep.mubr.bf16.mxu0 0
        %2397 = vmatmul.mubr.bf16.gmra.mrb[0].mxu0 %v1284
        %v2398 = vpop.f32.mrb[0].mxu0
        %v2399 = vadd.f32 %v2238, %v2398
        %v2400 = vpop.f32.mrb[0].mxu0
        %v2401 = vpop.f32.mrb[0].mxu0
        %v2402 = vadd.f32 %v2241, %v2401
        %v2403 = vpop.f32.mrb[0].mxu0
        %2404 = vmatprep.mubr.bf16.mxu0 0
        %2405 = vmatmul.mubr.bf16.gmra.mrb[0].mxu0 %v1287
        %v2406 = vpop.f32.mrb[0].mxu0
        %v2407 = vadd.f32 %v2246, %v2406
        %v2408 = vpop.f32.mrb[0].mxu0
        %v2409 = vpop.f32.mrb[0].mxu0
        %v2410 = vadd.f32 %v2249, %v2409
        %v2411 = vpop.f32.mrb[0].mxu0
        %2412 = vmatprep.mubr.bf16.mxu0 0
        %2413 = vmatmul.mubr.bf16.gmra.mrb[0].mxu0 %v1290
        %v2414 = vpop.f32.mrb[0].mxu0
        %v2415 = vadd.f32 %v2254, %v2414
        %v2416 = vpop.f32.mrb[0].mxu0
        %v2417 = vpop.f32.mrb[0].mxu0
        %v2418 = vadd.f32 %v2257, %v2417
        %v2419 = vpop.f32.mrb[0].mxu0
        %2420 = vmatprep.mubr.bf16.mxu0 0
        %2421 = vmatmul.mubr.bf16.gmra.mrb[0].mxu0 %v1293
        %v2422 = vpop.f32.mrb[0].mxu0
        %v2423 = vadd.f32 %v2262, %v2422
        %v2424 = vpop.f32.mrb[0].mxu0
        %v2425 = vpop.f32.mrb[0].mxu0
        %v2426 = vadd.f32 %v2265, %v2425
        %v2427 = vpop.f32.mrb[0].mxu0
        %2428 = vmatprep.mubr.bf16.mxu0 0
        %2429 = vmatmul.mubr.bf16.gmra.mrb[0].mxu0 %v1296
        %v2430 = vpop.f32.mrb[0].mxu0
        %v2431 = vadd.f32 %v2270, %v2430
        %v2432 = vpop.f32.mrb[0].mxu0
        %v2433 = vpop.f32.mrb[0].mxu0
        %v2434 = vadd.f32 %v2273, %v2433
        %v2435 = vpop.f32.mrb[0].mxu0
        %2436 = vmatprep.mubr.bf16.mxu0 0
        %2437 = vmatmul.mubr.bf16.gmra.mrb[0].mxu0 %v1299
        %v2438 = vpop.f32.mrb[0].mxu0
        %v2439 = vadd.f32 %v2278, %v2438
        %v2440 = vpop.f32.mrb[0].mxu0
        %v2441 = vpop.f32.mrb[0].mxu0
        %v2442 = vadd.f32 %v2281, %v2441
        %v2443 = vpop.f32.mrb[0].mxu0
        %2444 = vmatprep.mubr.bf16.mxu0 0
        %2445 = vmatmul.mubr.bf16.gmra.mrb[0].mxu0 %v1302
        %v2446 = vpop.f32.mrb[0].mxu0
        %v2447 = vadd.f32 %v2286, %v2446
        %v2448 = vpop.f32.mrb[0].mxu0
        %v2449 = vpop.f32.mrb[0].mxu0
        %v2450 = vadd.f32 %v2289, %v2449
        %v2451 = vpop.f32.mrb[0].mxu0
        %2452 = vmatprep.mubr.bf16.mxu0 0
        %2453 = vmatmul.mubr.bf16.gmra.mrb[0].mxu0 %v1305
        %v2454 = vpop.f32.mrb[0].mxu0
        %v2455 = vadd.f32 %v2294, %v2454
        %v2456 = vpop.f32.mrb[0].mxu0
        %v2457 = vpop.f32.mrb[0].mxu0
        %v2458 = vadd.f32 %v2297, %v2457
        %v2459 = vpop.f32.mrb[0].mxu0
        %2460 = vmatprep.mubr.bf16.mxu0 0
        %2461 = vmatmul.mubr.bf16.gmra.mrb[0].mxu0 %v1308
        %v2462 = vpop.f32.mrb[0].mxu0
        %v2463 = vadd.f32 %v2302, %v2462
        %v2464 = vpop.f32.mrb[0].mxu0
        %v2465 = vpop.f32.mrb[0].mxu0
        %v2466 = vadd.f32 %v2305, %v2465
        %v2467 = vpop.f32.mrb[0].mxu0
        %2468 = vmatprep.mubr.bf16.mxu0 0
        %2469 = vmatmul.mubr.bf16.gmra.mrb[0].mxu0 %v1311
        %v2470 = vpop.f32.mrb[0].mxu0
        %v2471 = vadd.f32 %v2310, %v2470
        %v2472 = vpop.f32.mrb[0].mxu0
        %v2473 = vpop.f32.mrb[0].mxu0
        %v2474 = vadd.f32 %v2313, %v2473
        %v2475 = vpop.f32.mrb[0].mxu0
        %2476 = vdwg.mxu0
        %v2477 = vmax.f32 %v2351, 0.0
        %v2478 = vmax.f32 %v2354, 0.0
        %v2479 = vmax.f32 %v2359, 0.0
        %v2480 = vmax.f32 %v2362, 0.0
        %v2481 = vmax.f32 %v2367, 0.0
        %v2482 = vmax.f32 %v2370, 0.0
        %v2483 = vmax.f32 %v2375, 0.0
        %v2484 = vmax.f32 %v2378, 0.0
        %v2485 = vmax.f32 %v2383, 0.0
        %v2486 = vmax.f32 %v2386, 0.0
        %v2487 = vmax.f32 %v2391, 0.0
        %v2488 = vmax.f32 %v2394, 0.0
        %v2489 = vmax.f32 %v2399, 0.0
        %v2490 = vmax.f32 %v2402, 0.0
        %v2491 = vmax.f32 %v2407, 0.0
        %v2492 = vmax.f32 %v2410, 0.0
        %v2493 = vmax.f32 %v2415, 0.0
        %v2494 = vmax.f32 %v2418, 0.0
        %v2495 = vmax.f32 %v2423, 0.0
        %v2496 = vmax.f32 %v2426, 0.0
        %v2497 = vmax.f32 %v2431, 0.0
        %v2498 = vmax.f32 %v2434, 0.0
        %v2499 = vmax.f32 %v2439, 0.0
        %v2500 = vmax.f32 %v2442, 0.0
        %v2501 = vmax.f32 %v2447, 0.0
        %v2502 = vmax.f32 %v2450, 0.0
        %v2503 = vmax.f32 %v2455, 0.0
        %v2504 = vmax.f32 %v2458, 0.0
        %v2505 = vmax.f32 %v2463, 0.0
        %v2506 = vmax.f32 %v2466, 0.0
        %v2507 = vmax.f32 %v2471, 0.0
        %v2508 = vmax.f32 %v2474, 0.0
        %v2541 = vrot.slane %v2477, 1
        %v2542 = vrot.slane %v2478, 1
        %v2543 = vsel %vm1068, %v2541, %v2542
        %v2544 = vrot.slane %v2479, 1
        %v2545 = vsel %vm1068, %v2542, %v2544
        %v2546 = vrot.slane %v2480, 1
        %v2547 = vsel %vm1068, %v2544, %v2546
        %v2548 = vrot.slane %v2481, 1
        %v2549 = vsel %vm1068, %v2546, %v2548
        %v2550 = vrot.slane %v2482, 1
        %v2551 = vsel %vm1068, %v2548, %v2550
        %v2552 = vrot.slane %v2483, 1
        %v2553 = vsel %vm1068, %v2550, %v2552
        %v2554 = vrot.slane %v2484, 1
        %v2555 = vsel %vm1068, %v2552, %v2554
        %v2556 = vrot.slane %v2485, 1
        %v2557 = vsel %vm1068, %v2554, %v2556
        %v2558 = vrot.slane %v2486, 1
        %v2559 = vsel %vm1068, %v2556, %v2558
        %v2560 = vrot.slane %v2487, 1
        %v2561 = vsel %vm1068, %v2558, %v2560
        %v2562 = vrot.slane %v2488, 1
        %v2563 = vsel %vm1068, %v2560, %v2562
        %v2564 = vrot.slane %v2489, 1
        %v2565 = vsel %vm1068, %v2562, %v2564
        %v2566 = vrot.slane %v2490, 1
        %v2567 = vsel %vm1068, %v2564, %v2566
        %v2568 = vrot.slane %v2491, 1
        %v2569 = vsel %vm1068, %v2566, %v2568
        %v2570 = vrot.slane %v2492, 1
        %v2571 = vsel %vm1068, %v2568, %v2570
        %v2572 = vrot.slane %v2493, 1
        %v2573 = vsel %vm1068, %v2570, %v2572
        %v2574 = vrot.slane %v2494, 1
        %v2575 = vsel %vm1068, %v2572, %v2574
        %v2576 = vrot.slane %v2495, 1
        %v2577 = vsel %vm1068, %v2574, %v2576
        %v2578 = vrot.slane %v2496, 1
        %v2579 = vsel %vm1068, %v2576, %v2578
        %v2580 = vrot.slane %v2497, 1
        %v2581 = vsel %vm1068, %v2578, %v2580
        %v2582 = vrot.slane %v2498, 1
        %v2583 = vsel %vm1068, %v2580, %v2582
        %v2584 = vrot.slane %v2499, 1
        %v2585 = vsel %vm1068, %v2582, %v2584
        %v2586 = vrot.slane %v2500, 1
        %v2587 = vsel %vm1068, %v2584, %v2586
        %v2588 = vrot.slane %v2501, 1
        %v2589 = vsel %vm1068, %v2586, %v2588
        %v2590 = vrot.slane %v2502, 1
        %v2591 = vsel %vm1068, %v2588, %v2590
        %v2592 = vrot.slane %v2503, 1
        %v2593 = vsel %vm1068, %v2590, %v2592
        %v2594 = vrot.slane %v2504, 1
        %v2595 = vsel %vm1068, %v2592, %v2594
        %v2596 = vrot.slane %v2505, 1
        %v2597 = vsel %vm1068, %v2594, %v2596
        %v2598 = vrot.slane %v2506, 1
        %v2599 = vsel %vm1068, %v2596, %v2598
        %v2600 = vrot.slane %v2507, 1
        %v2601 = vsel %vm1068, %v2598, %v2600
        %v2602 = vrot.slane %v2508, 1
        %v2603 = vsel %vm1068, %v2600, %v2602
        %v2604 = vsel %vm1068, %v2602, %v1132
        %v2637 = vrot.slane %v2477, 2
        %v2638 = vrot.slane %v2478, 2
        %v2639 = vsel %vm1166, %v2637, %v2638
        %v2640 = vrot.slane %v2479, 2
        %v2641 = vsel %vm1166, %v2638, %v2640
        %v2642 = vrot.slane %v2480, 2
        %v2643 = vsel %vm1166, %v2640, %v2642
        %v2644 = vrot.slane %v2481, 2
        %v2645 = vsel %vm1166, %v2642, %v2644
        %v2646 = vrot.slane %v2482, 2
        %v2647 = vsel %vm1166, %v2644, %v2646
        %v2648 = vrot.slane %v2483, 2
        %v2649 = vsel %vm1166, %v2646, %v2648
        %v2650 = vrot.slane %v2484, 2
        %v2651 = vsel %vm1166, %v2648, %v2650
        %v2652 = vrot.slane %v2485, 2
        %v2653 = vsel %vm1166, %v2650, %v2652
        %v2654 = vrot.slane %v2486, 2
        %v2655 = vsel %vm1166, %v2652, %v2654
        %v2656 = vrot.slane %v2487, 2
        %v2657 = vsel %vm1166, %v2654, %v2656
        %v2658 = vrot.slane %v2488, 2
        %v2659 = vsel %vm1166, %v2656, %v2658
        %v2660 = vrot.slane %v2489, 2
        %v2661 = vsel %vm1166, %v2658, %v2660
        %v2662 = vrot.slane %v2490, 2
        %v2663 = vsel %vm1166, %v2660, %v2662
        %v2664 = vrot.slane %v2491, 2
        %v2665 = vsel %vm1166, %v2662, %v2664
        %v2666 = vrot.slane %v2492, 2
        %v2667 = vsel %vm1166, %v2664, %v2666
        %v2668 = vrot.slane %v2493, 2
        %v2669 = vsel %vm1166, %v2666, %v2668
        %v2670 = vrot.slane %v2494, 2
        %v2671 = vsel %vm1166, %v2668, %v2670
        %v2672 = vrot.slane %v2495, 2
        %v2673 = vsel %vm1166, %v2670, %v2672
        %v2674 = vrot.slane %v2496, 2
        %v2675 = vsel %vm1166, %v2672, %v2674
        %v2676 = vrot.slane %v2497, 2
        %v2677 = vsel %vm1166, %v2674, %v2676
        %v2678 = vrot.slane %v2498, 2
        %v2679 = vsel %vm1166, %v2676, %v2678
        %v2680 = vrot.slane %v2499, 2
        %v2681 = vsel %vm1166, %v2678, %v2680
        %v2682 = vrot.slane %v2500, 2
        %v2683 = vsel %vm1166, %v2680, %v2682
        %v2684 = vrot.slane %v2501, 2
        %v2685 = vsel %vm1166, %v2682, %v2684
        %v2686 = vrot.slane %v2502, 2
        %v2687 = vsel %vm1166, %v2684, %v2686
        %v2688 = vrot.slane %v2503, 2
        %v2689 = vsel %vm1166, %v2686, %v2688
        %v2690 = vrot.slane %v2504, 2
        %v2691 = vsel %vm1166, %v2688, %v2690
        %v2692 = vrot.slane %v2505, 2
        %v2693 = vsel %vm1166, %v2690, %v2692
        %v2694 = vrot.slane %v2506, 2
        %v2695 = vsel %vm1166, %v2692, %v2694
        %v2696 = vrot.slane %v2507, 2
        %v2697 = vsel %vm1166, %v2694, %v2696
        %v2698 = vrot.slane %v2508, 2
        %v2699 = vsel %vm1166, %v2696, %v2698
        %v2700 = vsel %vm1166, %v2698, %v1230
        %v2733 = vpack.c.bf16 %v2478, %v2477
        %v2734 = vpack.c.bf16 %v2545, %v2543
        %v2735 = vpack.c.bf16 %v2641, %v2639
        %v2736 = vpack.c.bf16 %v2480, %v2479
        %v2737 = vpack.c.bf16 %v2549, %v2547
        %v2738 = vpack.c.bf16 %v2645, %v2643
        %v2739 = vpack.c.bf16 %v2482, %v2481
        %v2740 = vpack.c.bf16 %v2553, %v2551
        %v2741 = vpack.c.bf16 %v2649, %v2647
        %v2742 = vpack.c.bf16 %v2484, %v2483
        %v2743 = vpack.c.bf16 %v2557, %v2555
        %v2744 = vpack.c.bf16 %v2653, %v2651
        %v2745 = vpack.c.bf16 %v2486, %v2485
        %v2746 = vpack.c.bf16 %v2561, %v2559
        %v2747 = vpack.c.bf16 %v2657, %v2655
        %v2748 = vpack.c.bf16 %v2488, %v2487
        %v2749 = vpack.c.bf16 %v2565, %v2563
        %v2750 = vpack.c.bf16 %v2661, %v2659
        %v2751 = vpack.c.bf16 %v2490, %v2489
        %v2752 = vpack.c.bf16 %v2569, %v2567
        %v2753 = vpack.c.bf16 %v2665, %v2663
        %v2754 = vpack.c.bf16 %v2492, %v2491
        %v2755 = vpack.c.bf16 %v2573, %v2571
        %v2756 = vpack.c.bf16 %v2669, %v2667
        %v2757 = vpack.c.bf16 %v2494, %v2493
        %v2758 = vpack.c.bf16 %v2577, %v2575
        %v2759 = vpack.c.bf16 %v2673, %v2671
        %v2760 = vpack.c.bf16 %v2496, %v2495
        %v2761 = vpack.c.bf16 %v2581, %v2579
        %v2762 = vpack.c.bf16 %v2677, %v2675
        %v2763 = vpack.c.bf16 %v2498, %v2497
        %v2764 = vpack.c.bf16 %v2585, %v2583
        %v2765 = vpack.c.bf16 %v2681, %v2679
        %v2766 = vpack.c.bf16 %v2500, %v2499
        %v2767 = vpack.c.bf16 %v2589, %v2587
        %v2768 = vpack.c.bf16 %v2685, %v2683
        %v2769 = vpack.c.bf16 %v2502, %v2501
        %v2770 = vpack.c.bf16 %v2593, %v2591
        %v2771 = vpack.c.bf16 %v2689, %v2687
        %v2772 = vpack.c.bf16 %v2504, %v2503
        %v2773 = vpack.c.bf16 %v2597, %v2595
        %v2774 = vpack.c.bf16 %v2693, %v2691
        %v2775 = vpack.c.bf16 %v2506, %v2505
        %v2776 = vpack.c.bf16 %v2601, %v2599
        %v2777 = vpack.c.bf16 %v2697, %v2695
        %v2778 = vpack.c.bf16 %v2508, %v2507
        %v2779 = vpack.c.bf16 %v2604, %v2603
        %v2780 = vpack.c.bf16 %v2700, %v2699
        %v2781 = vld [vmem:[#allocation2] sm:$0xf]
        %v2782 = vld [vmem:[#allocation2 + $0x4] sm:$0xf]
        %v2783 = vld [vmem:[#allocation2 + $0x8] sm:$0xf]
        %v2784 = vld [vmem:[#allocation2 + $0xc] sm:$0xf]
        %v2785 = vld [vmem:[#allocation2 + $0x10] sm:$0xf]
        %v2786 = vld [vmem:[#allocation2 + $0x14] sm:$0xf]
        %v2787 = vld [vmem:[#allocation2 + $0x18] sm:$0xf]
        %v2788 = vld [vmem:[#allocation2 + $0x1c] sm:$0xf]
        %v2789 = vld [vmem:[#allocation2 + $0x20] sm:$0xf]
        %v2790 = vld [vmem:[#allocation2 + $0x24] sm:$0xf]
        %v2791 = vld [vmem:[#allocation2 + $0x28] sm:$0xf]
        %v2792 = vld [vmem:[#allocation2 + $0x2c] sm:$0xf]
        %v2793 = vld [vmem:[#allocation2 + $0x30] sm:$0xf]
        %v2794 = vld [vmem:[#allocation2 + $0x34] sm:$0xf]
        %v2795 = vld [vmem:[#allocation2 + $0x38] sm:$0xf]
        %v2796 = vld [vmem:[#allocation2 + $0x3c] sm:$0xf]
        %v2797 = vld [vmem:[#allocation2 + $0x40] sm:$0xf]
        %v2798 = vld [vmem:[#allocation2 + $0x44] sm:$0xf]
        %v2799 = vld [vmem:[#allocation2 + $0x48] sm:$0xf]
        %v2800 = vld [vmem:[#allocation2 + $0x4c] sm:$0xf]
        %v2801 = vld [vmem:[#allocation2 + $0x50] sm:$0xf]
        %v2802 = vld [vmem:[#allocation2 + $0x54] sm:$0xf]
        %v2803 = vld [vmem:[#allocation2 + $0x58] sm:$0xf]
        %v2804 = vld [vmem:[#allocation2 + $0x5c] sm:$0xf]
        %v2805 = vld [vmem:[#allocation2 + $0x60] sm:$0xf]
        %v2806 = vld [vmem:[#allocation2 + $0x64] sm:$0xf]
        %v2807 = vld [vmem:[#allocation2 + $0x68] sm:$0xf]
        %v2808 = vld [vmem:[#allocation2 + $0x6c] sm:$0xf]
        %v2809 = vld [vmem:[#allocation2 + $0x70] sm:$0xf]
        %v2810 = vld [vmem:[#allocation2 + $0x74] sm:$0xf]
        %v2811 = vld [vmem:[#allocation2 + $0x78] sm:$0xf]
        %v2812 = vld [vmem:[#allocation2 + $0x7c] sm:$0xf]
        %v2813 = vld [vmem:[#allocation2 + $0x80] sm:$0xf]
        %v2814 = vld [vmem:[#allocation2 + $0x84] sm:$0xf]
        %v2815 = vld [vmem:[#allocation2 + $0x88] sm:$0xf]
        %v2816 = vld [vmem:[#allocation2 + $0x8c] sm:$0xf]
        %v2817 = vld [vmem:[#allocation2 + $0x90] sm:$0xf]
        %v2818 = vld [vmem:[#allocation2 + $0x94] sm:$0xf]
        %v2819 = vld [vmem:[#allocation2 + $0x98] sm:$0xf]
        %v2820 = vld [vmem:[#allocation2 + $0x9c] sm:$0xf]
        %v2821 = vld [vmem:[#allocation2 + $0xa0] sm:$0xf]
        %v2822 = vld [vmem:[#allocation2 + $0xa4] sm:$0xf]
        %v2823 = vld [vmem:[#allocation2 + $0xa8] sm:$0xf]
        %v2824 = vld [vmem:[#allocation2 + $0xac] sm:$0xf]
        %v2825 = vld [vmem:[#allocation2 + $0xb0] sm:$0xf]
        %v2826 = vld [vmem:[#allocation2 + $0xb4] sm:$0xf]
        %v2827 = vld [vmem:[#allocation2 + $0xb8] sm:$0xf]
        %v2828 = vld [vmem:[#allocation2 + $0xbc] sm:$0xf]
        %v2829 = vld [vmem:[%s7] sm:$0x1]
        %v2831 = vlaneseq
        %v2832 = vshrl.u32 %v2831, 7
        %v2833 = vsub.s32 0, %v2832
        %v2834 = vrot.slane %v2829, %v2833
        %v2884 = vunpack.c.l.b16 %v2781
        %v2885 = vunpack.c.l.b16 %v2782
        %v2886 = vunpack.c.l.b16 %v2783
        %v2887 = vunpack.c.l.b16 %v2784
        %v2888 = vunpack.c.l.b16 %v2785
        %v2889 = vunpack.c.l.b16 %v2786
        %v2890 = vunpack.c.l.b16 %v2787
        %v2891 = vunpack.c.l.b16 %v2788
        %v2892 = vunpack.c.l.b16 %v2789
        %v2893 = vunpack.c.l.b16 %v2790
        %v2894 = vunpack.c.l.b16 %v2791
        %v2895 = vunpack.c.l.b16 %v2792
        %v2896 = vunpack.c.l.b16 %v2793
        %v2897 = vunpack.c.l.b16 %v2794
        %v2898 = vunpack.c.l.b16 %v2795
        %v2899 = vunpack.c.l.b16 %v2796
        %v2900 = vunpack.c.l.b16 %v2797
        %v2901 = vunpack.c.l.b16 %v2798
        %v2902 = vunpack.c.l.b16 %v2799
        %v2903 = vunpack.c.l.b16 %v2800
        %v2904 = vunpack.c.l.b16 %v2801
        %v2905 = vunpack.c.l.b16 %v2802
        %v2906 = vunpack.c.l.b16 %v2803
        %v2907 = vunpack.c.l.b16 %v2804
        %v2908 = vunpack.c.l.b16 %v2805
        %v2909 = vunpack.c.l.b16 %v2806
        %v2910 = vunpack.c.l.b16 %v2807
        %v2911 = vunpack.c.l.b16 %v2808
        %v2912 = vunpack.c.l.b16 %v2809
        %v2913 = vunpack.c.l.b16 %v2810
        %v2914 = vunpack.c.l.b16 %v2811
        %v2915 = vunpack.c.l.b16 %v2812
        %v2916 = vunpack.c.l.b16 %v2813
        %v2917 = vunpack.c.l.b16 %v2814
        %v2918 = vunpack.c.l.b16 %v2815
        %v2919 = vunpack.c.l.b16 %v2816
        %v2920 = vunpack.c.l.b16 %v2817
        %v2921 = vunpack.c.l.b16 %v2818
        %v2922 = vunpack.c.l.b16 %v2819
        %v2923 = vunpack.c.l.b16 %v2820
        %v2924 = vunpack.c.l.b16 %v2821
        %v2925 = vunpack.c.l.b16 %v2822
        %v2926 = vunpack.c.l.b16 %v2823
        %v2927 = vunpack.c.l.b16 %v2824
        %v2928 = vunpack.c.l.b16 %v2825
        %v2929 = vunpack.c.l.b16 %v2826
        %v2930 = vunpack.c.l.b16 %v2827
        %v2931 = vunpack.c.l.b16 %v2828
        %v2932 = vpack.c.b16 %v2885, %v2884
        %v2933 = vpack.c.b16 %v2887, %v2886
        %v2934 = vpack.c.b16 %v2889, %v2888
        %v2935 = vpack.c.b16 %v2891, %v2890
        %v2936 = vpack.c.b16 %v2893, %v2892
        %v2937 = vpack.c.b16 %v2895, %v2894
        %v2938 = vpack.c.b16 %v2897, %v2896
        %v2939 = vpack.c.b16 %v2899, %v2898
        %v2940 = vpack.c.b16 %v2901, %v2900
        %v2941 = vpack.c.b16 %v2903, %v2902
        %v2942 = vpack.c.b16 %v2905, %v2904
        %v2943 = vpack.c.b16 %v2907, %v2906
        %v2944 = vpack.c.b16 %v2909, %v2908
        %v2945 = vpack.c.b16 %v2911, %v2910
        %v2946 = vpack.c.b16 %v2913, %v2912
        %v2947 = vpack.c.b16 %v2915, %v2914
        %v2948 = vpack.c.b16 %v2917, %v2916
        %v2949 = vpack.c.b16 %v2919, %v2918
        %v2950 = vpack.c.b16 %v2921, %v2920
        %v2951 = vpack.c.b16 %v2923, %v2922
        %v2952 = vpack.c.b16 %v2925, %v2924
        %v2953 = vpack.c.b16 %v2927, %v2926
        %v2954 = vpack.c.b16 %v2929, %v2928
        %v2955 = vpack.c.b16 %v2931, %v2930
        %2980 = vmatprep.subr.bf16.mxu0 0
        %2981 = vmatpush1.bf16.msra.mxu0 %v2932
        %2982 = vmatprep.subr.bf16.mxu0 0
        %2983 = vmatpush1.bf16.msra.mxu0 %v2933
        %2984 = vmatprep.subr.bf16.mxu0 0
        %2985 = vmatpush1.bf16.msra.mxu0 %v2934
        %2986 = vmatprep.subr.bf16.mxu0 0
        %2987 = vmatpush1.bf16.msra.mxu0 %v2935
        %2988 = vmatprep.subr.bf16.mxu0 0
        %2989 = vmatpush1.bf16.msra.mxu0 %v2936
        %2990 = vmatprep.subr.bf16.mxu0 0
        %2991 = vmatpush1.bf16.msra.mxu0 %v2937
        %2992 = vmatprep.subr.bf16.mxu0 0
        %2993 = vmatpush1.bf16.msra.mxu0 %v2938
        %2994 = vmatprep.subr.bf16.mxu0 0
        %2995 = vmatpush1.bf16.msra.mxu0 %v2939
        %2996 = vmatprep.subr.bf16.mxu0 0
        %2997 = vmatpush1.bf16.msra.mxu0 %v2940
        %2998 = vmatprep.subr.bf16.mxu0 0
        %2999 = vmatpush1.bf16.msra.mxu0 %v2941
        %3000 = vmatprep.subr.bf16.mxu0 0
        %3001 = vmatpush1.bf16.msra.mxu0 %v2942
        %3002 = vmatprep.subr.bf16.mxu0 0
        %3003 = vmatpush1.bf16.msra.mxu0 %v2943
        %3004 = vmatprep.subr.bf16.mxu0 0
        %3005 = vmatpush1.bf16.msra.mxu0 %v2944
        %3006 = vmatprep.subr.bf16.mxu0 0
        %3007 = vmatpush1.bf16.msra.mxu0 %v2945
        %3008 = vmatprep.subr.bf16.mxu0 0
        %3009 = vmatpush1.bf16.msra.mxu0 %v2946
        %3010 = vmatprep.subr.bf16.mxu0 0
        %3011 = vmatpush1.bf16.msra.mxu0 %v2947
        %3012 = vmatprep.mubr.bf16.mxu0 %v2734
        %3013 = vmatmul.mubr.bf16.gmra.mrb[0].mxu0 %v2733
        %v3014 = vpop.f32.mrb[0].mxu0
        %v3015 = vadd.f32 %v2834, %v3014
        %v3016 = vpop.f32.mrb[0].mxu0
        %v3017 = vpop.f32.mrb[0].mxu0
        %v3018 = vadd.f32 %v2834, %v3017
        %v3019 = vpop.f32.mrb[0].mxu0
        %3020 = vmatprep.mubr.bf16.mxu0 %v2737
        %3021 = vmatmul.mubr.bf16.gmra.mrb[0].mxu0 %v2736
        %v3022 = vpop.f32.mrb[0].mxu0
        %v3023 = vadd.f32 %v2834, %v3022
        %v3024 = vpop.f32.mrb[0].mxu0
        %v3025 = vpop.f32.mrb[0].mxu0
        %v3026 = vadd.f32 %v2834, %v3025
        %v3027 = vpop.f32.mrb[0].mxu0
        %3028 = vmatprep.mubr.bf16.mxu0 %v2740
        %3029 = vmatmul.mubr.bf16.gmra.mrb[0].mxu0 %v2739
        %v3030 = vpop.f32.mrb[0].mxu0
        %v3031 = vadd.f32 %v2834, %v3030
        %v3032 = vpop.f32.mrb[0].mxu0
        %v3033 = vpop.f32.mrb[0].mxu0
        %v3034 = vadd.f32 %v2834, %v3033
        %v3035 = vpop.f32.mrb[0].mxu0
        %3036 = vmatprep.mubr.bf16.mxu0 %v2743
        %3037 = vmatmul.mubr.bf16.gmra.mrb[0].mxu0 %v2742
        %v3038 = vpop.f32.mrb[0].mxu0
        %v3039 = vadd.f32 %v2834, %v3038
        %v3040 = vpop.f32.mrb[0].mxu0
        %v3041 = vpop.f32.mrb[0].mxu0
        %v3042 = vadd.f32 %v2834, %v3041
        %v3043 = vpop.f32.mrb[0].mxu0
        %3044 = vmatprep.mubr.bf16.mxu0 %v2746
        %3045 = vmatmul.mubr.bf16.gmra.mrb[0].mxu0 %v2745
        %v3046 = vpop.f32.mrb[0].mxu0
        %v3047 = vadd.f32 %v2834, %v3046
        %v3048 = vpop.f32.mrb[0].mxu0
        %v3049 = vpop.f32.mrb[0].mxu0
        %v3050 = vadd.f32 %v2834, %v3049
        %v3051 = vpop.f32.mrb[0].mxu0
        %3052 = vmatprep.mubr.bf16.mxu0 %v2749
        %3053 = vmatmul.mubr.bf16.gmra.mrb[0].mxu0 %v2748
        %v3054 = vpop.f32.mrb[0].mxu0
        %v3055 = vadd.f32 %v2834, %v3054
        %v3056 = vpop.f32.mrb[0].mxu0
        %v3057 = vpop.f32.mrb[0].mxu0
        %v3058 = vadd.f32 %v2834, %v3057
        %v3059 = vpop.f32.mrb[0].mxu0
        %3060 = vmatprep.mubr.bf16.mxu0 %v2752
        %3061 = vmatmul.mubr.bf16.gmra.mrb[0].mxu0 %v2751
        %v3062 = vpop.f32.mrb[0].mxu0
        %v3063 = vadd.f32 %v2834, %v3062
        %v3064 = vpop.f32.mrb[0].mxu0
        %v3065 = vpop.f32.mrb[0].mxu0
        %v3066 = vadd.f32 %v2834, %v3065
        %v3067 = vpop.f32.mrb[0].mxu0
        %3068 = vmatprep.mubr.bf16.mxu0 %v2755
        %3069 = vmatmul.mubr.bf16.gmra.mrb[0].mxu0 %v2754
        %v3070 = vpop.f32.mrb[0].mxu0
        %v3071 = vadd.f32 %v2834, %v3070
        %v3072 = vpop.f32.mrb[0].mxu0
        %v3073 = vpop.f32.mrb[0].mxu0
        %v3074 = vadd.f32 %v2834, %v3073
        %v3075 = vpop.f32.mrb[0].mxu0
        %3076 = vmatprep.mubr.bf16.mxu0 %v2758
        %3077 = vmatmul.mubr.bf16.gmra.mrb[0].mxu0 %v2757
        %v3078 = vpop.f32.mrb[0].mxu0
        %v3079 = vadd.f32 %v2834, %v3078
        %v3080 = vpop.f32.mrb[0].mxu0
        %v3081 = vpop.f32.mrb[0].mxu0
        %v3082 = vadd.f32 %v2834, %v3081
        %v3083 = vpop.f32.mrb[0].mxu0
        %3084 = vmatprep.mubr.bf16.mxu0 %v2761
        %3085 = vmatmul.mubr.bf16.gmra.mrb[0].mxu0 %v2760
        %v3086 = vpop.f32.mrb[0].mxu0
        %v3087 = vadd.f32 %v2834, %v3086
        %v3088 = vpop.f32.mrb[0].mxu0
        %v3089 = vpop.f32.mrb[0].mxu0
        %v3090 = vadd.f32 %v2834, %v3089
        %v3091 = vpop.f32.mrb[0].mxu0
        %3092 = vmatprep.mubr.bf16.mxu0 %v2764
        %3093 = vmatmul.mubr.bf16.gmra.mrb[0].mxu0 %v2763
        %v3094 = vpop.f32.mrb[0].mxu0
        %v3095 = vadd.f32 %v2834, %v3094
        %v3096 = vpop.f32.mrb[0].mxu0
        %v3097 = vpop.f32.mrb[0].mxu0
        %v3098 = vadd.f32 %v2834, %v3097
        %v3099 = vpop.f32.mrb[0].mxu0
        %3100 = vmatprep.mubr.bf16.mxu0 %v2767
        %3101 = vmatmul.mubr.bf16.gmra.mrb[0].mxu0 %v2766
        %v3102 = vpop.f32.mrb[0].mxu0
        %v3103 = vadd.f32 %v2834, %v3102
        %v3104 = vpop.f32.mrb[0].mxu0
        %v3105 = vpop.f32.mrb[0].mxu0
        %v3106 = vadd.f32 %v2834, %v3105
        %v3107 = vpop.f32.mrb[0].mxu0
        %3108 = vmatprep.mubr.bf16.mxu0 %v2770
        %3109 = vmatmul.mubr.bf16.gmra.mrb[0].mxu0 %v2769
        %v3110 = vpop.f32.mrb[0].mxu0
        %v3111 = vadd.f32 %v2834, %v3110
        %v3112 = vpop.f32.mrb[0].mxu0
        %v3113 = vpop.f32.mrb[0].mxu0
        %v3114 = vadd.f32 %v2834, %v3113
        %v3115 = vpop.f32.mrb[0].mxu0
        %3116 = vmatprep.mubr.bf16.mxu0 %v2773
        %3117 = vmatmul.mubr.bf16.gmra.mrb[0].mxu0 %v2772
        %v3118 = vpop.f32.mrb[0].mxu0
        %v3119 = vadd.f32 %v2834, %v3118
        %v3120 = vpop.f32.mrb[0].mxu0
        %v3121 = vpop.f32.mrb[0].mxu0
        %v3122 = vadd.f32 %v2834, %v3121
        %v3123 = vpop.f32.mrb[0].mxu0
        %3124 = vmatprep.mubr.bf16.mxu0 %v2776
        %3125 = vmatmul.mubr.bf16.gmra.mrb[0].mxu0 %v2775
        %v3126 = vpop.f32.mrb[0].mxu0
        %v3127 = vadd.f32 %v2834, %v3126
        %v3128 = vpop.f32.mrb[0].mxu0
        %v3129 = vpop.f32.mrb[0].mxu0
        %v3130 = vadd.f32 %v2834, %v3129
        %v3131 = vpop.f32.mrb[0].mxu0
        %3132 = vmatprep.mubr.bf16.mxu0 %v2779
        %3133 = vmatmul.mubr.bf16.gmra.mrb[0].mxu0 %v2778
        %v3134 = vpop.f32.mrb[0].mxu0
        %v3135 = vadd.f32 %v2834, %v3134
        %v3136 = vpop.f32.mrb[0].mxu0
        %v3137 = vpop.f32.mrb[0].mxu0
        %v3138 = vadd.f32 %v2834, %v3137
        %v3139 = vpop.f32.mrb[0].mxu0
        %3140 = vdwg.mxu0
        %3141 = vmatprep.subr.bf16.mxu0 0
        %3142 = vmatpush1.bf16.msra.mxu0 %v2948
        %3143 = vmatprep.subr.bf16.mxu0 0
        %3144 = vmatpush1.bf16.msra.mxu0 %v2949
        %3145 = vmatprep.subr.bf16.mxu0 0
        %3146 = vmatpush1.bf16.msra.mxu0 %v2950
        %3147 = vmatprep.subr.bf16.mxu0 0
        %3148 = vmatpush1.bf16.msra.mxu0 %v2951
        %3149 = vmatprep.subr.bf16.mxu0 0
        %3150 = vmatpush1.bf16.msra.mxu0 %v2952
        %3151 = vmatprep.subr.bf16.mxu0 0
        %3152 = vmatpush1.bf16.msra.mxu0 %v2953
        %3153 = vmatprep.subr.bf16.mxu0 0
        %3154 = vmatpush1.bf16.msra.mxu0 %v2954
        %3155 = vmatprep.subr.bf16.mxu0 0
        %3156 = vmatpush1.bf16.msra.mxu0 %v2955
        %3157 = vmatprep.subr.bf16.mxu0 0
        %3158 = vmatpush1.bf16.msra.mxu0 0
        %3159 = vmatprep.subr.bf16.mxu0 0
        %3160 = vmatpush1.bf16.msra.mxu0 0
        %3161 = vmatprep.subr.bf16.mxu0 0
        %3162 = vmatpush1.bf16.msra.mxu0 0
        %3163 = vmatprep.subr.bf16.mxu0 0
        %3164 = vmatpush1.bf16.msra.mxu0 0
        %3165 = vmatprep.subr.bf16.mxu0 0
        %3166 = vmatpush1.bf16.msra.mxu0 0
        %3167 = vmatprep.subr.bf16.mxu0 0
        %3168 = vmatpush1.bf16.msra.mxu0 0
        %3169 = vmatprep.subr.bf16.mxu0 0
        %3170 = vmatpush1.bf16.msra.mxu0 0
        %3171 = vmatprep.subr.bf16.mxu0 0
        %3172 = vmatpush1.bf16.msra.mxu0 0
        %3173 = vmatprep.mubr.bf16.mxu0 0
        %3174 = vmatmul.mubr.bf16.gmra.mrb[0].mxu0 %v2735
        %v3175 = vpop.f32.mrb[0].mxu0
        %v3176 = vadd.f32 %v3015, %v3175
        %v3177 = vpop.f32.mrb[0].mxu0
        %v3178 = vpop.f32.mrb[0].mxu0
        %v3179 = vadd.f32 %v3018, %v3178
        %v3180 = vpop.f32.mrb[0].mxu0
        %3181 = vmatprep.mubr.bf16.mxu0 0
        %3182 = vmatmul.mubr.bf16.gmra.mrb[0].mxu0 %v2738
        %v3183 = vpop.f32.mrb[0].mxu0
        %v3184 = vadd.f32 %v3023, %v3183
        %v3185 = vpop.f32.mrb[0].mxu0
        %v3186 = vpop.f32.mrb[0].mxu0
        %v3187 = vadd.f32 %v3026, %v3186
        %v3188 = vpop.f32.mrb[0].mxu0
        %3189 = vmatprep.mubr.bf16.mxu0 0
        %3190 = vmatmul.mubr.bf16.gmra.mrb[0].mxu0 %v2741
        %v3191 = vpop.f32.mrb[0].mxu0
        %v3192 = vadd.f32 %v3031, %v3191
        %v3193 = vpop.f32.mrb[0].mxu0
        %v3194 = vpop.f32.mrb[0].mxu0
        %v3195 = vadd.f32 %v3034, %v3194
        %v3196 = vpop.f32.mrb[0].mxu0
        %3197 = vmatprep.mubr.bf16.mxu0 0
        %3198 = vmatmul.mubr.bf16.gmra.mrb[0].mxu0 %v2744
        %v3199 = vpop.f32.mrb[0].mxu0
        %v3200 = vadd.f32 %v3039, %v3199
        %v3201 = vpop.f32.mrb[0].mxu0
        %v3202 = vpop.f32.mrb[0].mxu0
        %v3203 = vadd.f32 %v3042, %v3202
        %v3204 = vpop.f32.mrb[0].mxu0
        %3205 = vmatprep.mubr.bf16.mxu0 0
        %3206 = vmatmul.mubr.bf16.gmra.mrb[0].mxu0 %v2747
        %v3207 = vpop.f32.mrb[0].mxu0
        %v3208 = vadd.f32 %v3047, %v3207
        %v3209 = vpop.f32.mrb[0].mxu0
        %v3210 = vpop.f32.mrb[0].mxu0
        %v3211 = vadd.f32 %v3050, %v3210
        %v3212 = vpop.f32.mrb[0].mxu0
        %3213 = vmatprep.mubr.bf16.mxu0 0
        %3214 = vmatmul.mubr.bf16.gmra.mrb[0].mxu0 %v2750
        %v3215 = vpop.f32.mrb[0].mxu0
        %v3216 = vadd.f32 %v3055, %v3215
        %v3217 = vpop.f32.mrb[0].mxu0
        %v3218 = vpop.f32.mrb[0].mxu0
        %v3219 = vadd.f32 %v3058, %v3218
        %v3220 = vpop.f32.mrb[0].mxu0
        %3221 = vmatprep.mubr.bf16.mxu0 0
        %3222 = vmatmul.mubr.bf16.gmra.mrb[0].mxu0 %v2753
        %v3223 = vpop.f32.mrb[0].mxu0
        %v3224 = vadd.f32 %v3063, %v3223
        %v3225 = vpop.f32.mrb[0].mxu0
        %v3226 = vpop.f32.mrb[0].mxu0
        %v3227 = vadd.f32 %v3066, %v3226
        %v3228 = vpop.f32.mrb[0].mxu0
        %3229 = vmatprep.mubr.bf16.mxu0 0
        %3230 = vmatmul.mubr.bf16.gmra.mrb[0].mxu0 %v2756
        %v3231 = vpop.f32.mrb[0].mxu0
        %v3232 = vadd.f32 %v3071, %v3231
        %v3233 = vpop.f32.mrb[0].mxu0
        %v3234 = vpop.f32.mrb[0].mxu0
        %v3235 = vadd.f32 %v3074, %v3234
        %v3236 = vpop.f32.mrb[0].mxu0
        %3237 = vmatprep.mubr.bf16.mxu0 0
        %3238 = vmatmul.mubr.bf16.gmra.mrb[0].mxu0 %v2759
        %v3239 = vpop.f32.mrb[0].mxu0
        %v3240 = vadd.f32 %v3079, %v3239
        %v3241 = vpop.f32.mrb[0].mxu0
        %v3242 = vpop.f32.mrb[0].mxu0
        %v3243 = vadd.f32 %v3082, %v3242
        %v3244 = vpop.f32.mrb[0].mxu0
        %3245 = vmatprep.mubr.bf16.mxu0 0
        %3246 = vmatmul.mubr.bf16.gmra.mrb[0].mxu0 %v2762
        %v3247 = vpop.f32.mrb[0].mxu0
        %v3248 = vadd.f32 %v3087, %v3247
        %v3249 = vpop.f32.mrb[0].mxu0
        %v3250 = vpop.f32.mrb[0].mxu0
        %v3251 = vadd.f32 %v3090, %v3250
        %v3252 = vpop.f32.mrb[0].mxu0
        %3253 = vmatprep.mubr.bf16.mxu0 0
        %3254 = vmatmul.mubr.bf16.gmra.mrb[0].mxu0 %v2765
        %v3255 = vpop.f32.mrb[0].mxu0
        %v3256 = vadd.f32 %v3095, %v3255
        %v3257 = vpop.f32.mrb[0].mxu0
        %v3258 = vpop.f32.mrb[0].mxu0
        %v3259 = vadd.f32 %v3098, %v3258
        %v3260 = vpop.f32.mrb[0].mxu0
        %3261 = vmatprep.mubr.bf16.mxu0 0
        %3262 = vmatmul.mubr.bf16.gmra.mrb[0].mxu0 %v2768
        %v3263 = vpop.f32.mrb[0].mxu0
        %v3264 = vadd.f32 %v3103, %v3263
        %v3265 = vpop.f32.mrb[0].mxu0
        %v3266 = vpop.f32.mrb[0].mxu0
        %v3267 = vadd.f32 %v3106, %v3266
        %v3268 = vpop.f32.mrb[0].mxu0
        %3269 = vmatprep.mubr.bf16.mxu0 0
        %3270 = vmatmul.mubr.bf16.gmra.mrb[0].mxu0 %v2771
        %v3271 = vpop.f32.mrb[0].mxu0
        %v3272 = vadd.f32 %v3111, %v3271
        %v3273 = vpop.f32.mrb[0].mxu0
        %v3274 = vpop.f32.mrb[0].mxu0
        %v3275 = vadd.f32 %v3114, %v3274
        %v3276 = vpop.f32.mrb[0].mxu0
        %3277 = vmatprep.mubr.bf16.mxu0 0
        %3278 = vmatmul.mubr.bf16.gmra.mrb[0].mxu0 %v2774
        %v3279 = vpop.f32.mrb[0].mxu0
        %v3280 = vadd.f32 %v3119, %v3279
        %v3281 = vpop.f32.mrb[0].mxu0
        %v3282 = vpop.f32.mrb[0].mxu0
        %v3283 = vadd.f32 %v3122, %v3282
        %v3284 = vpop.f32.mrb[0].mxu0
        %3285 = vmatprep.mubr.bf16.mxu0 0
        %3286 = vmatmul.mubr.bf16.gmra.mrb[0].mxu0 %v2777
        %v3287 = vpop.f32.mrb[0].mxu0
        %v3288 = vadd.f32 %v3127, %v3287
        %v3289 = vpop.f32.mrb[0].mxu0
        %v3290 = vpop.f32.mrb[0].mxu0
        %v3291 = vadd.f32 %v3130, %v3290
        %v3292 = vpop.f32.mrb[0].mxu0
        %3293 = vmatprep.mubr.bf16.mxu0 0
        %3294 = vmatmul.mubr.bf16.gmra.mrb[0].mxu0 %v2780
        %v3295 = vpop.f32.mrb[0].mxu0
        %v3296 = vadd.f32 %v3135, %v3295
        %v3297 = vpop.f32.mrb[0].mxu0
        %v3298 = vpop.f32.mrb[0].mxu0
        %v3299 = vadd.f32 %v3138, %v3298
        %v3300 = vpop.f32.mrb[0].mxu0
        %3301 = vdwg.mxu0
        %v3302 = vmax.f32 %v3176, 0.0
        %v3303 = vmax.f32 %v3179, 0.0
        %v3304 = vmax.f32 %v3184, 0.0
        %v3305 = vmax.f32 %v3187, 0.0
        %v3306 = vmax.f32 %v3192, 0.0
        %v3307 = vmax.f32 %v3195, 0.0
        %v3308 = vmax.f32 %v3200, 0.0
        %v3309 = vmax.f32 %v3203, 0.0
        %v3310 = vmax.f32 %v3208, 0.0
        %v3311 = vmax.f32 %v3211, 0.0
        %v3312 = vmax.f32 %v3216, 0.0
        %v3313 = vmax.f32 %v3219, 0.0
        %v3314 = vmax.f32 %v3224, 0.0
        %v3315 = vmax.f32 %v3227, 0.0
        %v3316 = vmax.f32 %v3232, 0.0
        %v3317 = vmax.f32 %v3235, 0.0
        %v3318 = vmax.f32 %v3240, 0.0
        %v3319 = vmax.f32 %v3243, 0.0
        %v3320 = vmax.f32 %v3248, 0.0
        %v3321 = vmax.f32 %v3251, 0.0
        %v3322 = vmax.f32 %v3256, 0.0
        %v3323 = vmax.f32 %v3259, 0.0
        %v3324 = vmax.f32 %v3264, 0.0
        %v3325 = vmax.f32 %v3267, 0.0
        %v3326 = vmax.f32 %v3272, 0.0
        %v3327 = vmax.f32 %v3275, 0.0
        %v3328 = vmax.f32 %v3280, 0.0
        %v3329 = vmax.f32 %v3283, 0.0
        %v3330 = vmax.f32 %v3288, 0.0
        %v3331 = vmax.f32 %v3291, 0.0
        %v3332 = vmax.f32 %v3296, 0.0
        %v3333 = vmax.f32 %v3299, 0.0
        %v3334 = vsel %vm1951, %v3305, -inf
        %v3335 = vmax.f32 %v3302, %v3303
        %v3336 = vmax.f32 %v3304, %v3334
        %v3337 = vmax.f32 %v3335, %v3336
        %v3338 = vrot.slane %v3337, 4
        %v3339 = vmax.f32 %v3337, %v3338
        %v3340 = vrot.slane %v3339, 2
        %v3341 = vmax.f32 %v3339, %v3340
        %v3342 = vrot.slane %v3341, 1
        %v3343 = vmax.f32 %v3341, %v3342
        %v3344 = vsel %vm1951, %v3309, -inf
        %v3345 = vmax.f32 %v3306, %v3307
        %v3346 = vmax.f32 %v3308, %v3344
        %v3347 = vmax.f32 %v3345, %v3346
        %v3348 = vrot.slane %v3347, 4
        %v3349 = vmax.f32 %v3347, %v3348
        %v3350 = vrot.slane %v3349, 2
        %v3351 = vmax.f32 %v3349, %v3350
        %v3352 = vrot.slane %v3351, 1
        %v3353 = vmax.f32 %v3351, %v3352
        %v3354 = vsel %vm1951, %v3313, -inf
        %v3355 = vmax.f32 %v3310, %v3311
        %v3356 = vmax.f32 %v3312, %v3354
        %v3357 = vmax.f32 %v3355, %v3356
        %v3358 = vrot.slane %v3357, 4
        %v3359 = vmax.f32 %v3357, %v3358
        %v3360 = vrot.slane %v3359, 2
        %v3361 = vmax.f32 %v3359, %v3360
        %v3362 = vrot.slane %v3361, 1
        %v3363 = vmax.f32 %v3361, %v3362
        %v3364 = vsel %vm1951, %v3317, -inf
        %v3365 = vmax.f32 %v3314, %v3315
        %v3366 = vmax.f32 %v3316, %v3364
        %v3367 = vmax.f32 %v3365, %v3366
        %v3368 = vrot.slane %v3367, 4
        %v3369 = vmax.f32 %v3367, %v3368
        %v3370 = vrot.slane %v3369, 2
        %v3371 = vmax.f32 %v3369, %v3370
        %v3372 = vrot.slane %v3371, 1
        %v3373 = vmax.f32 %v3371, %v3372
        %v3374 = vsel %vm1951, %v3321, -inf
        %v3375 = vmax.f32 %v3318, %v3319
        %v3376 = vmax.f32 %v3320, %v3374
        %v3377 = vmax.f32 %v3375, %v3376
        %v3378 = vrot.slane %v3377, 4
        %v3379 = vmax.f32 %v3377, %v3378
        %v3380 = vrot.slane %v3379, 2
        %v3381 = vmax.f32 %v3379, %v3380
        %v3382 = vrot.slane %v3381, 1
        %v3383 = vmax.f32 %v3381, %v3382
        %v3384 = vsel %vm1951, %v3325, -inf
        %v3385 = vmax.f32 %v3322, %v3323
        %v3386 = vmax.f32 %v3324, %v3384
        %v3387 = vmax.f32 %v3385, %v3386
        %v3388 = vrot.slane %v3387, 4
        %v3389 = vmax.f32 %v3387, %v3388
        %v3390 = vrot.slane %v3389, 2
        %v3391 = vmax.f32 %v3389, %v3390
        %v3392 = vrot.slane %v3391, 1
        %v3393 = vmax.f32 %v3391, %v3392
        %v3394 = vsel %vm1951, %v3329, -inf
        %v3395 = vmax.f32 %v3326, %v3327
        %v3396 = vmax.f32 %v3328, %v3394
        %v3397 = vmax.f32 %v3395, %v3396
        %v3398 = vrot.slane %v3397, 4
        %v3399 = vmax.f32 %v3397, %v3398
        %v3400 = vrot.slane %v3399, 2
        %v3401 = vmax.f32 %v3399, %v3400
        %v3402 = vrot.slane %v3401, 1
        %v3403 = vmax.f32 %v3401, %v3402
        %v3404 = vsel %vm1951, %v3333, -inf
        %v3405 = vmax.f32 %v3330, %v3331
        %v3406 = vmax.f32 %v3332, %v3404
        %v3407 = vmax.f32 %v3405, %v3406
        %v3408 = vrot.slane %v3407, 4
        %v3409 = vmax.f32 %v3407, %v3408
        %v3410 = vrot.slane %v3409, 2
        %v3411 = vmax.f32 %v3409, %v3410
        %v3412 = vrot.slane %v3411, 1
        %v3413 = vmax.f32 %v3411, %v3412
        %v3414 = vsel %vm1945, %v3343, %v3353
        %v3415 = vsel %vm1947, %v3414, %v3363
        %v3416 = vsel %vm1949, %v3415, %v3373
        %v3417 = vsel %vm1951, %v3416, %v3383
        %v3418 = vsel %vm870, %v3417, %v3393
        %v3419 = vsel %vm1166, %v3418, %v3403
        %v3420 = vsel %vm1068, %v3419, %v3413
        %v3421 = vld [vmem:[#allocation5] sm:$0xf]
        %v3422 = vld [vmem:[#allocation5 + $0x4] sm:$0xf]
        %v3423 = vld [vmem:[#allocation5 + $0x8] sm:$0xf]
        %v3424 = vld [vmem:[#allocation5 + $0xc] sm:$0xf]
        %v3425 = vld [vmem:[#allocation5 + $0x10] sm:$0xf]
        %v3426 = vld [vmem:[#allocation5 + $0x14] sm:$0xf]
        %v3427 = vld [vmem:[#allocation5 + $0x18] sm:$0xf]
        %v3428 = vld [vmem:[#allocation5 + $0x1c] sm:$0xf]
        %v3429 = vld [vmem:[#allocation5 + $0x20] sm:$0xf]
        %v3430 = vld [vmem:[#allocation5 + $0x24] sm:$0xf]
        %v3431 = vld [vmem:[#allocation5 + $0x28] sm:$0xf]
        %v3432 = vld [vmem:[#allocation5 + $0x2c] sm:$0xf]
        %v3433 = vld [vmem:[#allocation5 + $0x30] sm:$0xf]
        %v3434 = vld [vmem:[#allocation5 + $0x34] sm:$0xf]
        %v3435 = vld [vmem:[#allocation5 + $0x38] sm:$0xf]
        %v3436 = vld [vmem:[#allocation5 + $0x3c] sm:$0xf]
        %v3437 = vld [vmem:[#allocation5 + $0x40] sm:$0xf]
        %v3438 = vld [vmem:[#allocation5 + $0x44] sm:$0xf]
        %v3439 = vld [vmem:[#allocation5 + $0x48] sm:$0xf]
        %v3440 = vld [vmem:[#allocation5 + $0x4c] sm:$0xf]
        %v3441 = vld [vmem:[#allocation5 + $0x50] sm:$0xf]
        %v3442 = vld [vmem:[#allocation5 + $0x54] sm:$0xf]
        %v3443 = vld [vmem:[#allocation5 + $0x58] sm:$0xf]
        %v3444 = vld [vmem:[#allocation5 + $0x5c] sm:$0xf]
        %v3445 = vld [vmem:[#allocation5 + $0x60] sm:$0xf]
        %v3446 = vld [vmem:[#allocation5 + $0x64] sm:$0xf]
        %v3447 = vld [vmem:[#allocation5 + $0x68] sm:$0xf]
        %v3448 = vld [vmem:[#allocation5 + $0x6c] sm:$0xf]
        %v3449 = vld [vmem:[#allocation5 + $0x70] sm:$0xf]
        %v3450 = vld [vmem:[#allocation5 + $0x74] sm:$0xf]
        %v3451 = vld [vmem:[#allocation5 + $0x78] sm:$0xf]
        %v3452 = vld [vmem:[#allocation5 + $0x7c] sm:$0xf]
        %v3453 = vld [vmem:[#allocation5 + $0x80] sm:$0xf]
        %v3454 = vld [vmem:[#allocation5 + $0x84] sm:$0xf]
        %v3455 = vld [vmem:[#allocation5 + $0x88] sm:$0xf]
        %v3456 = vld [vmem:[#allocation5 + $0x8c] sm:$0xf]
        %v3457 = vld [vmem:[#allocation5 + $0x90] sm:$0xf]
        %v3458 = vld [vmem:[#allocation5 + $0x94] sm:$0xf]
        %v3459 = vld [vmem:[#allocation5 + $0x98] sm:$0xf]
        %v3460 = vld [vmem:[#allocation5 + $0x9c] sm:$0xf]
        %v3461 = vld [vmem:[#allocation5 + $0xa0] sm:$0xf]
        %v3462 = vld [vmem:[#allocation5 + $0xa4] sm:$0xf]
        %v3463 = vld [vmem:[#allocation5 + $0xa8] sm:$0xf]
        %v3464 = vld [vmem:[#allocation5 + $0xac] sm:$0xf]
        %v3465 = vld [vmem:[#allocation5 + $0xb0] sm:$0xf]
        %v3466 = vld [vmem:[#allocation5 + $0xb4] sm:$0xf]
        %v3467 = vld [vmem:[#allocation5 + $0xb8] sm:$0xf]
        %v3468 = vld [vmem:[#allocation5 + $0xbc] sm:$0xf]
        %v3469 = vld [vmem:[%s9] sm:$0x1]
        %v3471 = vlaneseq
        %v3472 = vshrl.u32 %v3471, 7
        %v3473 = vsub.s32 0, %v3472
        %v3474 = vrot.slane %v3469, %v3473
        %v3524 = vunpack.c.l.b16 %v3421
        %v3525 = vunpack.c.l.b16 %v3422
        %v3526 = vunpack.c.l.b16 %v3423
        %v3527 = vunpack.c.l.b16 %v3424
        %v3528 = vunpack.c.l.b16 %v3425
        %v3529 = vunpack.c.l.b16 %v3426
        %v3530 = vunpack.c.l.b16 %v3427
        %v3531 = vunpack.c.l.b16 %v3428
        %v3532 = vunpack.c.l.b16 %v3429
        %v3533 = vunpack.c.l.b16 %v3430
        %v3534 = vunpack.c.l.b16 %v3431
        %v3535 = vunpack.c.l.b16 %v3432
        %v3536 = vunpack.c.l.b16 %v3433
        %v3537 = vunpack.c.l.b16 %v3434
        %v3538 = vunpack.c.l.b16 %v3435
        %v3539 = vunpack.c.l.b16 %v3436
        %v3540 = vunpack.c.l.b16 %v3437
        %v3541 = vunpack.c.l.b16 %v3438
        %v3542 = vunpack.c.l.b16 %v3439
        %v3543 = vunpack.c.l.b16 %v3440
        %v3544 = vunpack.c.l.b16 %v3441
        %v3545 = vunpack.c.l.b16 %v3442
        %v3546 = vunpack.c.l.b16 %v3443
        %v3547 = vunpack.c.l.b16 %v3444
        %v3548 = vunpack.c.l.b16 %v3445
        %v3549 = vunpack.c.l.b16 %v3446
        %v3550 = vunpack.c.l.b16 %v3447
        %v3551 = vunpack.c.l.b16 %v3448
        %v3552 = vunpack.c.l.b16 %v3449
        %v3553 = vunpack.c.l.b16 %v3450
        %v3554 = vunpack.c.l.b16 %v3451
        %v3555 = vunpack.c.l.b16 %v3452
        %v3556 = vunpack.c.l.b16 %v3453
        %v3557 = vunpack.c.l.b16 %v3454
        %v3558 = vunpack.c.l.b16 %v3455
        %v3559 = vunpack.c.l.b16 %v3456
        %v3560 = vunpack.c.l.b16 %v3457
        %v3561 = vunpack.c.l.b16 %v3458
        %v3562 = vunpack.c.l.b16 %v3459
        %v3563 = vunpack.c.l.b16 %v3460
        %v3564 = vunpack.c.l.b16 %v3461
        %v3565 = vunpack.c.l.b16 %v3462
        %v3566 = vunpack.c.l.b16 %v3463
        %v3567 = vunpack.c.l.b16 %v3464
        %v3568 = vunpack.c.l.b16 %v3465
        %v3569 = vunpack.c.l.b16 %v3466
        %v3570 = vunpack.c.l.b16 %v3467
        %v3571 = vunpack.c.l.b16 %v3468
        %v3572 = vpack.c.b16 %v3525, %v3524
        %v3573 = vpack.c.b16 %v3527, %v3526
        %v3574 = vpack.c.b16 %v3529, %v3528
        %v3575 = vpack.c.b16 %v3531, %v3530
        %v3576 = vpack.c.b16 %v3533, %v3532
        %v3577 = vpack.c.b16 %v3535, %v3534
        %v3578 = vpack.c.b16 %v3537, %v3536
        %v3579 = vpack.c.b16 %v3539, %v3538
        %v3580 = vpack.c.b16 %v3541, %v3540
        %v3581 = vpack.c.b16 %v3543, %v3542
        %v3582 = vpack.c.b16 %v3545, %v3544
        %v3583 = vpack.c.b16 %v3547, %v3546
        %v3584 = vpack.c.b16 %v3549, %v3548
        %v3585 = vpack.c.b16 %v3551, %v3550
        %v3586 = vpack.c.b16 %v3553, %v3552
        %v3587 = vpack.c.b16 %v3555, %v3554
        %v3588 = vpack.c.b16 %v3557, %v3556
        %v3589 = vpack.c.b16 %v3559, %v3558
        %v3590 = vpack.c.b16 %v3561, %v3560
        %v3591 = vpack.c.b16 %v3563, %v3562
        %v3592 = vpack.c.b16 %v3565, %v3564
        %v3593 = vpack.c.b16 %v3567, %v3566
        %v3594 = vpack.c.b16 %v3569, %v3568
        %v3595 = vpack.c.b16 %v3571, %v3570
        %3620 = vmatprep.subr.bf16.mxu0 0
        %3621 = vmatpush1.bf16.msra.mxu0 %v3572
        %3622 = vmatprep.subr.bf16.mxu0 0
        %3623 = vmatpush1.bf16.msra.mxu0 %v3573
        %3624 = vmatprep.subr.bf16.mxu0 0
        %3625 = vmatpush1.bf16.msra.mxu0 %v3574
        %3626 = vmatprep.subr.bf16.mxu0 0
        %3627 = vmatpush1.bf16.msra.mxu0 %v3575
        %3628 = vmatprep.subr.bf16.mxu0 0
        %3629 = vmatpush1.bf16.msra.mxu0 %v3576
        %3630 = vmatprep.subr.bf16.mxu0 0
        %3631 = vmatpush1.bf16.msra.mxu0 %v3577
        %3632 = vmatprep.subr.bf16.mxu0 0
        %3633 = vmatpush1.bf16.msra.mxu0 %v3578
        %3634 = vmatprep.subr.bf16.mxu0 0
        %3635 = vmatpush1.bf16.msra.mxu0 %v3579
        %3636 = vmatprep.subr.bf16.mxu0 0
        %3637 = vmatpush1.bf16.msra.mxu0 %v3580
        %3638 = vmatprep.subr.bf16.mxu0 0
        %3639 = vmatpush1.bf16.msra.mxu0 %v3581
        %3640 = vmatprep.subr.bf16.mxu0 0
        %3641 = vmatpush1.bf16.msra.mxu0 %v3582
        %3642 = vmatprep.subr.bf16.mxu0 0
        %3643 = vmatpush1.bf16.msra.mxu0 %v3583
        %3644 = vmatprep.subr.bf16.mxu0 0
        %3645 = vmatpush1.bf16.msra.mxu0 %v3584
        %3646 = vmatprep.subr.bf16.mxu0 0
        %3647 = vmatpush1.bf16.msra.mxu0 %v3585
        %3648 = vmatprep.subr.bf16.mxu0 0
        %3649 = vmatpush1.bf16.msra.mxu0 %v3586
        %3650 = vmatprep.subr.bf16.mxu0 0
        %3651 = vmatpush1.bf16.msra.mxu0 %v3587
        %3652 = vmatprep.mubr.bf16.mxu0 %v1265
        %3653 = vmatmul.mubr.bf16.gmra.mrb[0].mxu0 %v1264
        %v3654 = vpop.f32.mrb[0].mxu0
        %v3655 = vadd.f32 %v3474, %v3654
        %v3656 = vpop.f32.mrb[0].mxu0
        %v3657 = vpop.f32.mrb[0].mxu0
        %v3658 = vadd.f32 %v3474, %v3657
        %v3659 = vpop.f32.mrb[0].mxu0
        %3660 = vmatprep.mubr.bf16.mxu0 %v1268
        %3661 = vmatmul.mubr.bf16.gmra.mrb[0].mxu0 %v1267
        %v3662 = vpop.f32.mrb[0].mxu0
        %v3663 = vadd.f32 %v3474, %v3662
        %v3664 = vpop.f32.mrb[0].mxu0
        %v3665 = vpop.f32.mrb[0].mxu0
        %v3666 = vadd.f32 %v3474, %v3665
        %v3667 = vpop.f32.mrb[0].mxu0
        %3668 = vmatprep.mubr.bf16.mxu0 %v1271
        %3669 = vmatmul.mubr.bf16.gmra.mrb[0].mxu0 %v1270
        %v3670 = vpop.f32.mrb[0].mxu0
        %v3671 = vadd.f32 %v3474, %v3670
        %v3672 = vpop.f32.mrb[0].mxu0
        %v3673 = vpop.f32.mrb[0].mxu0
        %v3674 = vadd.f32 %v3474, %v3673
        %v3675 = vpop.f32.mrb[0].mxu0
        %3676 = vmatprep.mubr.bf16.mxu0 %v1274
        %3677 = vmatmul.mubr.bf16.gmra.mrb[0].mxu0 %v1273
        %v3678 = vpop.f32.mrb[0].mxu0
        %v3679 = vadd.f32 %v3474, %v3678
        %v3680 = vpop.f32.mrb[0].mxu0
        %v3681 = vpop.f32.mrb[0].mxu0
        %v3682 = vadd.f32 %v3474, %v3681
        %v3683 = vpop.f32.mrb[0].mxu0
        %3684 = vmatprep.mubr.bf16.mxu0 %v1277
        %3685 = vmatmul.mubr.bf16.gmra.mrb[0].mxu0 %v1276
        %v3686 = vpop.f32.mrb[0].mxu0
        %v3687 = vadd.f32 %v3474, %v3686
        %v3688 = vpop.f32.mrb[0].mxu0
        %v3689 = vpop.f32.mrb[0].mxu0
        %v3690 = vadd.f32 %v3474, %v3689
        %v3691 = vpop.f32.mrb[0].mxu0
        %3692 = vmatprep.mubr.bf16.mxu0 %v1280
        %3693 = vmatmul.mubr.bf16.gmra.mrb[0].mxu0 %v1279
        %v3694 = vpop.f32.mrb[0].mxu0
        %v3695 = vadd.f32 %v3474, %v3694
        %v3696 = vpop.f32.mrb[0].mxu0
        %v3697 = vpop.f32.mrb[0].mxu0
        %v3698 = vadd.f32 %v3474, %v3697
        %v3699 = vpop.f32.mrb[0].mxu0
        %3700 = vmatprep.mubr.bf16.mxu0 %v1283
        %3701 = vmatmul.mubr.bf16.gmra.mrb[0].mxu0 %v1282
        %v3702 = vpop.f32.mrb[0].mxu0
        %v3703 = vadd.f32 %v3474, %v3702
        %v3704 = vpop.f32.mrb[0].mxu0
        %v3705 = vpop.f32.mrb[0].mxu0
        %v3706 = vadd.f32 %v3474, %v3705
        %v3707 = vpop.f32.mrb[0].mxu0
        %3708 = vmatprep.mubr.bf16.mxu0 %v1286
        %3709 = vmatmul.mubr.bf16.gmra.mrb[0].mxu0 %v1285
        %v3710 = vpop.f32.mrb[0].mxu0
        %v3711 = vadd.f32 %v3474, %v3710
        %v3712 = vpop.f32.mrb[0].mxu0
        %v3713 = vpop.f32.mrb[0].mxu0
        %v3714 = vadd.f32 %v3474, %v3713
        %v3715 = vpop.f32.mrb[0].mxu0
        %3716 = vmatprep.mubr.bf16.mxu0 %v1289
        %3717 = vmatmul.mubr.bf16.gmra.mrb[0].mxu0 %v1288
        %v3718 = vpop.f32.mrb[0].mxu0
        %v3719 = vadd.f32 %v3474, %v3718
        %v3720 = vpop.f32.mrb[0].mxu0
        %v3721 = vpop.f32.mrb[0].mxu0
        %v3722 = vadd.f32 %v3474, %v3721
        %v3723 = vpop.f32.mrb[0].mxu0
        %3724 = vmatprep.mubr.bf16.mxu0 %v1292
        %3725 = vmatmul.mubr.bf16.gmra.mrb[0].mxu0 %v1291
        %v3726 = vpop.f32.mrb[0].mxu0
        %v3727 = vadd.f32 %v3474, %v3726
        %v3728 = vpop.f32.mrb[0].mxu0
        %v3729 = vpop.f32.mrb[0].mxu0
        %v3730 = vadd.f32 %v3474, %v3729
        %v3731 = vpop.f32.mrb[0].mxu0
        %3732 = vmatprep.mubr.bf16.mxu0 %v1295
        %3733 = vmatmul.mubr.bf16.gmra.mrb[0].mxu0 %v1294
        %v3734 = vpop.f32.mrb[0].mxu0
        %v3735 = vadd.f32 %v3474, %v3734
        %v3736 = vpop.f32.mrb[0].mxu0
        %v3737 = vpop.f32.mrb[0].mxu0
        %v3738 = vadd.f32 %v3474, %v3737
        %v3739 = vpop.f32.mrb[0].mxu0
        %3740 = vmatprep.mubr.bf16.mxu0 %v1298
        %3741 = vmatmul.mubr.bf16.gmra.mrb[0].mxu0 %v1297
        %v3742 = vpop.f32.mrb[0].mxu0
        %v3743 = vadd.f32 %v3474, %v3742
        %v3744 = vpop.f32.mrb[0].mxu0
        %v3745 = vpop.f32.mrb[0].mxu0
        %v3746 = vadd.f32 %v3474, %v3745
        %v3747 = vpop.f32.mrb[0].mxu0
        %3748 = vmatprep.mubr.bf16.mxu0 %v1301
        %3749 = vmatmul.mubr.bf16.gmra.mrb[0].mxu0 %v1300
        %v3750 = vpop.f32.mrb[0].mxu0
        %v3751 = vadd.f32 %v3474, %v3750
        %v3752 = vpop.f32.mrb[0].mxu0
        %v3753 = vpop.f32.mrb[0].mxu0
        %v3754 = vadd.f32 %v3474, %v3753
        %v3755 = vpop.f32.mrb[0].mxu0
        %3756 = vmatprep.mubr.bf16.mxu0 %v1304
        %3757 = vmatmul.mubr.bf16.gmra.mrb[0].mxu0 %v1303
        %v3758 = vpop.f32.mrb[0].mxu0
        %v3759 = vadd.f32 %v3474, %v3758
        %v3760 = vpop.f32.mrb[0].mxu0
        %v3761 = vpop.f32.mrb[0].mxu0
        %v3762 = vadd.f32 %v3474, %v3761
        %v3763 = vpop.f32.mrb[0].mxu0
        %3764 = vmatprep.mubr.bf16.mxu0 %v1307
        %3765 = vmatmul.mubr.bf16.gmra.mrb[0].mxu0 %v1306
        %v3766 = vpop.f32.mrb[0].mxu0
        %v3767 = vadd.f32 %v3474, %v3766
        %v3768 = vpop.f32.mrb[0].mxu0
        %v3769 = vpop.f32.mrb[0].mxu0
        %v3770 = vadd.f32 %v3474, %v3769
        %v3771 = vpop.f32.mrb[0].mxu0
        %3772 = vmatprep.mubr.bf16.mxu0 %v1310
        %3773 = vmatmul.mubr.bf16.gmra.mrb[0].mxu0 %v1309
        %v3774 = vpop.f32.mrb[0].mxu0
        %v3775 = vadd.f32 %v3474, %v3774
        %v3776 = vpop.f32.mrb[0].mxu0
        %v3777 = vpop.f32.mrb[0].mxu0
        %v3778 = vadd.f32 %v3474, %v3777
        %v3779 = vpop.f32.mrb[0].mxu0
        %3780 = vdwg.mxu0
        %3781 = vmatprep.subr.bf16.mxu0 0
        %3782 = vmatpush1.bf16.msra.mxu0 %v3588
        %3783 = vmatprep.subr.bf16.mxu0 0
        %3784 = vmatpush1.bf16.msra.mxu0 %v3589
        %3785 = vmatprep.subr.bf16.mxu0 0
        %3786 = vmatpush1.bf16.msra.mxu0 %v3590
        %3787 = vmatprep.subr.bf16.mxu0 0
        %3788 = vmatpush1.bf16.msra.mxu0 %v3591
        %3789 = vmatprep.subr.bf16.mxu0 0
        %3790 = vmatpush1.bf16.msra.mxu0 %v3592
        %3791 = vmatprep.subr.bf16.mxu0 0
        %3792 = vmatpush1.bf16.msra.mxu0 %v3593
        %3793 = vmatprep.subr.bf16.mxu0 0
        %3794 = vmatpush1.bf16.msra.mxu0 %v3594
        %3795 = vmatprep.subr.bf16.mxu0 0
        %3796 = vmatpush1.bf16.msra.mxu0 %v3595
        %3797 = vmatprep.subr.bf16.mxu0 0
        %3798 = vmatpush1.bf16.msra.mxu0 0
        %3799 = vmatprep.subr.bf16.mxu0 0
        %3800 = vmatpush1.bf16.msra.mxu0 0
        %3801 = vmatprep.subr.bf16.mxu0 0
        %3802 = vmatpush1.bf16.msra.mxu0 0
        %3803 = vmatprep.subr.bf16.mxu0 0
        %3804 = vmatpush1.bf16.msra.mxu0 0
        %3805 = vmatprep.subr.bf16.mxu0 0
        %3806 = vmatpush1.bf16.msra.mxu0 0
        %3807 = vmatprep.subr.bf16.mxu0 0
        %3808 = vmatpush1.bf16.msra.mxu0 0
        %3809 = vmatprep.subr.bf16.mxu0 0
        %3810 = vmatpush1.bf16.msra.mxu0 0
        %3811 = vmatprep.subr.bf16.mxu0 0
        %3812 = vmatpush1.bf16.msra.mxu0 0
        %3813 = vmatprep.mubr.bf16.mxu0 0
        %3814 = vmatmul.mubr.bf16.gmra.mrb[0].mxu0 %v1266
        %v3815 = vpop.f32.mrb[0].mxu0
        %v3816 = vadd.f32 %v3655, %v3815
        %v3817 = vpop.f32.mrb[0].mxu0
        %v3818 = vpop.f32.mrb[0].mxu0
        %v3819 = vadd.f32 %v3658, %v3818
        %v3820 = vpop.f32.mrb[0].mxu0
        %3821 = vmatprep.mubr.bf16.mxu0 0
        %3822 = vmatmul.mubr.bf16.gmra.mrb[0].mxu0 %v1269
        %v3823 = vpop.f32.mrb[0].mxu0
        %v3824 = vadd.f32 %v3663, %v3823
        %v3825 = vpop.f32.mrb[0].mxu0
        %v3826 = vpop.f32.mrb[0].mxu0
        %v3827 = vadd.f32 %v3666, %v3826
        %v3828 = vpop.f32.mrb[0].mxu0
        %3829 = vmatprep.mubr.bf16.mxu0 0
        %3830 = vmatmul.mubr.bf16.gmra.mrb[0].mxu0 %v1272
        %v3831 = vpop.f32.mrb[0].mxu0
        %v3832 = vadd.f32 %v3671, %v3831
        %v3833 = vpop.f32.mrb[0].mxu0
        %v3834 = vpop.f32.mrb[0].mxu0
        %v3835 = vadd.f32 %v3674, %v3834
        %v3836 = vpop.f32.mrb[0].mxu0
        %3837 = vmatprep.mubr.bf16.mxu0 0
        %3838 = vmatmul.mubr.bf16.gmra.mrb[0].mxu0 %v1275
        %v3839 = vpop.f32.mrb[0].mxu0
        %v3840 = vadd.f32 %v3679, %v3839
        %v3841 = vpop.f32.mrb[0].mxu0
        %v3842 = vpop.f32.mrb[0].mxu0
        %v3843 = vadd.f32 %v3682, %v3842
        %v3844 = vpop.f32.mrb[0].mxu0
        %3845 = vmatprep.mubr.bf16.mxu0 0
        %3846 = vmatmul.mubr.bf16.gmra.mrb[0].mxu0 %v1278
        %v3847 = vpop.f32.mrb[0].mxu0
        %v3848 = vadd.f32 %v3687, %v3847
        %v3849 = vpop.f32.mrb[0].mxu0
        %v3850 = vpop.f32.mrb[0].mxu0
        %v3851 = vadd.f32 %v3690, %v3850
        %v3852 = vpop.f32.mrb[0].mxu0
        %3853 = vmatprep.mubr.bf16.mxu0 0
        %3854 = vmatmul.mubr.bf16.gmra.mrb[0].mxu0 %v1281
        %v3855 = vpop.f32.mrb[0].mxu0
        %v3856 = vadd.f32 %v3695, %v3855
        %v3857 = vpop.f32.mrb[0].mxu0
        %v3858 = vpop.f32.mrb[0].mxu0
        %v3859 = vadd.f32 %v3698, %v3858
        %v3860 = vpop.f32.mrb[0].mxu0
        %3861 = vmatprep.mubr.bf16.mxu0 0
        %3862 = vmatmul.mubr.bf16.gmra.mrb[0].mxu0 %v1284
        %v3863 = vpop.f32.mrb[0].mxu0
        %v3864 = vadd.f32 %v3703, %v3863
        %v3865 = vpop.f32.mrb[0].mxu0
        %v3866 = vpop.f32.mrb[0].mxu0
        %v3867 = vadd.f32 %v3706, %v3866
        %v3868 = vpop.f32.mrb[0].mxu0
        %3869 = vmatprep.mubr.bf16.mxu0 0
        %3870 = vmatmul.mubr.bf16.gmra.mrb[0].mxu0 %v1287
        %v3871 = vpop.f32.mrb[0].mxu0
        %v3872 = vadd.f32 %v3711, %v3871
        %v3873 = vpop.f32.mrb[0].mxu0
        %v3874 = vpop.f32.mrb[0].mxu0
        %v3875 = vadd.f32 %v3714, %v3874
        %v3876 = vpop.f32.mrb[0].mxu0
        %3877 = vmatprep.mubr.bf16.mxu0 0
        %3878 = vmatmul.mubr.bf16.gmra.mrb[0].mxu0 %v1290
        %v3879 = vpop.f32.mrb[0].mxu0
        %v3880 = vadd.f32 %v3719, %v3879
        %v3881 = vpop.f32.mrb[0].mxu0
        %v3882 = vpop.f32.mrb[0].mxu0
        %v3883 = vadd.f32 %v3722, %v3882
        %v3884 = vpop.f32.mrb[0].mxu0
        %3885 = vmatprep.mubr.bf16.mxu0 0
        %3886 = vmatmul.mubr.bf16.gmra.mrb[0].mxu0 %v1293
        %v3887 = vpop.f32.mrb[0].mxu0
        %v3888 = vadd.f32 %v3727, %v3887
        %v3889 = vpop.f32.mrb[0].mxu0
        %v3890 = vpop.f32.mrb[0].mxu0
        %v3891 = vadd.f32 %v3730, %v3890
        %v3892 = vpop.f32.mrb[0].mxu0
        %3893 = vmatprep.mubr.bf16.mxu0 0
        %3894 = vmatmul.mubr.bf16.gmra.mrb[0].mxu0 %v1296
        %v3895 = vpop.f32.mrb[0].mxu0
        %v3896 = vadd.f32 %v3735, %v3895
        %v3897 = vpop.f32.mrb[0].mxu0
        %v3898 = vpop.f32.mrb[0].mxu0
        %v3899 = vadd.f32 %v3738, %v3898
        %v3900 = vpop.f32.mrb[0].mxu0
        %3901 = vmatprep.mubr.bf16.mxu0 0
        %3902 = vmatmul.mubr.bf16.gmra.mrb[0].mxu0 %v1299
        %v3903 = vpop.f32.mrb[0].mxu0
        %v3904 = vadd.f32 %v3743, %v3903
        %v3905 = vpop.f32.mrb[0].mxu0
        %v3906 = vpop.f32.mrb[0].mxu0
        %v3907 = vadd.f32 %v3746, %v3906
        %v3908 = vpop.f32.mrb[0].mxu0
        %3909 = vmatprep.mubr.bf16.mxu0 0
        %3910 = vmatmul.mubr.bf16.gmra.mrb[0].mxu0 %v1302
        %v3911 = vpop.f32.mrb[0].mxu0
        %v3912 = vadd.f32 %v3751, %v3911
        %v3913 = vpop.f32.mrb[0].mxu0
        %v3914 = vpop.f32.mrb[0].mxu0
        %v3915 = vadd.f32 %v3754, %v3914
        %v3916 = vpop.f32.mrb[0].mxu0
        %3917 = vmatprep.mubr.bf16.mxu0 0
        %3918 = vmatmul.mubr.bf16.gmra.mrb[0].mxu0 %v1305
        %v3919 = vpop.f32.mrb[0].mxu0
        %v3920 = vadd.f32 %v3759, %v3919
        %v3921 = vpop.f32.mrb[0].mxu0
        %v3922 = vpop.f32.mrb[0].mxu0
        %v3923 = vadd.f32 %v3762, %v3922
        %v3924 = vpop.f32.mrb[0].mxu0
        %3925 = vmatprep.mubr.bf16.mxu0 0
        %3926 = vmatmul.mubr.bf16.gmra.mrb[0].mxu0 %v1308
        %v3927 = vpop.f32.mrb[0].mxu0
        %v3928 = vadd.f32 %v3767, %v3927
        %v3929 = vpop.f32.mrb[0].mxu0
        %v3930 = vpop.f32.mrb[0].mxu0
        %v3931 = vadd.f32 %v3770, %v3930
        %v3932 = vpop.f32.mrb[0].mxu0
        %3933 = vmatprep.mubr.bf16.mxu0 0
        %3934 = vmatmul.mubr.bf16.gmra.mrb[0].mxu0 %v1311
        %v3935 = vpop.f32.mrb[0].mxu0
        %v3936 = vadd.f32 %v3775, %v3935
        %v3937 = vpop.f32.mrb[0].mxu0
        %v3938 = vpop.f32.mrb[0].mxu0
        %v3939 = vadd.f32 %v3778, %v3938
        %v3940 = vpop.f32.mrb[0].mxu0
        %3941 = vdwg.mxu0
        %v3942 = vmax.f32 %v3816, 0.0
        %v3943 = vmax.f32 %v3819, 0.0
        %v3944 = vmax.f32 %v3824, 0.0
        %v3945 = vmax.f32 %v3827, 0.0
        %v3946 = vmax.f32 %v3832, 0.0
        %v3947 = vmax.f32 %v3835, 0.0
        %v3948 = vmax.f32 %v3840, 0.0
        %v3949 = vmax.f32 %v3843, 0.0
        %v3950 = vmax.f32 %v3848, 0.0
        %v3951 = vmax.f32 %v3851, 0.0
        %v3952 = vmax.f32 %v3856, 0.0
        %v3953 = vmax.f32 %v3859, 0.0
        %v3954 = vmax.f32 %v3864, 0.0
        %v3955 = vmax.f32 %v3867, 0.0
        %v3956 = vmax.f32 %v3872, 0.0
        %v3957 = vmax.f32 %v3875, 0.0
        %v3958 = vmax.f32 %v3880, 0.0
        %v3959 = vmax.f32 %v3883, 0.0
        %v3960 = vmax.f32 %v3888, 0.0
        %v3961 = vmax.f32 %v3891, 0.0
        %v3962 = vmax.f32 %v3896, 0.0
        %v3963 = vmax.f32 %v3899, 0.0
        %v3964 = vmax.f32 %v3904, 0.0
        %v3965 = vmax.f32 %v3907, 0.0
        %v3966 = vmax.f32 %v3912, 0.0
        %v3967 = vmax.f32 %v3915, 0.0
        %v3968 = vmax.f32 %v3920, 0.0
        %v3969 = vmax.f32 %v3923, 0.0
        %v3970 = vmax.f32 %v3928, 0.0
        %v3971 = vmax.f32 %v3931, 0.0
        %v3972 = vmax.f32 %v3936, 0.0
        %v3973 = vmax.f32 %v3939, 0.0
        %v4006 = vrot.slane %v3942, 1
        %v4007 = vrot.slane %v3943, 1
        %v4008 = vsel %vm1068, %v4006, %v4007
        %v4009 = vrot.slane %v3944, 1
        %v4010 = vsel %vm1068, %v4007, %v4009
        %v4011 = vrot.slane %v3945, 1
        %v4012 = vsel %vm1068, %v4009, %v4011
        %v4013 = vrot.slane %v3946, 1
        %v4014 = vsel %vm1068, %v4011, %v4013
        %v4015 = vrot.slane %v3947, 1
        %v4016 = vsel %vm1068, %v4013, %v4015
        %v4017 = vrot.slane %v3948, 1
        %v4018 = vsel %vm1068, %v4015, %v4017
        %v4019 = vrot.slane %v3949, 1
        %v4020 = vsel %vm1068, %v4017, %v4019
        %v4021 = vrot.slane %v3950, 1
        %v4022 = vsel %vm1068, %v4019, %v4021
        %v4023 = vrot.slane %v3951, 1
        %v4024 = vsel %vm1068, %v4021, %v4023
        %v4025 = vrot.slane %v3952, 1
        %v4026 = vsel %vm1068, %v4023, %v4025
        %v4027 = vrot.slane %v3953, 1
        %v4028 = vsel %vm1068, %v4025, %v4027
        %v4029 = vrot.slane %v3954, 1
        %v4030 = vsel %vm1068, %v4027, %v4029
        %v4031 = vrot.slane %v3955, 1
        %v4032 = vsel %vm1068, %v4029, %v4031
        %v4033 = vrot.slane %v3956, 1
        %v4034 = vsel %vm1068, %v4031, %v4033
        %v4035 = vrot.slane %v3957, 1
        %v4036 = vsel %vm1068, %v4033, %v4035
        %v4037 = vrot.slane %v3958, 1
        %v4038 = vsel %vm1068, %v4035, %v4037
        %v4039 = vrot.slane %v3959, 1
        %v4040 = vsel %vm1068, %v4037, %v4039
        %v4041 = vrot.slane %v3960, 1
        %v4042 = vsel %vm1068, %v4039, %v4041
        %v4043 = vrot.slane %v3961, 1
        %v4044 = vsel %vm1068, %v4041, %v4043
        %v4045 = vrot.slane %v3962, 1
        %v4046 = vsel %vm1068, %v4043, %v4045
        %v4047 = vrot.slane %v3963, 1
        %v4048 = vsel %vm1068, %v4045, %v4047
        %v4049 = vrot.slane %v3964, 1
        %v4050 = vsel %vm1068, %v4047, %v4049
        %v4051 = vrot.slane %v3965, 1
        %v4052 = vsel %vm1068, %v4049, %v4051
        %v4053 = vrot.slane %v3966, 1
        %v4054 = vsel %vm1068, %v4051, %v4053
        %v4055 = vrot.slane %v3967, 1
        %v4056 = vsel %vm1068, %v4053, %v4055
        %v4057 = vrot.slane %v3968, 1
        %v4058 = vsel %vm1068, %v4055, %v4057
        %v4059 = vrot.slane %v3969, 1
        %v4060 = vsel %vm1068, %v4057, %v4059
        %v4061 = vrot.slane %v3970, 1
        %v4062 = vsel %vm1068, %v4059, %v4061
        %v4063 = vrot.slane %v3971, 1
        %v4064 = vsel %vm1068, %v4061, %v4063
        %v4065 = vrot.slane %v3972, 1
        %v4066 = vsel %vm1068, %v4063, %v4065
        %v4067 = vrot.slane %v3973, 1
        %v4068 = vsel %vm1068, %v4065, %v4067
        %v4069 = vsel %vm1068, %v4067, %v1132
        %v4102 = vrot.slane %v3942, 2
        %v4103 = vrot.slane %v3943, 2
        %v4104 = vsel %vm1166, %v4102, %v4103
        %v4105 = vrot.slane %v3944, 2
        %v4106 = vsel %vm1166, %v4103, %v4105
        %v4107 = vrot.slane %v3945, 2
        %v4108 = vsel %vm1166, %v4105, %v4107
        %v4109 = vrot.slane %v3946, 2
        %v4110 = vsel %vm1166, %v4107, %v4109
        %v4111 = vrot.slane %v3947, 2
        %v4112 = vsel %vm1166, %v4109, %v4111
        %v4113 = vrot.slane %v3948, 2
        %v4114 = vsel %vm1166, %v4111, %v4113
        %v4115 = vrot.slane %v3949, 2
        %v4116 = vsel %vm1166, %v4113, %v4115
        %v4117 = vrot.slane %v3950, 2
        %v4118 = vsel %vm1166, %v4115, %v4117
        %v4119 = vrot.slane %v3951, 2
        %v4120 = vsel %vm1166, %v4117, %v4119
        %v4121 = vrot.slane %v3952, 2
        %v4122 = vsel %vm1166, %v4119, %v4121
        %v4123 = vrot.slane %v3953, 2
        %v4124 = vsel %vm1166, %v4121, %v4123
        %v4125 = vrot.slane %v3954, 2
        %v4126 = vsel %vm1166, %v4123, %v4125
        %v4127 = vrot.slane %v3955, 2
        %v4128 = vsel %vm1166, %v4125, %v4127
        %v4129 = vrot.slane %v3956, 2
        %v4130 = vsel %vm1166, %v4127, %v4129
        %v4131 = vrot.slane %v3957, 2
        %v4132 = vsel %vm1166, %v4129, %v4131
        %v4133 = vrot.slane %v3958, 2
        %v4134 = vsel %vm1166, %v4131, %v4133
        %v4135 = vrot.slane %v3959, 2
        %v4136 = vsel %vm1166, %v4133, %v4135
        %v4137 = vrot.slane %v3960, 2
        %v4138 = vsel %vm1166, %v4135, %v4137
        %v4139 = vrot.slane %v3961, 2
        %v4140 = vsel %vm1166, %v4137, %v4139
        %v4141 = vrot.slane %v3962, 2
        %v4142 = vsel %vm1166, %v4139, %v4141
        %v4143 = vrot.slane %v3963, 2
        %v4144 = vsel %vm1166, %v4141, %v4143
        %v4145 = vrot.slane %v3964, 2
        %v4146 = vsel %vm1166, %v4143, %v4145
        %v4147 = vrot.slane %v3965, 2
        %v4148 = vsel %vm1166, %v4145, %v4147
        %v4149 = vrot.slane %v3966, 2
        %v4150 = vsel %vm1166, %v4147, %v4149
        %v4151 = vrot.slane %v3967, 2
        %v4152 = vsel %vm1166, %v4149, %v4151
        %v4153 = vrot.slane %v3968, 2
        %v4154 = vsel %vm1166, %v4151, %v4153
        %v4155 = vrot.slane %v3969, 2
        %v4156 = vsel %vm1166, %v4153, %v4155
        %v4157 = vrot.slane %v3970, 2
        %v4158 = vsel %vm1166, %v4155, %v4157
        %v4159 = vrot.slane %v3971, 2
        %v4160 = vsel %vm1166, %v4157, %v4159
        %v4161 = vrot.slane %v3972, 2
        %v4162 = vsel %vm1166, %v4159, %v4161
        %v4163 = vrot.slane %v3973, 2
        %v4164 = vsel %vm1166, %v4161, %v4163
        %v4165 = vsel %vm1166, %v4163, %v1230
        %v4198 = vpack.c.bf16 %v3943, %v3942
        %v4199 = vpack.c.bf16 %v4010, %v4008
        %v4200 = vpack.c.bf16 %v4106, %v4104
        %v4201 = vpack.c.bf16 %v3945, %v3944
        %v4202 = vpack.c.bf16 %v4014, %v4012
        %v4203 = vpack.c.bf16 %v4110, %v4108
        %v4204 = vpack.c.bf16 %v3947, %v3946
        %v4205 = vpack.c.bf16 %v4018, %v4016
        %v4206 = vpack.c.bf16 %v4114, %v4112
        %v4207 = vpack.c.bf16 %v3949, %v3948
        %v4208 = vpack.c.bf16 %v4022, %v4020
        %v4209 = vpack.c.bf16 %v4118, %v4116
        %v4210 = vpack.c.bf16 %v3951, %v3950
        %v4211 = vpack.c.bf16 %v4026, %v4024
        %v4212 = vpack.c.bf16 %v4122, %v4120
        %v4213 = vpack.c.bf16 %v3953, %v3952
        %v4214 = vpack.c.bf16 %v4030, %v4028
        %v4215 = vpack.c.bf16 %v4126, %v4124
        %v4216 = vpack.c.bf16 %v3955, %v3954
        %v4217 = vpack.c.bf16 %v4034, %v4032
        %v4218 = vpack.c.bf16 %v4130, %v4128
        %v4219 = vpack.c.bf16 %v3957, %v3956
        %v4220 = vpack.c.bf16 %v4038, %v4036
        %v4221 = vpack.c.bf16 %v4134, %v4132
        %v4222 = vpack.c.bf16 %v3959, %v3958
        %v4223 = vpack.c.bf16 %v4042, %v4040
        %v4224 = vpack.c.bf16 %v4138, %v4136
        %v4225 = vpack.c.bf16 %v3961, %v3960
        %v4226 = vpack.c.bf16 %v4046, %v4044
        %v4227 = vpack.c.bf16 %v4142, %v4140
        %v4228 = vpack.c.bf16 %v3963, %v3962
        %v4229 = vpack.c.bf16 %v4050, %v4048
        %v4230 = vpack.c.bf16 %v4146, %v4144
        %v4231 = vpack.c.bf16 %v3965, %v3964
        %v4232 = vpack.c.bf16 %v4054, %v4052
        %v4233 = vpack.c.bf16 %v4150, %v4148
        %v4234 = vpack.c.bf16 %v3967, %v3966
        %v4235 = vpack.c.bf16 %v4058, %v4056
        %v4236 = vpack.c.bf16 %v4154, %v4152
        %v4237 = vpack.c.bf16 %v3969, %v3968
        %v4238 = vpack.c.bf16 %v4062, %v4060
        %v4239 = vpack.c.bf16 %v4158, %v4156
        %v4240 = vpack.c.bf16 %v3971, %v3970
        %v4241 = vpack.c.bf16 %v4066, %v4064
        %v4242 = vpack.c.bf16 %v4162, %v4160
        %v4243 = vpack.c.bf16 %v3973, %v3972
        %v4244 = vpack.c.bf16 %v4069, %v4068
        %v4245 = vpack.c.bf16 %v4165, %v4164
        %v4246 = vld [vmem:[#allocation7] sm:$0xf]
        %v4247 = vld [vmem:[#allocation7 + $0x4] sm:$0xf]
        %v4248 = vld [vmem:[#allocation7 + $0x8] sm:$0xf]
        %v4249 = vld [vmem:[#allocation7 + $0xc] sm:$0xf]
        %v4250 = vld [vmem:[#allocation7 + $0x10] sm:$0xf]
        %v4251 = vld [vmem:[#allocation7 + $0x14] sm:$0xf]
        %v4252 = vld [vmem:[#allocation7 + $0x18] sm:$0xf]
        %v4253 = vld [vmem:[#allocation7 + $0x1c] sm:$0xf]
        %v4254 = vld [vmem:[#allocation7 + $0x20] sm:$0xf]
        %v4255 = vld [vmem:[#allocation7 + $0x24] sm:$0xf]
        %v4256 = vld [vmem:[#allocation7 + $0x28] sm:$0xf]
        %v4257 = vld [vmem:[#allocation7 + $0x2c] sm:$0xf]
        %v4258 = vld [vmem:[#allocation7 + $0x30] sm:$0xf]
        %v4259 = vld [vmem:[#allocation7 + $0x34] sm:$0xf]
        %v4260 = vld [vmem:[#allocation7 + $0x38] sm:$0xf]
        %v4261 = vld [vmem:[#allocation7 + $0x3c] sm:$0xf]
        %v4262 = vld [vmem:[#allocation7 + $0x40] sm:$0xf]
        %v4263 = vld [vmem:[#allocation7 + $0x44] sm:$0xf]
        %v4264 = vld [vmem:[#allocation7 + $0x48] sm:$0xf]
        %v4265 = vld [vmem:[#allocation7 + $0x4c] sm:$0xf]
        %v4266 = vld [vmem:[#allocation7 + $0x50] sm:$0xf]
        %v4267 = vld [vmem:[#allocation7 + $0x54] sm:$0xf]
        %v4268 = vld [vmem:[#allocation7 + $0x58] sm:$0xf]
        %v4269 = vld [vmem:[#allocation7 + $0x5c] sm:$0xf]
        %v4270 = vld [vmem:[#allocation7 + $0x60] sm:$0xf]
        %v4271 = vld [vmem:[#allocation7 + $0x64] sm:$0xf]
        %v4272 = vld [vmem:[#allocation7 + $0x68] sm:$0xf]
        %v4273 = vld [vmem:[#allocation7 + $0x6c] sm:$0xf]
        %v4274 = vld [vmem:[#allocation7 + $0x70] sm:$0xf]
        %v4275 = vld [vmem:[#allocation7 + $0x74] sm:$0xf]
        %v4276 = vld [vmem:[#allocation7 + $0x78] sm:$0xf]
        %v4277 = vld [vmem:[#allocation7 + $0x7c] sm:$0xf]
        %v4278 = vld [vmem:[#allocation7 + $0x80] sm:$0xf]
        %v4279 = vld [vmem:[#allocation7 + $0x84] sm:$0xf]
        %v4280 = vld [vmem:[#allocation7 + $0x88] sm:$0xf]
        %v4281 = vld [vmem:[#allocation7 + $0x8c] sm:$0xf]
        %v4282 = vld [vmem:[#allocation7 + $0x90] sm:$0xf]
        %v4283 = vld [vmem:[#allocation7 + $0x94] sm:$0xf]
        %v4284 = vld [vmem:[#allocation7 + $0x98] sm:$0xf]
        %v4285 = vld [vmem:[#allocation7 + $0x9c] sm:$0xf]
        %v4286 = vld [vmem:[#allocation7 + $0xa0] sm:$0xf]
        %v4287 = vld [vmem:[#allocation7 + $0xa4] sm:$0xf]
        %v4288 = vld [vmem:[#allocation7 + $0xa8] sm:$0xf]
        %v4289 = vld [vmem:[#allocation7 + $0xac] sm:$0xf]
        %v4290 = vld [vmem:[#allocation7 + $0xb0] sm:$0xf]
        %v4291 = vld [vmem:[#allocation7 + $0xb4] sm:$0xf]
        %v4292 = vld [vmem:[#allocation7 + $0xb8] sm:$0xf]
        %v4293 = vld [vmem:[#allocation7 + $0xbc] sm:$0xf]
        %v4294 = vld [vmem:[%s11] sm:$0x1]
        %v4296 = vlaneseq
        %v4297 = vshrl.u32 %v4296, 7
        %v4298 = vsub.s32 0, %v4297
        %v4299 = vrot.slane %v4294, %v4298
        %v4349 = vunpack.c.l.b16 %v4246
        %v4350 = vunpack.c.l.b16 %v4247
        %v4351 = vunpack.c.l.b16 %v4248
        %v4352 = vunpack.c.l.b16 %v4249
        %v4353 = vunpack.c.l.b16 %v4250
        %v4354 = vunpack.c.l.b16 %v4251
        %v4355 = vunpack.c.l.b16 %v4252
        %v4356 = vunpack.c.l.b16 %v4253
        %v4357 = vunpack.c.l.b16 %v4254
        %v4358 = vunpack.c.l.b16 %v4255
        %v4359 = vunpack.c.l.b16 %v4256
        %v4360 = vunpack.c.l.b16 %v4257
        %v4361 = vunpack.c.l.b16 %v4258
        %v4362 = vunpack.c.l.b16 %v4259
        %v4363 = vunpack.c.l.b16 %v4260
        %v4364 = vunpack.c.l.b16 %v4261
        %v4365 = vunpack.c.l.b16 %v4262
        %v4366 = vunpack.c.l.b16 %v4263
        %v4367 = vunpack.c.l.b16 %v4264
        %v4368 = vunpack.c.l.b16 %v4265
        %v4369 = vunpack.c.l.b16 %v4266
        %v4370 = vunpack.c.l.b16 %v4267
        %v4371 = vunpack.c.l.b16 %v4268
        %v4372 = vunpack.c.l.b16 %v4269
        %v4373 = vunpack.c.l.b16 %v4270
        %v4374 = vunpack.c.l.b16 %v4271
        %v4375 = vunpack.c.l.b16 %v4272
        %v4376 = vunpack.c.l.b16 %v4273
        %v4377 = vunpack.c.l.b16 %v4274
        %v4378 = vunpack.c.l.b16 %v4275
        %v4379 = vunpack.c.l.b16 %v4276
        %v4380 = vunpack.c.l.b16 %v4277
        %v4381 = vunpack.c.l.b16 %v4278
        %v4382 = vunpack.c.l.b16 %v4279
        %v4383 = vunpack.c.l.b16 %v4280
        %v4384 = vunpack.c.l.b16 %v4281
        %v4385 = vunpack.c.l.b16 %v4282
        %v4386 = vunpack.c.l.b16 %v4283
        %v4387 = vunpack.c.l.b16 %v4284
        %v4388 = vunpack.c.l.b16 %v4285
        %v4389 = vunpack.c.l.b16 %v4286
        %v4390 = vunpack.c.l.b16 %v4287
        %v4391 = vunpack.c.l.b16 %v4288
        %v4392 = vunpack.c.l.b16 %v4289
        %v4393 = vunpack.c.l.b16 %v4290
        %v4394 = vunpack.c.l.b16 %v4291
        %v4395 = vunpack.c.l.b16 %v4292
        %v4396 = vunpack.c.l.b16 %v4293
        %v4397 = vpack.c.b16 %v4350, %v4349
        %v4398 = vpack.c.b16 %v4352, %v4351
        %v4399 = vpack.c.b16 %v4354, %v4353
        %v4400 = vpack.c.b16 %v4356, %v4355
        %v4401 = vpack.c.b16 %v4358, %v4357
        %v4402 = vpack.c.b16 %v4360, %v4359
        %v4403 = vpack.c.b16 %v4362, %v4361
        %v4404 = vpack.c.b16 %v4364, %v4363
        %v4405 = vpack.c.b16 %v4366, %v4365
        %v4406 = vpack.c.b16 %v4368, %v4367
        %v4407 = vpack.c.b16 %v4370, %v4369
        %v4408 = vpack.c.b16 %v4372, %v4371
        %v4409 = vpack.c.b16 %v4374, %v4373
        %v4410 = vpack.c.b16 %v4376, %v4375
        %v4411 = vpack.c.b16 %v4378, %v4377
        %v4412 = vpack.c.b16 %v4380, %v4379
        %v4413 = vpack.c.b16 %v4382, %v4381
        %v4414 = vpack.c.b16 %v4384, %v4383
        %v4415 = vpack.c.b16 %v4386, %v4385
        %v4416 = vpack.c.b16 %v4388, %v4387
        %v4417 = vpack.c.b16 %v4390, %v4389
        %v4418 = vpack.c.b16 %v4392, %v4391
        %v4419 = vpack.c.b16 %v4394, %v4393
        %v4420 = vpack.c.b16 %v4396, %v4395
        %4445 = vmatprep.subr.bf16.mxu0 0
        %4446 = vmatpush1.bf16.msra.mxu0 %v4397
        %4447 = vmatprep.subr.bf16.mxu0 0
        %4448 = vmatpush1.bf16.msra.mxu0 %v4398
        %4449 = vmatprep.subr.bf16.mxu0 0
        %4450 = vmatpush1.bf16.msra.mxu0 %v4399
        %4451 = vmatprep.subr.bf16.mxu0 0
        %4452 = vmatpush1.bf16.msra.mxu0 %v4400
        %4453 = vmatprep.subr.bf16.mxu0 0
        %4454 = vmatpush1.bf16.msra.mxu0 %v4401
        %4455 = vmatprep.subr.bf16.mxu0 0
        %4456 = vmatpush1.bf16.msra.mxu0 %v4402
        %4457 = vmatprep.subr.bf16.mxu0 0
        %4458 = vmatpush1.bf16.msra.mxu0 %v4403
        %4459 = vmatprep.subr.bf16.mxu0 0
        %4460 = vmatpush1.bf16.msra.mxu0 %v4404
        %4461 = vmatprep.subr.bf16.mxu0 0
        %4462 = vmatpush1.bf16.msra.mxu0 %v4405
        %4463 = vmatprep.subr.bf16.mxu0 0
        %4464 = vmatpush1.bf16.msra.mxu0 %v4406
        %4465 = vmatprep.subr.bf16.mxu0 0
        %4466 = vmatpush1.bf16.msra.mxu0 %v4407
        %4467 = vmatprep.subr.bf16.mxu0 0
        %4468 = vmatpush1.bf16.msra.mxu0 %v4408
        %4469 = vmatprep.subr.bf16.mxu0 0
        %4470 = vmatpush1.bf16.msra.mxu0 %v4409
        %4471 = vmatprep.subr.bf16.mxu0 0
        %4472 = vmatpush1.bf16.msra.mxu0 %v4410
        %4473 = vmatprep.subr.bf16.mxu0 0
        %4474 = vmatpush1.bf16.msra.mxu0 %v4411
        %4475 = vmatprep.subr.bf16.mxu0 0
        %4476 = vmatpush1.bf16.msra.mxu0 %v4412
        %4477 = vmatprep.mubr.bf16.mxu0 %v4199
        %4478 = vmatmul.mubr.bf16.gmra.mrb[0].mxu0 %v4198
        %v4479 = vpop.f32.mrb[0].mxu0
        %v4480 = vadd.f32 %v4299, %v4479
        %v4481 = vpop.f32.mrb[0].mxu0
        %v4482 = vpop.f32.mrb[0].mxu0
        %v4483 = vadd.f32 %v4299, %v4482
        %v4484 = vpop.f32.mrb[0].mxu0
        %4485 = vmatprep.mubr.bf16.mxu0 %v4202
        %4486 = vmatmul.mubr.bf16.gmra.mrb[0].mxu0 %v4201
        %v4487 = vpop.f32.mrb[0].mxu0
        %v4488 = vadd.f32 %v4299, %v4487
        %v4489 = vpop.f32.mrb[0].mxu0
        %v4490 = vpop.f32.mrb[0].mxu0
        %v4491 = vadd.f32 %v4299, %v4490
        %v4492 = vpop.f32.mrb[0].mxu0
        %4493 = vmatprep.mubr.bf16.mxu0 %v4205
        %4494 = vmatmul.mubr.bf16.gmra.mrb[0].mxu0 %v4204
        %v4495 = vpop.f32.mrb[0].mxu0
        %v4496 = vadd.f32 %v4299, %v4495
        %v4497 = vpop.f32.mrb[0].mxu0
        %v4498 = vpop.f32.mrb[0].mxu0
        %v4499 = vadd.f32 %v4299, %v4498
        %v4500 = vpop.f32.mrb[0].mxu0
        %4501 = vmatprep.mubr.bf16.mxu0 %v4208
        %4502 = vmatmul.mubr.bf16.gmra.mrb[0].mxu0 %v4207
        %v4503 = vpop.f32.mrb[0].mxu0
        %v4504 = vadd.f32 %v4299, %v4503
        %v4505 = vpop.f32.mrb[0].mxu0
        %v4506 = vpop.f32.mrb[0].mxu0
        %v4507 = vadd.f32 %v4299, %v4506
        %v4508 = vpop.f32.mrb[0].mxu0
        %4509 = vmatprep.mubr.bf16.mxu0 %v4211
        %4510 = vmatmul.mubr.bf16.gmra.mrb[0].mxu0 %v4210
        %v4511 = vpop.f32.mrb[0].mxu0
        %v4512 = vadd.f32 %v4299, %v4511
        %v4513 = vpop.f32.mrb[0].mxu0
        %v4514 = vpop.f32.mrb[0].mxu0
        %v4515 = vadd.f32 %v4299, %v4514
        %v4516 = vpop.f32.mrb[0].mxu0
        %4517 = vmatprep.mubr.bf16.mxu0 %v4214
        %4518 = vmatmul.mubr.bf16.gmra.mrb[0].mxu0 %v4213
        %v4519 = vpop.f32.mrb[0].mxu0
        %v4520 = vadd.f32 %v4299, %v4519
        %v4521 = vpop.f32.mrb[0].mxu0
        %v4522 = vpop.f32.mrb[0].mxu0
        %v4523 = vadd.f32 %v4299, %v4522
        %v4524 = vpop.f32.mrb[0].mxu0
        %4525 = vmatprep.mubr.bf16.mxu0 %v4217
        %4526 = vmatmul.mubr.bf16.gmra.mrb[0].mxu0 %v4216
        %v4527 = vpop.f32.mrb[0].mxu0
        %v4528 = vadd.f32 %v4299, %v4527
        %v4529 = vpop.f32.mrb[0].mxu0
        %v4530 = vpop.f32.mrb[0].mxu0
        %v4531 = vadd.f32 %v4299, %v4530
        %v4532 = vpop.f32.mrb[0].mxu0
        %4533 = vmatprep.mubr.bf16.mxu0 %v4220
        %4534 = vmatmul.mubr.bf16.gmra.mrb[0].mxu0 %v4219
        %v4535 = vpop.f32.mrb[0].mxu0
        %v4536 = vadd.f32 %v4299, %v4535
        %v4537 = vpop.f32.mrb[0].mxu0
        %v4538 = vpop.f32.mrb[0].mxu0
        %v4539 = vadd.f32 %v4299, %v4538
        %v4540 = vpop.f32.mrb[0].mxu0
        %4541 = vmatprep.mubr.bf16.mxu0 %v4223
        %4542 = vmatmul.mubr.bf16.gmra.mrb[0].mxu0 %v4222
        %v4543 = vpop.f32.mrb[0].mxu0
        %v4544 = vadd.f32 %v4299, %v4543
        %v4545 = vpop.f32.mrb[0].mxu0
        %v4546 = vpop.f32.mrb[0].mxu0
        %v4547 = vadd.f32 %v4299, %v4546
        %v4548 = vpop.f32.mrb[0].mxu0
        %4549 = vmatprep.mubr.bf16.mxu0 %v4226
        %4550 = vmatmul.mubr.bf16.gmra.mrb[0].mxu0 %v4225
        %v4551 = vpop.f32.mrb[0].mxu0
        %v4552 = vadd.f32 %v4299, %v4551
        %v4553 = vpop.f32.mrb[0].mxu0
        %v4554 = vpop.f32.mrb[0].mxu0
        %v4555 = vadd.f32 %v4299, %v4554
        %v4556 = vpop.f32.mrb[0].mxu0
        %4557 = vmatprep.mubr.bf16.mxu0 %v4229
        %4558 = vmatmul.mubr.bf16.gmra.mrb[0].mxu0 %v4228
        %v4559 = vpop.f32.mrb[0].mxu0
        %v4560 = vadd.f32 %v4299, %v4559
        %v4561 = vpop.f32.mrb[0].mxu0
        %v4562 = vpop.f32.mrb[0].mxu0
        %v4563 = vadd.f32 %v4299, %v4562
        %v4564 = vpop.f32.mrb[0].mxu0
        %4565 = vmatprep.mubr.bf16.mxu0 %v4232
        %4566 = vmatmul.mubr.bf16.gmra.mrb[0].mxu0 %v4231
        %v4567 = vpop.f32.mrb[0].mxu0
        %v4568 = vadd.f32 %v4299, %v4567
        %v4569 = vpop.f32.mrb[0].mxu0
        %v4570 = vpop.f32.mrb[0].mxu0
        %v4571 = vadd.f32 %v4299, %v4570
        %v4572 = vpop.f32.mrb[0].mxu0
        %4573 = vmatprep.mubr.bf16.mxu0 %v4235
        %4574 = vmatmul.mubr.bf16.gmra.mrb[0].mxu0 %v4234
        %v4575 = vpop.f32.mrb[0].mxu0
        %v4576 = vadd.f32 %v4299, %v4575
        %v4577 = vpop.f32.mrb[0].mxu0
        %v4578 = vpop.f32.mrb[0].mxu0
        %v4579 = vadd.f32 %v4299, %v4578
        %v4580 = vpop.f32.mrb[0].mxu0
        %4581 = vmatprep.mubr.bf16.mxu0 %v4238
        %4582 = vmatmul.mubr.bf16.gmra.mrb[0].mxu0 %v4237
        %v4583 = vpop.f32.mrb[0].mxu0
        %v4584 = vadd.f32 %v4299, %v4583
        %v4585 = vpop.f32.mrb[0].mxu0
        %v4586 = vpop.f32.mrb[0].mxu0
        %v4587 = vadd.f32 %v4299, %v4586
        %v4588 = vpop.f32.mrb[0].mxu0
        %4589 = vmatprep.mubr.bf16.mxu0 %v4241
        %4590 = vmatmul.mubr.bf16.gmra.mrb[0].mxu0 %v4240
        %v4591 = vpop.f32.mrb[0].mxu0
        %v4592 = vadd.f32 %v4299, %v4591
        %v4593 = vpop.f32.mrb[0].mxu0
        %v4594 = vpop.f32.mrb[0].mxu0
        %v4595 = vadd.f32 %v4299, %v4594
        %v4596 = vpop.f32.mrb[0].mxu0
        %4597 = vmatprep.mubr.bf16.mxu0 %v4244
        %4598 = vmatmul.mubr.bf16.gmra.mrb[0].mxu0 %v4243
        %v4599 = vpop.f32.mrb[0].mxu0
        %v4600 = vadd.f32 %v4299, %v4599
        %v4601 = vpop.f32.mrb[0].mxu0
        %v4602 = vpop.f32.mrb[0].mxu0
        %v4603 = vadd.f32 %v4299, %v4602
        %v4604 = vpop.f32.mrb[0].mxu0
        %4605 = vdwg.mxu0
        %4606 = vmatprep.subr.bf16.mxu0 0
        %4607 = vmatpush1.bf16.msra.mxu0 %v4413
        %4608 = vmatprep.subr.bf16.mxu0 0
        %4609 = vmatpush1.bf16.msra.mxu0 %v4414
        %4610 = vmatprep.subr.bf16.mxu0 0
        %4611 = vmatpush1.bf16.msra.mxu0 %v4415
        %4612 = vmatprep.subr.bf16.mxu0 0
        %4613 = vmatpush1.bf16.msra.mxu0 %v4416
        %4614 = vmatprep.subr.bf16.mxu0 0
        %4615 = vmatpush1.bf16.msra.mxu0 %v4417
        %4616 = vmatprep.subr.bf16.mxu0 0
        %4617 = vmatpush1.bf16.msra.mxu0 %v4418
        %4618 = vmatprep.subr.bf16.mxu0 0
        %4619 = vmatpush1.bf16.msra.mxu0 %v4419
        %4620 = vmatprep.subr.bf16.mxu0 0
        %4621 = vmatpush1.bf16.msra.mxu0 %v4420
        %4622 = vmatprep.subr.bf16.mxu0 0
        %4623 = vmatpush1.bf16.msra.mxu0 0
        %4624 = vmatprep.subr.bf16.mxu0 0
        %4625 = vmatpush1.bf16.msra.mxu0 0
        %4626 = vmatprep.subr.bf16.mxu0 0
        %4627 = vmatpush1.bf16.msra.mxu0 0
        %4628 = vmatprep.subr.bf16.mxu0 0
        %4629 = vmatpush1.bf16.msra.mxu0 0
        %4630 = vmatprep.subr.bf16.mxu0 0
        %4631 = vmatpush1.bf16.msra.mxu0 0
        %4632 = vmatprep.subr.bf16.mxu0 0
        %4633 = vmatpush1.bf16.msra.mxu0 0
        %4634 = vmatprep.subr.bf16.mxu0 0
        %4635 = vmatpush1.bf16.msra.mxu0 0
        %4636 = vmatprep.subr.bf16.mxu0 0
        %4637 = vmatpush1.bf16.msra.mxu0 0
        %4638 = vmatprep.mubr.bf16.mxu0 0
        %4639 = vmatmul.mubr.bf16.gmra.mrb[0].mxu0 %v4200
        %v4640 = vpop.f32.mrb[0].mxu0
        %v4641 = vadd.f32 %v4480, %v4640
        %v4642 = vpop.f32.mrb[0].mxu0
        %v4643 = vpop.f32.mrb[0].mxu0
        %v4644 = vadd.f32 %v4483, %v4643
        %v4645 = vpop.f32.mrb[0].mxu0
        %4646 = vmatprep.mubr.bf16.mxu0 0
        %4647 = vmatmul.mubr.bf16.gmra.mrb[0].mxu0 %v4203
        %v4648 = vpop.f32.mrb[0].mxu0
        %v4649 = vadd.f32 %v4488, %v4648
        %v4650 = vpop.f32.mrb[0].mxu0
        %v4651 = vpop.f32.mrb[0].mxu0
        %v4652 = vadd.f32 %v4491, %v4651
        %v4653 = vpop.f32.mrb[0].mxu0
        %4654 = vmatprep.mubr.bf16.mxu0 0
        %4655 = vmatmul.mubr.bf16.gmra.mrb[0].mxu0 %v4206
        %v4656 = vpop.f32.mrb[0].mxu0
        %v4657 = vadd.f32 %v4496, %v4656
        %v4658 = vpop.f32.mrb[0].mxu0
        %v4659 = vpop.f32.mrb[0].mxu0
        %v4660 = vadd.f32 %v4499, %v4659
        %v4661 = vpop.f32.mrb[0].mxu0
        %4662 = vmatprep.mubr.bf16.mxu0 0
        %4663 = vmatmul.mubr.bf16.gmra.mrb[0].mxu0 %v4209
        %v4664 = vpop.f32.mrb[0].mxu0
        %v4665 = vadd.f32 %v4504, %v4664
        %v4666 = vpop.f32.mrb[0].mxu0
        %v4667 = vpop.f32.mrb[0].mxu0
        %v4668 = vadd.f32 %v4507, %v4667
        %v4669 = vpop.f32.mrb[0].mxu0
        %4670 = vmatprep.mubr.bf16.mxu0 0
        %4671 = vmatmul.mubr.bf16.gmra.mrb[0].mxu0 %v4212
        %v4672 = vpop.f32.mrb[0].mxu0
        %v4673 = vadd.f32 %v4512, %v4672
        %v4674 = vpop.f32.mrb[0].mxu0
        %v4675 = vpop.f32.mrb[0].mxu0
        %v4676 = vadd.f32 %v4515, %v4675
        %v4677 = vpop.f32.mrb[0].mxu0
        %4678 = vmatprep.mubr.bf16.mxu0 0
        %4679 = vmatmul.mubr.bf16.gmra.mrb[0].mxu0 %v4215
        %v4680 = vpop.f32.mrb[0].mxu0
        %v4681 = vadd.f32 %v4520, %v4680
        %v4682 = vpop.f32.mrb[0].mxu0
        %v4683 = vpop.f32.mrb[0].mxu0
        %v4684 = vadd.f32 %v4523, %v4683
        %v4685 = vpop.f32.mrb[0].mxu0
        %4686 = vmatprep.mubr.bf16.mxu0 0
        %4687 = vmatmul.mubr.bf16.gmra.mrb[0].mxu0 %v4218
        %v4688 = vpop.f32.mrb[0].mxu0
        %v4689 = vadd.f32 %v4528, %v4688
        %v4690 = vpop.f32.mrb[0].mxu0
        %v4691 = vpop.f32.mrb[0].mxu0
        %v4692 = vadd.f32 %v4531, %v4691
        %v4693 = vpop.f32.mrb[0].mxu0
        %4694 = vmatprep.mubr.bf16.mxu0 0
        %4695 = vmatmul.mubr.bf16.gmra.mrb[0].mxu0 %v4221
        %v4696 = vpop.f32.mrb[0].mxu0
        %v4697 = vadd.f32 %v4536, %v4696
        %v4698 = vpop.f32.mrb[0].mxu0
        %v4699 = vpop.f32.mrb[0].mxu0
        %v4700 = vadd.f32 %v4539, %v4699
        %v4701 = vpop.f32.mrb[0].mxu0
        %4702 = vmatprep.mubr.bf16.mxu0 0
        %4703 = vmatmul.mubr.bf16.gmra.mrb[0].mxu0 %v4224
        %v4704 = vpop.f32.mrb[0].mxu0
        %v4705 = vadd.f32 %v4544, %v4704
        %v4706 = vpop.f32.mrb[0].mxu0
        %v4707 = vpop.f32.mrb[0].mxu0
        %v4708 = vadd.f32 %v4547, %v4707
        %v4709 = vpop.f32.mrb[0].mxu0
        %4710 = vmatprep.mubr.bf16.mxu0 0
        %4711 = vmatmul.mubr.bf16.gmra.mrb[0].mxu0 %v4227
        %v4712 = vpop.f32.mrb[0].mxu0
        %v4713 = vadd.f32 %v4552, %v4712
        %v4714 = vpop.f32.mrb[0].mxu0
        %v4715 = vpop.f32.mrb[0].mxu0
        %v4716 = vadd.f32 %v4555, %v4715
        %v4717 = vpop.f32.mrb[0].mxu0
        %4718 = vmatprep.mubr.bf16.mxu0 0
        %4719 = vmatmul.mubr.bf16.gmra.mrb[0].mxu0 %v4230
        %v4720 = vpop.f32.mrb[0].mxu0
        %v4721 = vadd.f32 %v4560, %v4720
        %v4722 = vpop.f32.mrb[0].mxu0
        %v4723 = vpop.f32.mrb[0].mxu0
        %v4724 = vadd.f32 %v4563, %v4723
        %v4725 = vpop.f32.mrb[0].mxu0
        %4726 = vmatprep.mubr.bf16.mxu0 0
        %4727 = vmatmul.mubr.bf16.gmra.mrb[0].mxu0 %v4233
        %v4728 = vpop.f32.mrb[0].mxu0
        %v4729 = vadd.f32 %v4568, %v4728
        %v4730 = vpop.f32.mrb[0].mxu0
        %v4731 = vpop.f32.mrb[0].mxu0
        %v4732 = vadd.f32 %v4571, %v4731
        %v4733 = vpop.f32.mrb[0].mxu0
        %4734 = vmatprep.mubr.bf16.mxu0 0
        %4735 = vmatmul.mubr.bf16.gmra.mrb[0].mxu0 %v4236
        %v4736 = vpop.f32.mrb[0].mxu0
        %v4737 = vadd.f32 %v4576, %v4736
        %v4738 = vpop.f32.mrb[0].mxu0
        %v4739 = vpop.f32.mrb[0].mxu0
        %v4740 = vadd.f32 %v4579, %v4739
        %v4741 = vpop.f32.mrb[0].mxu0
        %4742 = vmatprep.mubr.bf16.mxu0 0
        %4743 = vmatmul.mubr.bf16.gmra.mrb[0].mxu0 %v4239
        %v4744 = vpop.f32.mrb[0].mxu0
        %v4745 = vadd.f32 %v4584, %v4744
        %v4746 = vpop.f32.mrb[0].mxu0
        %v4747 = vpop.f32.mrb[0].mxu0
        %v4748 = vadd.f32 %v4587, %v4747
        %v4749 = vpop.f32.mrb[0].mxu0
        %4750 = vmatprep.mubr.bf16.mxu0 0
        %4751 = vmatmul.mubr.bf16.gmra.mrb[0].mxu0 %v4242
        %v4752 = vpop.f32.mrb[0].mxu0
        %v4753 = vadd.f32 %v4592, %v4752
        %v4754 = vpop.f32.mrb[0].mxu0
        %v4755 = vpop.f32.mrb[0].mxu0
        %v4756 = vadd.f32 %v4595, %v4755
        %v4757 = vpop.f32.mrb[0].mxu0
        %4758 = vmatprep.mubr.bf16.mxu0 0
        %4759 = vmatmul.mubr.bf16.gmra.mrb[0].mxu0 %v4245
        %v4760 = vpop.f32.mrb[0].mxu0
        %v4761 = vadd.f32 %v4600, %v4760
        %v4762 = vpop.f32.mrb[0].mxu0
        %v4763 = vpop.f32.mrb[0].mxu0
        %v4764 = vadd.f32 %v4603, %v4763
        %v4765 = vpop.f32.mrb[0].mxu0
        %4766 = vdwg.mxu0
        %v4767 = vmax.f32 %v4641, 0.0
        %v4768 = vmax.f32 %v4644, 0.0
        %v4769 = vmax.f32 %v4649, 0.0
        %v4770 = vmax.f32 %v4652, 0.0
        %v4771 = vmax.f32 %v4657, 0.0
        %v4772 = vmax.f32 %v4660, 0.0
        %v4773 = vmax.f32 %v4665, 0.0
        %v4774 = vmax.f32 %v4668, 0.0
        %v4775 = vmax.f32 %v4673, 0.0
        %v4776 = vmax.f32 %v4676, 0.0
        %v4777 = vmax.f32 %v4681, 0.0
        %v4778 = vmax.f32 %v4684, 0.0
        %v4779 = vmax.f32 %v4689, 0.0
        %v4780 = vmax.f32 %v4692, 0.0
        %v4781 = vmax.f32 %v4697, 0.0
        %v4782 = vmax.f32 %v4700, 0.0
        %v4783 = vmax.f32 %v4705, 0.0
        %v4784 = vmax.f32 %v4708, 0.0
        %v4785 = vmax.f32 %v4713, 0.0
        %v4786 = vmax.f32 %v4716, 0.0
        %v4787 = vmax.f32 %v4721, 0.0
        %v4788 = vmax.f32 %v4724, 0.0
        %v4789 = vmax.f32 %v4729, 0.0
        %v4790 = vmax.f32 %v4732, 0.0
        %v4791 = vmax.f32 %v4737, 0.0
        %v4792 = vmax.f32 %v4740, 0.0
        %v4793 = vmax.f32 %v4745, 0.0
        %v4794 = vmax.f32 %v4748, 0.0
        %v4795 = vmax.f32 %v4753, 0.0
        %v4796 = vmax.f32 %v4756, 0.0
        %v4797 = vmax.f32 %v4761, 0.0
        %v4798 = vmax.f32 %v4764, 0.0
        %v4831 = vrot.slane %v4767, 1
        %v4832 = vrot.slane %v4768, 1
        %v4833 = vsel %vm1068, %v4831, %v4832
        %v4834 = vrot.slane %v4769, 1
        %v4835 = vsel %vm1068, %v4832, %v4834
        %v4836 = vrot.slane %v4770, 1
        %v4837 = vsel %vm1068, %v4834, %v4836
        %v4838 = vrot.slane %v4771, 1
        %v4839 = vsel %vm1068, %v4836, %v4838
        %v4840 = vrot.slane %v4772, 1
        %v4841 = vsel %vm1068, %v4838, %v4840
        %v4842 = vrot.slane %v4773, 1
        %v4843 = vsel %vm1068, %v4840, %v4842
        %v4844 = vrot.slane %v4774, 1
        %v4845 = vsel %vm1068, %v4842, %v4844
        %v4846 = vrot.slane %v4775, 1
        %v4847 = vsel %vm1068, %v4844, %v4846
        %v4848 = vrot.slane %v4776, 1
        %v4849 = vsel %vm1068, %v4846, %v4848
        %v4850 = vrot.slane %v4777, 1
        %v4851 = vsel %vm1068, %v4848, %v4850
        %v4852 = vrot.slane %v4778, 1
        %v4853 = vsel %vm1068, %v4850, %v4852
        %v4854 = vrot.slane %v4779, 1
        %v4855 = vsel %vm1068, %v4852, %v4854
        %v4856 = vrot.slane %v4780, 1
        %v4857 = vsel %vm1068, %v4854, %v4856
        %v4858 = vrot.slane %v4781, 1
        %v4859 = vsel %vm1068, %v4856, %v4858
        %v4860 = vrot.slane %v4782, 1
        %v4861 = vsel %vm1068, %v4858, %v4860
        %v4862 = vrot.slane %v4783, 1
        %v4863 = vsel %vm1068, %v4860, %v4862
        %v4864 = vrot.slane %v4784, 1
        %v4865 = vsel %vm1068, %v4862, %v4864
        %v4866 = vrot.slane %v4785, 1
        %v4867 = vsel %vm1068, %v4864, %v4866
        %v4868 = vrot.slane %v4786, 1
        %v4869 = vsel %vm1068, %v4866, %v4868
        %v4870 = vrot.slane %v4787, 1
        %v4871 = vsel %vm1068, %v4868, %v4870
        %v4872 = vrot.slane %v4788, 1
        %v4873 = vsel %vm1068, %v4870, %v4872
        %v4874 = vrot.slane %v4789, 1
        %v4875 = vsel %vm1068, %v4872, %v4874
        %v4876 = vrot.slane %v4790, 1
        %v4877 = vsel %vm1068, %v4874, %v4876
        %v4878 = vrot.slane %v4791, 1
        %v4879 = vsel %vm1068, %v4876, %v4878
        %v4880 = vrot.slane %v4792, 1
        %v4881 = vsel %vm1068, %v4878, %v4880
        %v4882 = vrot.slane %v4793, 1
        %v4883 = vsel %vm1068, %v4880, %v4882
        %v4884 = vrot.slane %v4794, 1
        %v4885 = vsel %vm1068, %v4882, %v4884
        %v4886 = vrot.slane %v4795, 1
        %v4887 = vsel %vm1068, %v4884, %v4886
        %v4888 = vrot.slane %v4796, 1
        %v4889 = vsel %vm1068, %v4886, %v4888
        %v4890 = vrot.slane %v4797, 1
        %v4891 = vsel %vm1068, %v4888, %v4890
        %v4892 = vrot.slane %v4798, 1
        %v4893 = vsel %vm1068, %v4890, %v4892
        %v4894 = vsel %vm1068, %v4892, %v1132
        %v4927 = vrot.slane %v4767, 2
        %v4928 = vrot.slane %v4768, 2
        %v4929 = vsel %vm1166, %v4927, %v4928
        %v4930 = vrot.slane %v4769, 2
        %v4931 = vsel %vm1166, %v4928, %v4930
        %v4932 = vrot.slane %v4770, 2
        %v4933 = vsel %vm1166, %v4930, %v4932
        %v4934 = vrot.slane %v4771, 2
        %v4935 = vsel %vm1166, %v4932, %v4934
        %v4936 = vrot.slane %v4772, 2
        %v4937 = vsel %vm1166, %v4934, %v4936
        %v4938 = vrot.slane %v4773, 2
        %v4939 = vsel %vm1166, %v4936, %v4938
        %v4940 = vrot.slane %v4774, 2
        %v4941 = vsel %vm1166, %v4938, %v4940
        %v4942 = vrot.slane %v4775, 2
        %v4943 = vsel %vm1166, %v4940, %v4942
        %v4944 = vrot.slane %v4776, 2
        %v4945 = vsel %vm1166, %v4942, %v4944
        %v4946 = vrot.slane %v4777, 2
        %v4947 = vsel %vm1166, %v4944, %v4946
        %v4948 = vrot.slane %v4778, 2
        %v4949 = vsel %vm1166, %v4946, %v4948
        %v4950 = vrot.slane %v4779, 2
        %v4951 = vsel %vm1166, %v4948, %v4950
        %v4952 = vrot.slane %v4780, 2
        %v4953 = vsel %vm1166, %v4950, %v4952
        %v4954 = vrot.slane %v4781, 2
        %v4955 = vsel %vm1166, %v4952, %v4954
        %v4956 = vrot.slane %v4782, 2
        %v4957 = vsel %vm1166, %v4954, %v4956
        %v4958 = vrot.slane %v4783, 2
        %v4959 = vsel %vm1166, %v4956, %v4958
        %v4960 = vrot.slane %v4784, 2
        %v4961 = vsel %vm1166, %v4958, %v4960
        %v4962 = vrot.slane %v4785, 2
        %v4963 = vsel %vm1166, %v4960, %v4962
        %v4964 = vrot.slane %v4786, 2
        %v4965 = vsel %vm1166, %v4962, %v4964
        %v4966 = vrot.slane %v4787, 2
        %v4967 = vsel %vm1166, %v4964, %v4966
        %v4968 = vrot.slane %v4788, 2
        %v4969 = vsel %vm1166, %v4966, %v4968
        %v4970 = vrot.slane %v4789, 2
        %v4971 = vsel %vm1166, %v4968, %v4970
        %v4972 = vrot.slane %v4790, 2
        %v4973 = vsel %vm1166, %v4970, %v4972
        %v4974 = vrot.slane %v4791, 2
        %v4975 = vsel %vm1166, %v4972, %v4974
        %v4976 = vrot.slane %v4792, 2
        %v4977 = vsel %vm1166, %v4974, %v4976
        %v4978 = vrot.slane %v4793, 2
        %v4979 = vsel %vm1166, %v4976, %v4978
        %v4980 = vrot.slane %v4794, 2
        %v4981 = vsel %vm1166, %v4978, %v4980
        %v4982 = vrot.slane %v4795, 2
        %v4983 = vsel %vm1166, %v4980, %v4982
        %v4984 = vrot.slane %v4796, 2
        %v4985 = vsel %vm1166, %v4982, %v4984
        %v4986 = vrot.slane %v4797, 2
        %v4987 = vsel %vm1166, %v4984, %v4986
        %v4988 = vrot.slane %v4798, 2
        %v4989 = vsel %vm1166, %v4986, %v4988
        %v4990 = vsel %vm1166, %v4988, %v1230
        %v5023 = vpack.c.bf16 %v4768, %v4767
        %v5024 = vpack.c.bf16 %v4835, %v4833
        %v5025 = vpack.c.bf16 %v4931, %v4929
        %v5026 = vpack.c.bf16 %v4770, %v4769
        %v5027 = vpack.c.bf16 %v4839, %v4837
        %v5028 = vpack.c.bf16 %v4935, %v4933
        %v5029 = vpack.c.bf16 %v4772, %v4771
        %v5030 = vpack.c.bf16 %v4843, %v4841
        %v5031 = vpack.c.bf16 %v4939, %v4937
        %v5032 = vpack.c.bf16 %v4774, %v4773
        %v5033 = vpack.c.bf16 %v4847, %v4845
        %v5034 = vpack.c.bf16 %v4943, %v4941
        %v5035 = vpack.c.bf16 %v4776, %v4775
        %v5036 = vpack.c.bf16 %v4851, %v4849
        %v5037 = vpack.c.bf16 %v4947, %v4945
        %v5038 = vpack.c.bf16 %v4778, %v4777
        %v5039 = vpack.c.bf16 %v4855, %v4853
        %v5040 = vpack.c.bf16 %v4951, %v4949
        %v5041 = vpack.c.bf16 %v4780, %v4779
        %v5042 = vpack.c.bf16 %v4859, %v4857
        %v5043 = vpack.c.bf16 %v4955, %v4953
        %v5044 = vpack.c.bf16 %v4782, %v4781
        %v5045 = vpack.c.bf16 %v4863, %v4861
        %v5046 = vpack.c.bf16 %v4959, %v4957
        %v5047 = vpack.c.bf16 %v4784, %v4783
        %v5048 = vpack.c.bf16 %v4867, %v4865
        %v5049 = vpack.c.bf16 %v4963, %v4961
        %v5050 = vpack.c.bf16 %v4786, %v4785
        %v5051 = vpack.c.bf16 %v4871, %v4869
        %v5052 = vpack.c.bf16 %v4967, %v4965
        %v5053 = vpack.c.bf16 %v4788, %v4787
        %v5054 = vpack.c.bf16 %v4875, %v4873
        %v5055 = vpack.c.bf16 %v4971, %v4969
        %v5056 = vpack.c.bf16 %v4790, %v4789
        %v5057 = vpack.c.bf16 %v4879, %v4877
        %v5058 = vpack.c.bf16 %v4975, %v4973
        %v5059 = vpack.c.bf16 %v4792, %v4791
        %v5060 = vpack.c.bf16 %v4883, %v4881
        %v5061 = vpack.c.bf16 %v4979, %v4977
        %v5062 = vpack.c.bf16 %v4794, %v4793
        %v5063 = vpack.c.bf16 %v4887, %v4885
        %v5064 = vpack.c.bf16 %v4983, %v4981
        %v5065 = vpack.c.bf16 %v4796, %v4795
        %v5066 = vpack.c.bf16 %v4891, %v4889
        %v5067 = vpack.c.bf16 %v4987, %v4985
        %v5068 = vpack.c.bf16 %v4798, %v4797
        %v5069 = vpack.c.bf16 %v4894, %v4893
        %v5070 = vpack.c.bf16 %v4990, %v4989
        %v5071 = vld [vmem:[#allocation8] sm:$0xf]
        %v5072 = vld [vmem:[#allocation8 + $0x4] sm:$0xf]
        %v5073 = vld [vmem:[#allocation8 + $0x8] sm:$0xf]
        %v5074 = vld [vmem:[#allocation8 + $0xc] sm:$0xf]
        %v5075 = vld [vmem:[#allocation8 + $0x10] sm:$0xf]
        %v5076 = vld [vmem:[#allocation8 + $0x14] sm:$0xf]
        %v5077 = vld [vmem:[#allocation8 + $0x18] sm:$0xf]
        %v5078 = vld [vmem:[#allocation8 + $0x1c] sm:$0xf]
        %v5079 = vld [vmem:[#allocation8 + $0x20] sm:$0xf]
        %v5080 = vld [vmem:[#allocation8 + $0x24] sm:$0xf]
        %v5081 = vld [vmem:[#allocation8 + $0x28] sm:$0xf]
        %v5082 = vld [vmem:[#allocation8 + $0x2c] sm:$0xf]
        %v5083 = vld [vmem:[#allocation8 + $0x30] sm:$0xf]
        %v5084 = vld [vmem:[#allocation8 + $0x34] sm:$0xf]
        %v5085 = vld [vmem:[#allocation8 + $0x38] sm:$0xf]
        %v5086 = vld [vmem:[#allocation8 + $0x3c] sm:$0xf]
        %v5087 = vld [vmem:[#allocation8 + $0x40] sm:$0xf]
        %v5088 = vld [vmem:[#allocation8 + $0x44] sm:$0xf]
        %v5089 = vld [vmem:[#allocation8 + $0x48] sm:$0xf]
        %v5090 = vld [vmem:[#allocation8 + $0x4c] sm:$0xf]
        %v5091 = vld [vmem:[#allocation8 + $0x50] sm:$0xf]
        %v5092 = vld [vmem:[#allocation8 + $0x54] sm:$0xf]
        %v5093 = vld [vmem:[#allocation8 + $0x58] sm:$0xf]
        %v5094 = vld [vmem:[#allocation8 + $0x5c] sm:$0xf]
        %v5095 = vld [vmem:[#allocation8 + $0x60] sm:$0xf]
        %v5096 = vld [vmem:[#allocation8 + $0x64] sm:$0xf]
        %v5097 = vld [vmem:[#allocation8 + $0x68] sm:$0xf]
        %v5098 = vld [vmem:[#allocation8 + $0x6c] sm:$0xf]
        %v5099 = vld [vmem:[#allocation8 + $0x70] sm:$0xf]
        %v5100 = vld [vmem:[#allocation8 + $0x74] sm:$0xf]
        %v5101 = vld [vmem:[#allocation8 + $0x78] sm:$0xf]
        %v5102 = vld [vmem:[#allocation8 + $0x7c] sm:$0xf]
        %v5103 = vld [vmem:[#allocation8 + $0x80] sm:$0xf]
        %v5104 = vld [vmem:[#allocation8 + $0x84] sm:$0xf]
        %v5105 = vld [vmem:[#allocation8 + $0x88] sm:$0xf]
        %v5106 = vld [vmem:[#allocation8 + $0x8c] sm:$0xf]
        %v5107 = vld [vmem:[#allocation8 + $0x90] sm:$0xf]
        %v5108 = vld [vmem:[#allocation8 + $0x94] sm:$0xf]
        %v5109 = vld [vmem:[#allocation8 + $0x98] sm:$0xf]
        %v5110 = vld [vmem:[#allocation8 + $0x9c] sm:$0xf]
        %v5111 = vld [vmem:[#allocation8 + $0xa0] sm:$0xf]
        %v5112 = vld [vmem:[#allocation8 + $0xa4] sm:$0xf]
        %v5113 = vld [vmem:[#allocation8 + $0xa8] sm:$0xf]
        %v5114 = vld [vmem:[#allocation8 + $0xac] sm:$0xf]
        %v5115 = vld [vmem:[#allocation8 + $0xb0] sm:$0xf]
        %v5116 = vld [vmem:[#allocation8 + $0xb4] sm:$0xf]
        %v5117 = vld [vmem:[#allocation8 + $0xb8] sm:$0xf]
        %v5118 = vld [vmem:[#allocation8 + $0xbc] sm:$0xf]
        %v5119 = vld [vmem:[%s13] sm:$0x1]
        %v5121 = vlaneseq
        %v5122 = vshrl.u32 %v5121, 7
        %v5123 = vsub.s32 0, %v5122
        %v5124 = vrot.slane %v5119, %v5123
        %v5174 = vunpack.c.l.b16 %v5071
        %v5175 = vunpack.c.l.b16 %v5072
        %v5176 = vunpack.c.l.b16 %v5073
        %v5177 = vunpack.c.l.b16 %v5074
        %v5178 = vunpack.c.l.b16 %v5075
        %v5179 = vunpack.c.l.b16 %v5076
        %v5180 = vunpack.c.l.b16 %v5077
        %v5181 = vunpack.c.l.b16 %v5078
        %v5182 = vunpack.c.l.b16 %v5079
        %v5183 = vunpack.c.l.b16 %v5080
        %v5184 = vunpack.c.l.b16 %v5081
        %v5185 = vunpack.c.l.b16 %v5082
        %v5186 = vunpack.c.l.b16 %v5083
        %v5187 = vunpack.c.l.b16 %v5084
        %v5188 = vunpack.c.l.b16 %v5085
        %v5189 = vunpack.c.l.b16 %v5086
        %v5190 = vunpack.c.l.b16 %v5087
        %v5191 = vunpack.c.l.b16 %v5088
        %v5192 = vunpack.c.l.b16 %v5089
        %v5193 = vunpack.c.l.b16 %v5090
        %v5194 = vunpack.c.l.b16 %v5091
        %v5195 = vunpack.c.l.b16 %v5092
        %v5196 = vunpack.c.l.b16 %v5093
        %v5197 = vunpack.c.l.b16 %v5094
        %v5198 = vunpack.c.l.b16 %v5095
        %v5199 = vunpack.c.l.b16 %v5096
        %v5200 = vunpack.c.l.b16 %v5097
        %v5201 = vunpack.c.l.b16 %v5098
        %v5202 = vunpack.c.l.b16 %v5099
        %v5203 = vunpack.c.l.b16 %v5100
        %v5204 = vunpack.c.l.b16 %v5101
        %v5205 = vunpack.c.l.b16 %v5102
        %v5206 = vunpack.c.l.b16 %v5103
        %v5207 = vunpack.c.l.b16 %v5104
        %v5208 = vunpack.c.l.b16 %v5105
        %v5209 = vunpack.c.l.b16 %v5106
        %v5210 = vunpack.c.l.b16 %v5107
        %v5211 = vunpack.c.l.b16 %v5108
        %v5212 = vunpack.c.l.b16 %v5109
        %v5213 = vunpack.c.l.b16 %v5110
        %v5214 = vunpack.c.l.b16 %v5111
        %v5215 = vunpack.c.l.b16 %v5112
        %v5216 = vunpack.c.l.b16 %v5113
        %v5217 = vunpack.c.l.b16 %v5114
        %v5218 = vunpack.c.l.b16 %v5115
        %v5219 = vunpack.c.l.b16 %v5116
        %v5220 = vunpack.c.l.b16 %v5117
        %v5221 = vunpack.c.l.b16 %v5118
        %v5222 = vpack.c.b16 %v5175, %v5174
        %v5223 = vpack.c.b16 %v5177, %v5176
        %v5224 = vpack.c.b16 %v5179, %v5178
        %v5225 = vpack.c.b16 %v5181, %v5180
        %v5226 = vpack.c.b16 %v5183, %v5182
        %v5227 = vpack.c.b16 %v5185, %v5184
        %v5228 = vpack.c.b16 %v5187, %v5186
        %v5229 = vpack.c.b16 %v5189, %v5188
        %v5230 = vpack.c.b16 %v5191, %v5190
        %v5231 = vpack.c.b16 %v5193, %v5192
        %v5232 = vpack.c.b16 %v5195, %v5194
        %v5233 = vpack.c.b16 %v5197, %v5196
        %v5234 = vpack.c.b16 %v5199, %v5198
        %v5235 = vpack.c.b16 %v5201, %v5200
        %v5236 = vpack.c.b16 %v5203, %v5202
        %v5237 = vpack.c.b16 %v5205, %v5204
        %v5238 = vpack.c.b16 %v5207, %v5206
        %v5239 = vpack.c.b16 %v5209, %v5208
        %v5240 = vpack.c.b16 %v5211, %v5210
        %v5241 = vpack.c.b16 %v5213, %v5212
        %v5242 = vpack.c.b16 %v5215, %v5214
        %v5243 = vpack.c.b16 %v5217, %v5216
        %v5244 = vpack.c.b16 %v5219, %v5218
        %v5245 = vpack.c.b16 %v5221, %v5220
        %5270 = vmatprep.subr.bf16.mxu0 0
        %5271 = vmatpush1.bf16.msra.mxu0 %v5222
        %5272 = vmatprep.subr.bf16.mxu0 0
        %5273 = vmatpush1.bf16.msra.mxu0 %v5223
        %5274 = vmatprep.subr.bf16.mxu0 0
        %5275 = vmatpush1.bf16.msra.mxu0 %v5224
        %5276 = vmatprep.subr.bf16.mxu0 0
        %5277 = vmatpush1.bf16.msra.mxu0 %v5225
        %5278 = vmatprep.subr.bf16.mxu0 0
        %5279 = vmatpush1.bf16.msra.mxu0 %v5226
        %5280 = vmatprep.subr.bf16.mxu0 0
        %5281 = vmatpush1.bf16.msra.mxu0 %v5227
        %5282 = vmatprep.subr.bf16.mxu0 0
        %5283 = vmatpush1.bf16.msra.mxu0 %v5228
        %5284 = vmatprep.subr.bf16.mxu0 0
        %5285 = vmatpush1.bf16.msra.mxu0 %v5229
        %5286 = vmatprep.subr.bf16.mxu0 0
        %5287 = vmatpush1.bf16.msra.mxu0 %v5230
        %5288 = vmatprep.subr.bf16.mxu0 0
        %5289 = vmatpush1.bf16.msra.mxu0 %v5231
        %5290 = vmatprep.subr.bf16.mxu0 0
        %5291 = vmatpush1.bf16.msra.mxu0 %v5232
        %5292 = vmatprep.subr.bf16.mxu0 0
        %5293 = vmatpush1.bf16.msra.mxu0 %v5233
        %5294 = vmatprep.subr.bf16.mxu0 0
        %5295 = vmatpush1.bf16.msra.mxu0 %v5234
        %5296 = vmatprep.subr.bf16.mxu0 0
        %5297 = vmatpush1.bf16.msra.mxu0 %v5235
        %5298 = vmatprep.subr.bf16.mxu0 0
        %5299 = vmatpush1.bf16.msra.mxu0 %v5236
        %5300 = vmatprep.subr.bf16.mxu0 0
        %5301 = vmatpush1.bf16.msra.mxu0 %v5237
        %5302 = vmatprep.mubr.bf16.mxu0 %v5024
        %5303 = vmatmul.mubr.bf16.gmra.mrb[0].mxu0 %v5023
        %v5304 = vpop.f32.mrb[0].mxu0
        %v5305 = vadd.f32 %v5124, %v5304
        %v5306 = vpop.f32.mrb[0].mxu0
        %v5307 = vpop.f32.mrb[0].mxu0
        %v5308 = vadd.f32 %v5124, %v5307
        %v5309 = vpop.f32.mrb[0].mxu0
        %5310 = vmatprep.mubr.bf16.mxu0 %v5027
        %5311 = vmatmul.mubr.bf16.gmra.mrb[0].mxu0 %v5026
        %v5312 = vpop.f32.mrb[0].mxu0
        %v5313 = vadd.f32 %v5124, %v5312
        %v5314 = vpop.f32.mrb[0].mxu0
        %v5315 = vpop.f32.mrb[0].mxu0
        %v5316 = vadd.f32 %v5124, %v5315
        %v5317 = vpop.f32.mrb[0].mxu0
        %5318 = vmatprep.mubr.bf16.mxu0 %v5030
        %5319 = vmatmul.mubr.bf16.gmra.mrb[0].mxu0 %v5029
        %v5320 = vpop.f32.mrb[0].mxu0
        %v5321 = vadd.f32 %v5124, %v5320
        %v5322 = vpop.f32.mrb[0].mxu0
        %v5323 = vpop.f32.mrb[0].mxu0
        %v5324 = vadd.f32 %v5124, %v5323
        %v5325 = vpop.f32.mrb[0].mxu0
        %5326 = vmatprep.mubr.bf16.mxu0 %v5033
        %5327 = vmatmul.mubr.bf16.gmra.mrb[0].mxu0 %v5032
        %v5328 = vpop.f32.mrb[0].mxu0
        %v5329 = vadd.f32 %v5124, %v5328
        %v5330 = vpop.f32.mrb[0].mxu0
        %v5331 = vpop.f32.mrb[0].mxu0
        %v5332 = vadd.f32 %v5124, %v5331
        %v5333 = vpop.f32.mrb[0].mxu0
        %5334 = vmatprep.mubr.bf16.mxu0 %v5036
        %5335 = vmatmul.mubr.bf16.gmra.mrb[0].mxu0 %v5035
        %v5336 = vpop.f32.mrb[0].mxu0
        %v5337 = vadd.f32 %v5124, %v5336
        %v5338 = vpop.f32.mrb[0].mxu0
        %v5339 = vpop.f32.mrb[0].mxu0
        %v5340 = vadd.f32 %v5124, %v5339
        %v5341 = vpop.f32.mrb[0].mxu0
        %5342 = vmatprep.mubr.bf16.mxu0 %v5039
        %5343 = vmatmul.mubr.bf16.gmra.mrb[0].mxu0 %v5038
        %v5344 = vpop.f32.mrb[0].mxu0
        %v5345 = vadd.f32 %v5124, %v5344
        %v5346 = vpop.f32.mrb[0].mxu0
        %v5347 = vpop.f32.mrb[0].mxu0
        %v5348 = vadd.f32 %v5124, %v5347
        %v5349 = vpop.f32.mrb[0].mxu0
        %5350 = vmatprep.mubr.bf16.mxu0 %v5042
        %5351 = vmatmul.mubr.bf16.gmra.mrb[0].mxu0 %v5041
        %v5352 = vpop.f32.mrb[0].mxu0
        %v5353 = vadd.f32 %v5124, %v5352
        %v5354 = vpop.f32.mrb[0].mxu0
        %v5355 = vpop.f32.mrb[0].mxu0
        %v5356 = vadd.f32 %v5124, %v5355
        %v5357 = vpop.f32.mrb[0].mxu0
        %5358 = vmatprep.mubr.bf16.mxu0 %v5045
        %5359 = vmatmul.mubr.bf16.gmra.mrb[0].mxu0 %v5044
        %v5360 = vpop.f32.mrb[0].mxu0
        %v5361 = vadd.f32 %v5124, %v5360
        %v5362 = vpop.f32.mrb[0].mxu0
        %v5363 = vpop.f32.mrb[0].mxu0
        %v5364 = vadd.f32 %v5124, %v5363
        %v5365 = vpop.f32.mrb[0].mxu0
        %5366 = vmatprep.mubr.bf16.mxu0 %v5048
        %5367 = vmatmul.mubr.bf16.gmra.mrb[0].mxu0 %v5047
        %v5368 = vpop.f32.mrb[0].mxu0
        %v5369 = vadd.f32 %v5124, %v5368
        %v5370 = vpop.f32.mrb[0].mxu0
        %v5371 = vpop.f32.mrb[0].mxu0
        %v5372 = vadd.f32 %v5124, %v5371
        %v5373 = vpop.f32.mrb[0].mxu0
        %5374 = vmatprep.mubr.bf16.mxu0 %v5051
        %5375 = vmatmul.mubr.bf16.gmra.mrb[0].mxu0 %v5050
        %v5376 = vpop.f32.mrb[0].mxu0
        %v5377 = vadd.f32 %v5124, %v5376
        %v5378 = vpop.f32.mrb[0].mxu0
        %v5379 = vpop.f32.mrb[0].mxu0
        %v5380 = vadd.f32 %v5124, %v5379
        %v5381 = vpop.f32.mrb[0].mxu0
        %5382 = vmatprep.mubr.bf16.mxu0 %v5054
        %5383 = vmatmul.mubr.bf16.gmra.mrb[0].mxu0 %v5053
        %v5384 = vpop.f32.mrb[0].mxu0
        %v5385 = vadd.f32 %v5124, %v5384
        %v5386 = vpop.f32.mrb[0].mxu0
        %v5387 = vpop.f32.mrb[0].mxu0
        %v5388 = vadd.f32 %v5124, %v5387
        %v5389 = vpop.f32.mrb[0].mxu0
        %5390 = vmatprep.mubr.bf16.mxu0 %v5057
        %5391 = vmatmul.mubr.bf16.gmra.mrb[0].mxu0 %v5056
        %v5392 = vpop.f32.mrb[0].mxu0
        %v5393 = vadd.f32 %v5124, %v5392
        %v5394 = vpop.f32.mrb[0].mxu0
        %v5395 = vpop.f32.mrb[0].mxu0
        %v5396 = vadd.f32 %v5124, %v5395
        %v5397 = vpop.f32.mrb[0].mxu0
        %5398 = vmatprep.mubr.bf16.mxu0 %v5060
        %5399 = vmatmul.mubr.bf16.gmra.mrb[0].mxu0 %v5059
        %v5400 = vpop.f32.mrb[0].mxu0
        %v5401 = vadd.f32 %v5124, %v5400
        %v5402 = vpop.f32.mrb[0].mxu0
        %v5403 = vpop.f32.mrb[0].mxu0
        %v5404 = vadd.f32 %v5124, %v5403
        %v5405 = vpop.f32.mrb[0].mxu0
        %5406 = vmatprep.mubr.bf16.mxu0 %v5063
        %5407 = vmatmul.mubr.bf16.gmra.mrb[0].mxu0 %v5062
        %v5408 = vpop.f32.mrb[0].mxu0
        %v5409 = vadd.f32 %v5124, %v5408
        %v5410 = vpop.f32.mrb[0].mxu0
        %v5411 = vpop.f32.mrb[0].mxu0
        %v5412 = vadd.f32 %v5124, %v5411
        %v5413 = vpop.f32.mrb[0].mxu0
        %5414 = vmatprep.mubr.bf16.mxu0 %v5066
        %5415 = vmatmul.mubr.bf16.gmra.mrb[0].mxu0 %v5065
        %v5416 = vpop.f32.mrb[0].mxu0
        %v5417 = vadd.f32 %v5124, %v5416
        %v5418 = vpop.f32.mrb[0].mxu0
        %v5419 = vpop.f32.mrb[0].mxu0
        %v5420 = vadd.f32 %v5124, %v5419
        %v5421 = vpop.f32.mrb[0].mxu0
        %5422 = vmatprep.mubr.bf16.mxu0 %v5069
        %5423 = vmatmul.mubr.bf16.gmra.mrb[0].mxu0 %v5068
        %v5424 = vpop.f32.mrb[0].mxu0
        %v5425 = vadd.f32 %v5124, %v5424
        %v5426 = vpop.f32.mrb[0].mxu0
        %v5427 = vpop.f32.mrb[0].mxu0
        %v5428 = vadd.f32 %v5124, %v5427
        %v5429 = vpop.f32.mrb[0].mxu0
        %5430 = vdwg.mxu0
        %5431 = vmatprep.subr.bf16.mxu0 0
        %5432 = vmatpush1.bf16.msra.mxu0 %v5238
        %5433 = vmatprep.subr.bf16.mxu0 0
        %5434 = vmatpush1.bf16.msra.mxu0 %v5239
        %5435 = vmatprep.subr.bf16.mxu0 0
        %5436 = vmatpush1.bf16.msra.mxu0 %v5240
        %5437 = vmatprep.subr.bf16.mxu0 0
        %5438 = vmatpush1.bf16.msra.mxu0 %v5241
        %5439 = vmatprep.subr.bf16.mxu0 0
        %5440 = vmatpush1.bf16.msra.mxu0 %v5242
        %5441 = vmatprep.subr.bf16.mxu0 0
        %5442 = vmatpush1.bf16.msra.mxu0 %v5243
        %5443 = vmatprep.subr.bf16.mxu0 0
        %5444 = vmatpush1.bf16.msra.mxu0 %v5244
        %5445 = vmatprep.subr.bf16.mxu0 0
        %5446 = vmatpush1.bf16.msra.mxu0 %v5245
        %5447 = vmatprep.subr.bf16.mxu0 0
        %5448 = vmatpush1.bf16.msra.mxu0 0
        %5449 = vmatprep.subr.bf16.mxu0 0
        %5450 = vmatpush1.bf16.msra.mxu0 0
        %5451 = vmatprep.subr.bf16.mxu0 0
        %5452 = vmatpush1.bf16.msra.mxu0 0
        %5453 = vmatprep.subr.bf16.mxu0 0
        %5454 = vmatpush1.bf16.msra.mxu0 0
        %5455 = vmatprep.subr.bf16.mxu0 0
        %5456 = vmatpush1.bf16.msra.mxu0 0
        %5457 = vmatprep.subr.bf16.mxu0 0
        %5458 = vmatpush1.bf16.msra.mxu0 0
        %5459 = vmatprep.subr.bf16.mxu0 0
        %5460 = vmatpush1.bf16.msra.mxu0 0
        %5461 = vmatprep.subr.bf16.mxu0 0
        %5462 = vmatpush1.bf16.msra.mxu0 0
        %5463 = vmatprep.mubr.bf16.mxu0 0
        %5464 = vmatmul.mubr.bf16.gmra.mrb[0].mxu0 %v5025
        %v5465 = vpop.f32.mrb[0].mxu0
        %v5466 = vadd.f32 %v5305, %v5465
        %v5467 = vpop.f32.mrb[0].mxu0
        %v5468 = vpop.f32.mrb[0].mxu0
        %v5469 = vadd.f32 %v5308, %v5468
        %v5470 = vpop.f32.mrb[0].mxu0
        %5471 = vmatprep.mubr.bf16.mxu0 0
        %5472 = vmatmul.mubr.bf16.gmra.mrb[0].mxu0 %v5028
        %v5473 = vpop.f32.mrb[0].mxu0
        %v5474 = vadd.f32 %v5313, %v5473
        %v5475 = vpop.f32.mrb[0].mxu0
        %v5476 = vpop.f32.mrb[0].mxu0
        %v5477 = vadd.f32 %v5316, %v5476
        %v5478 = vpop.f32.mrb[0].mxu0
        %5479 = vmatprep.mubr.bf16.mxu0 0
        %5480 = vmatmul.mubr.bf16.gmra.mrb[0].mxu0 %v5031
        %v5481 = vpop.f32.mrb[0].mxu0
        %v5482 = vadd.f32 %v5321, %v5481
        %v5483 = vpop.f32.mrb[0].mxu0
        %v5484 = vpop.f32.mrb[0].mxu0
        %v5485 = vadd.f32 %v5324, %v5484
        %v5486 = vpop.f32.mrb[0].mxu0
        %5487 = vmatprep.mubr.bf16.mxu0 0
        %5488 = vmatmul.mubr.bf16.gmra.mrb[0].mxu0 %v5034
        %v5489 = vpop.f32.mrb[0].mxu0
        %v5490 = vadd.f32 %v5329, %v5489
        %v5491 = vpop.f32.mrb[0].mxu0
        %v5492 = vpop.f32.mrb[0].mxu0
        %v5493 = vadd.f32 %v5332, %v5492
        %v5494 = vpop.f32.mrb[0].mxu0
        %5495 = vmatprep.mubr.bf16.mxu0 0
        %5496 = vmatmul.mubr.bf16.gmra.mrb[0].mxu0 %v5037
        %v5497 = vpop.f32.mrb[0].mxu0
        %v5498 = vadd.f32 %v5337, %v5497
        %v5499 = vpop.f32.mrb[0].mxu0
        %v5500 = vpop.f32.mrb[0].mxu0
        %v5501 = vadd.f32 %v5340, %v5500
        %v5502 = vpop.f32.mrb[0].mxu0
        %5503 = vmatprep.mubr.bf16.mxu0 0
        %5504 = vmatmul.mubr.bf16.gmra.mrb[0].mxu0 %v5040
        %v5505 = vpop.f32.mrb[0].mxu0
        %v5506 = vadd.f32 %v5345, %v5505
        %v5507 = vpop.f32.mrb[0].mxu0
        %v5508 = vpop.f32.mrb[0].mxu0
        %v5509 = vadd.f32 %v5348, %v5508
        %v5510 = vpop.f32.mrb[0].mxu0
        %5511 = vmatprep.mubr.bf16.mxu0 0
        %5512 = vmatmul.mubr.bf16.gmra.mrb[0].mxu0 %v5043
        %v5513 = vpop.f32.mrb[0].mxu0
        %v5514 = vadd.f32 %v5353, %v5513
        %v5515 = vpop.f32.mrb[0].mxu0
        %v5516 = vpop.f32.mrb[0].mxu0
        %v5517 = vadd.f32 %v5356, %v5516
        %v5518 = vpop.f32.mrb[0].mxu0
        %5519 = vmatprep.mubr.bf16.mxu0 0
        %5520 = vmatmul.mubr.bf16.gmra.mrb[0].mxu0 %v5046
        %v5521 = vpop.f32.mrb[0].mxu0
        %v5522 = vadd.f32 %v5361, %v5521
        %v5523 = vpop.f32.mrb[0].mxu0
        %v5524 = vpop.f32.mrb[0].mxu0
        %v5525 = vadd.f32 %v5364, %v5524
        %v5526 = vpop.f32.mrb[0].mxu0
        %5527 = vmatprep.mubr.bf16.mxu0 0
        %5528 = vmatmul.mubr.bf16.gmra.mrb[0].mxu0 %v5049
        %v5529 = vpop.f32.mrb[0].mxu0
        %v5530 = vadd.f32 %v5369, %v5529
        %v5531 = vpop.f32.mrb[0].mxu0
        %v5532 = vpop.f32.mrb[0].mxu0
        %v5533 = vadd.f32 %v5372, %v5532
        %v5534 = vpop.f32.mrb[0].mxu0
        %5535 = vmatprep.mubr.bf16.mxu0 0
        %5536 = vmatmul.mubr.bf16.gmra.mrb[0].mxu0 %v5052
        %v5537 = vpop.f32.mrb[0].mxu0
        %v5538 = vadd.f32 %v5377, %v5537
        %v5539 = vpop.f32.mrb[0].mxu0
        %v5540 = vpop.f32.mrb[0].mxu0
        %v5541 = vadd.f32 %v5380, %v5540
        %v5542 = vpop.f32.mrb[0].mxu0
        %5543 = vmatprep.mubr.bf16.mxu0 0
        %5544 = vmatmul.mubr.bf16.gmra.mrb[0].mxu0 %v5055
        %v5545 = vpop.f32.mrb[0].mxu0
        %v5546 = vadd.f32 %v5385, %v5545
        %v5547 = vpop.f32.mrb[0].mxu0
        %v5548 = vpop.f32.mrb[0].mxu0
        %v5549 = vadd.f32 %v5388, %v5548
        %v5550 = vpop.f32.mrb[0].mxu0
        %5551 = vmatprep.mubr.bf16.mxu0 0
        %5552 = vmatmul.mubr.bf16.gmra.mrb[0].mxu0 %v5058
        %v5553 = vpop.f32.mrb[0].mxu0
        %v5554 = vadd.f32 %v5393, %v5553
        %v5555 = vpop.f32.mrb[0].mxu0
        %v5556 = vpop.f32.mrb[0].mxu0
        %v5557 = vadd.f32 %v5396, %v5556
        %v5558 = vpop.f32.mrb[0].mxu0
        %5559 = vmatprep.mubr.bf16.mxu0 0
        %5560 = vmatmul.mubr.bf16.gmra.mrb[0].mxu0 %v5061
        %v5561 = vpop.f32.mrb[0].mxu0
        %v5562 = vadd.f32 %v5401, %v5561
        %v5563 = vpop.f32.mrb[0].mxu0
        %v5564 = vpop.f32.mrb[0].mxu0
        %v5565 = vadd.f32 %v5404, %v5564
        %v5566 = vpop.f32.mrb[0].mxu0
        %5567 = vmatprep.mubr.bf16.mxu0 0
        %5568 = vmatmul.mubr.bf16.gmra.mrb[0].mxu0 %v5064
        %v5569 = vpop.f32.mrb[0].mxu0
        %v5570 = vadd.f32 %v5409, %v5569
        %v5571 = vpop.f32.mrb[0].mxu0
        %v5572 = vpop.f32.mrb[0].mxu0
        %v5573 = vadd.f32 %v5412, %v5572
        %v5574 = vpop.f32.mrb[0].mxu0
        %5575 = vmatprep.mubr.bf16.mxu0 0
        %5576 = vmatmul.mubr.bf16.gmra.mrb[0].mxu0 %v5067
        %v5577 = vpop.f32.mrb[0].mxu0
        %v5578 = vadd.f32 %v5417, %v5577
        %v5579 = vpop.f32.mrb[0].mxu0
        %v5580 = vpop.f32.mrb[0].mxu0
        %v5581 = vadd.f32 %v5420, %v5580
        %v5582 = vpop.f32.mrb[0].mxu0
        %5583 = vmatprep.mubr.bf16.mxu0 0
        %5584 = vmatmul.mubr.bf16.gmra.mrb[0].mxu0 %v5070
        %v5585 = vpop.f32.mrb[0].mxu0
        %v5586 = vadd.f32 %v5425, %v5585
        %v5587 = vpop.f32.mrb[0].mxu0
        %v5588 = vpop.f32.mrb[0].mxu0
        %v5589 = vadd.f32 %v5428, %v5588
        %v5590 = vpop.f32.mrb[0].mxu0
        %5591 = vdwg.mxu0
        %v5592 = vmax.f32 %v5466, 0.0
        %v5593 = vmax.f32 %v5469, 0.0
        %v5594 = vmax.f32 %v5474, 0.0
        %v5595 = vmax.f32 %v5477, 0.0
        %v5596 = vmax.f32 %v5482, 0.0
        %v5597 = vmax.f32 %v5485, 0.0
        %v5598 = vmax.f32 %v5490, 0.0
        %v5599 = vmax.f32 %v5493, 0.0
        %v5600 = vmax.f32 %v5498, 0.0
        %v5601 = vmax.f32 %v5501, 0.0
        %v5602 = vmax.f32 %v5506, 0.0
        %v5603 = vmax.f32 %v5509, 0.0
        %v5604 = vmax.f32 %v5514, 0.0
        %v5605 = vmax.f32 %v5517, 0.0
        %v5606 = vmax.f32 %v5522, 0.0
        %v5607 = vmax.f32 %v5525, 0.0
        %v5608 = vmax.f32 %v5530, 0.0
        %v5609 = vmax.f32 %v5533, 0.0
        %v5610 = vmax.f32 %v5538, 0.0
        %v5611 = vmax.f32 %v5541, 0.0
        %v5612 = vmax.f32 %v5546, 0.0
        %v5613 = vmax.f32 %v5549, 0.0
        %v5614 = vmax.f32 %v5554, 0.0
        %v5615 = vmax.f32 %v5557, 0.0
        %v5616 = vmax.f32 %v5562, 0.0
        %v5617 = vmax.f32 %v5565, 0.0
        %v5618 = vmax.f32 %v5570, 0.0
        %v5619 = vmax.f32 %v5573, 0.0
        %v5620 = vmax.f32 %v5578, 0.0
        %v5621 = vmax.f32 %v5581, 0.0
        %v5622 = vmax.f32 %v5586, 0.0
        %v5623 = vmax.f32 %v5589, 0.0
        %v5624 = vsel %vm1947, %v5595, -inf
        %v5625 = vmax.f32 %v5592, %v5593
        %v5626 = vmax.f32 %v5594, %v5624
        %v5627 = vmax.f32 %v5625, %v5626
        %v5628 = vrot.slane %v5627, 4
        %v5629 = vmax.f32 %v5627, %v5628
        %v5630 = vrot.slane %v5629, 2
        %v5631 = vmax.f32 %v5629, %v5630
        %v5632 = vrot.slane %v5631, 1
        %v5633 = vmax.f32 %v5631, %v5632
        %v5634 = vsel %vm1947, %v5599, -inf
        %v5635 = vmax.f32 %v5596, %v5597
        %v5636 = vmax.f32 %v5598, %v5634
        %v5637 = vmax.f32 %v5635, %v5636
        %v5638 = vrot.slane %v5637, 4
        %v5639 = vmax.f32 %v5637, %v5638
        %v5640 = vrot.slane %v5639, 2
        %v5641 = vmax.f32 %v5639, %v5640
        %v5642 = vrot.slane %v5641, 1
        %v5643 = vmax.f32 %v5641, %v5642
        %v5644 = vsel %vm1947, %v5603, -inf
        %v5645 = vmax.f32 %v5600, %v5601
        %v5646 = vmax.f32 %v5602, %v5644
        %v5647 = vmax.f32 %v5645, %v5646
        %v5648 = vrot.slane %v5647, 4
        %v5649 = vmax.f32 %v5647, %v5648
        %v5650 = vrot.slane %v5649, 2
        %v5651 = vmax.f32 %v5649, %v5650
        %v5652 = vrot.slane %v5651, 1
        %v5653 = vmax.f32 %v5651, %v5652
        %v5654 = vsel %vm1947, %v5607, -inf
        %v5655 = vmax.f32 %v5604, %v5605
        %v5656 = vmax.f32 %v5606, %v5654
        %v5657 = vmax.f32 %v5655, %v5656
        %v5658 = vrot.slane %v5657, 4
        %v5659 = vmax.f32 %v5657, %v5658
        %v5660 = vrot.slane %v5659, 2
        %v5661 = vmax.f32 %v5659, %v5660
        %v5662 = vrot.slane %v5661, 1
        %v5663 = vmax.f32 %v5661, %v5662
        %v5664 = vsel %vm1947, %v5611, -inf
        %v5665 = vmax.f32 %v5608, %v5609
        %v5666 = vmax.f32 %v5610, %v5664
        %v5667 = vmax.f32 %v5665, %v5666
        %v5668 = vrot.slane %v5667, 4
        %v5669 = vmax.f32 %v5667, %v5668
        %v5670 = vrot.slane %v5669, 2
        %v5671 = vmax.f32 %v5669, %v5670
        %v5672 = vrot.slane %v5671, 1
        %v5673 = vmax.f32 %v5671, %v5672
        %v5674 = vsel %vm1947, %v5615, -inf
        %v5675 = vmax.f32 %v5612, %v5613
        %v5676 = vmax.f32 %v5614, %v5674
        %v5677 = vmax.f32 %v5675, %v5676
        %v5678 = vrot.slane %v5677, 4
        %v5679 = vmax.f32 %v5677, %v5678
        %v5680 = vrot.slane %v5679, 2
        %v5681 = vmax.f32 %v5679, %v5680
        %v5682 = vrot.slane %v5681, 1
        %v5683 = vmax.f32 %v5681, %v5682
        %v5684 = vsel %vm1947, %v5619, -inf
        %v5685 = vmax.f32 %v5616, %v5617
        %v5686 = vmax.f32 %v5618, %v5684
        %v5687 = vmax.f32 %v5685, %v5686
        %v5688 = vrot.slane %v5687, 4
        %v5689 = vmax.f32 %v5687, %v5688
        %v5690 = vrot.slane %v5689, 2
        %v5691 = vmax.f32 %v5689, %v5690
        %v5692 = vrot.slane %v5691, 1
        %v5693 = vmax.f32 %v5691, %v5692
        %v5694 = vsel %vm1947, %v5623, -inf
        %v5695 = vmax.f32 %v5620, %v5621
        %v5696 = vmax.f32 %v5622, %v5694
        %v5697 = vmax.f32 %v5695, %v5696
        %v5698 = vrot.slane %v5697, 4
        %v5699 = vmax.f32 %v5697, %v5698
        %v5700 = vrot.slane %v5699, 2
        %v5701 = vmax.f32 %v5699, %v5700
        %v5702 = vrot.slane %v5701, 1
        %v5703 = vmax.f32 %v5701, %v5702
        %v5704 = vsel %vm1945, %v5633, %v5643
        %v5705 = vsel %vm1947, %v5704, %v5653
        %v5706 = vsel %vm1949, %v5705, %v5663
        %v5707 = vsel %vm1951, %v5706, %v5673
        %v5708 = vsel %vm870, %v5707, %v5683
        %v5709 = vsel %vm1166, %v5708, %v5693
        %v5710 = vsel %vm1068, %v5709, %v5703
        %v5711 = vpack.c.bf16 %v1955, %v1955
        %v5712 = vpack.c.bf16 %v3420, %v3420
        %v5713 = vpack.c.bf16 %v5710, %v5710
        %v5714 = vld [vmem:[#allocation10] sm:$0xf]
        %v5715 = vld [vmem:[#allocation10 + $0x4] sm:$0xf]
        %v5716 = vld [vmem:[#allocation10 + $0x8] sm:$0xf]
        %v5717 = vld [vmem:[#allocation10 + $0xc] sm:$0xf]
        %v5718 = vld [vmem:[#allocation10 + $0x10] sm:$0xf]
        %v5719 = vld [vmem:[#allocation10 + $0x14] sm:$0xf]
        %v5720 = vld [vmem:[#allocation10 + $0x18] sm:$0xf]
        %v5721 = vld [vmem:[#allocation10 + $0x1c] sm:$0xf]
        %v5722 = vld [vmem:[#allocation10 + $0x20] sm:$0xf]
        %v5723 = vld [vmem:[#allocation10 + $0x24] sm:$0xf]
        %v5724 = vld [vmem:[#allocation10 + $0x28] sm:$0xf]
        %v5725 = vld [vmem:[#allocation10 + $0x2c] sm:$0xf]
        %v5726 = vld [vmem:[#allocation10 + $0x30] sm:$0xf]
        %v5727 = vld [vmem:[#allocation10 + $0x34] sm:$0xf]
        %v5728 = vld [vmem:[#allocation10 + $0x38] sm:$0xf]
        %v5729 = vld [vmem:[#allocation10 + $0x3c] sm:$0xf]
        %v5730 = vld [vmem:[#allocation10 + $0x40] sm:$0xf]
        %v5731 = vld [vmem:[#allocation10 + $0x44] sm:$0xf]
        %v5732 = vld [vmem:[#allocation10 + $0x48] sm:$0xf]
        %v5733 = vld [vmem:[#allocation10 + $0x4c] sm:$0xf]
        %v5734 = vld [vmem:[#allocation10 + $0x50] sm:$0xf]
        %v5735 = vld [vmem:[#allocation10 + $0x54] sm:$0xf]
        %v5736 = vld [vmem:[#allocation10 + $0x58] sm:$0xf]
        %v5737 = vld [vmem:[#allocation10 + $0x5c] sm:$0xf]
        %v5738 = vld [vmem:[#allocation10 + $0x60] sm:$0xf]
        %v5739 = vld [vmem:[#allocation10 + $0x64] sm:$0xf]
        %v5740 = vld [vmem:[#allocation10 + $0x68] sm:$0xf]
        %v5741 = vld [vmem:[#allocation10 + $0x6c] sm:$0xf]
        %v5742 = vld [vmem:[#allocation10 + $0x70] sm:$0xf]
        %v5743 = vld [vmem:[#allocation10 + $0x74] sm:$0xf]
        %v5744 = vld [vmem:[#allocation10 + $0x78] sm:$0xf]
        %v5745 = vld [vmem:[#allocation10 + $0x7c] sm:$0xf]
        %v5746 = vld [vmem:[#allocation10 + $0x80] sm:$0xf]
        %v5747 = vld [vmem:[#allocation10 + $0x84] sm:$0xf]
        %v5748 = vld [vmem:[#allocation10 + $0x88] sm:$0xf]
        %v5749 = vld [vmem:[#allocation10 + $0x8c] sm:$0xf]
        %v5750 = vld [vmem:[#allocation10 + $0x90] sm:$0xf]
        %v5751 = vld [vmem:[#allocation10 + $0x94] sm:$0xf]
        %v5752 = vld [vmem:[#allocation10 + $0x98] sm:$0xf]
        %v5753 = vld [vmem:[#allocation10 + $0x9c] sm:$0xf]
        %v5754 = vld [vmem:[#allocation10 + $0xa0] sm:$0xf]
        %v5755 = vld [vmem:[#allocation10 + $0xa4] sm:$0xf]
        %v5756 = vld [vmem:[#allocation10 + $0xa8] sm:$0xf]
        %v5757 = vld [vmem:[#allocation10 + $0xac] sm:$0xf]
        %v5758 = vld [vmem:[#allocation10 + $0xb0] sm:$0xf]
        %v5759 = vld [vmem:[#allocation10 + $0xb4] sm:$0xf]
        %v5760 = vld [vmem:[#allocation10 + $0xb8] sm:$0xf]
        %v5761 = vld [vmem:[#allocation10 + $0xbc] sm:$0xf]
        %v5762 = vld [vmem:[%s15] sm:$0x1]
        %v5764 = vlaneseq
        %v5765 = vshrl.u32 %v5764, 7
        %v5766 = vsub.s32 0, %v5765
        %v5767 = vrot.slane %v5762, %v5766
        %v5817 = vunpack.c.l.b16 %v5714
        %v5818 = vunpack.c.l.b16 %v5715
        %v5819 = vunpack.c.l.b16 %v5716
        %v5820 = vunpack.c.l.b16 %v5717
        %v5821 = vunpack.c.l.b16 %v5718
        %v5822 = vunpack.c.l.b16 %v5719
        %v5823 = vunpack.c.l.b16 %v5720
        %v5824 = vunpack.c.l.b16 %v5721
        %v5825 = vunpack.c.l.b16 %v5722
        %v5826 = vunpack.c.l.b16 %v5723
        %v5827 = vunpack.c.l.b16 %v5724
        %v5828 = vunpack.c.l.b16 %v5725
        %v5829 = vunpack.c.l.b16 %v5726
        %v5830 = vunpack.c.l.b16 %v5727
        %v5831 = vunpack.c.l.b16 %v5728
        %v5832 = vunpack.c.l.b16 %v5729
        %v5833 = vunpack.c.l.b16 %v5730
        %v5834 = vunpack.c.l.b16 %v5731
        %v5835 = vunpack.c.l.b16 %v5732
        %v5836 = vunpack.c.l.b16 %v5733
        %v5837 = vunpack.c.l.b16 %v5734
        %v5838 = vunpack.c.l.b16 %v5735
        %v5839 = vunpack.c.l.b16 %v5736
        %v5840 = vunpack.c.l.b16 %v5737
        %v5841 = vunpack.c.l.b16 %v5738
        %v5842 = vunpack.c.l.b16 %v5739
        %v5843 = vunpack.c.l.b16 %v5740
        %v5844 = vunpack.c.l.b16 %v5741
        %v5845 = vunpack.c.l.b16 %v5742
        %v5846 = vunpack.c.l.b16 %v5743
        %v5847 = vunpack.c.l.b16 %v5744
        %v5848 = vunpack.c.l.b16 %v5745
        %v5849 = vunpack.c.l.b16 %v5746
        %v5850 = vunpack.c.l.b16 %v5747
        %v5851 = vunpack.c.l.b16 %v5748
        %v5852 = vunpack.c.l.b16 %v5749
        %v5853 = vunpack.c.l.b16 %v5750
        %v5854 = vunpack.c.l.b16 %v5751
        %v5855 = vunpack.c.l.b16 %v5752
        %v5856 = vunpack.c.l.b16 %v5753
        %v5857 = vunpack.c.l.b16 %v5754
        %v5858 = vunpack.c.l.b16 %v5755
        %v5859 = vunpack.c.l.b16 %v5756
        %v5860 = vunpack.c.l.b16 %v5757
        %v5861 = vunpack.c.l.b16 %v5758
        %v5862 = vunpack.c.l.b16 %v5759
        %v5863 = vunpack.c.l.b16 %v5760
        %v5864 = vunpack.c.l.b16 %v5761
        %v5865 = vpack.c.b16 %v5818, %v5817
        %v5866 = vpack.c.b16 %v5820, %v5819
        %v5867 = vpack.c.b16 %v5822, %v5821
        %v5868 = vpack.c.b16 %v5824, %v5823
        %v5869 = vpack.c.b16 %v5826, %v5825
        %v5870 = vpack.c.b16 %v5828, %v5827
        %v5871 = vpack.c.b16 %v5830, %v5829
        %v5872 = vpack.c.b16 %v5832, %v5831
        %v5873 = vpack.c.b16 %v5834, %v5833
        %v5874 = vpack.c.b16 %v5836, %v5835
        %v5875 = vpack.c.b16 %v5838, %v5837
        %v5876 = vpack.c.b16 %v5840, %v5839
        %v5877 = vpack.c.b16 %v5842, %v5841
        %v5878 = vpack.c.b16 %v5844, %v5843
        %v5879 = vpack.c.b16 %v5846, %v5845
        %v5880 = vpack.c.b16 %v5848, %v5847
        %v5881 = vpack.c.b16 %v5850, %v5849
        %v5882 = vpack.c.b16 %v5852, %v5851
        %v5883 = vpack.c.b16 %v5854, %v5853
        %v5884 = vpack.c.b16 %v5856, %v5855
        %v5885 = vpack.c.b16 %v5858, %v5857
        %v5886 = vpack.c.b16 %v5860, %v5859
        %v5887 = vpack.c.b16 %v5862, %v5861
        %v5888 = vpack.c.b16 %v5864, %v5863
        %5913 = vmatprep.subr.bf16.mxu0 0
        %5914 = vmatpush1.bf16.msra.mxu0 %v5865
        %5915 = vmatprep.subr.bf16.mxu0 0
        %5916 = vmatpush1.bf16.msra.mxu0 %v5866
        %5917 = vmatprep.subr.bf16.mxu0 0
        %5918 = vmatpush1.bf16.msra.mxu0 %v5867
        %5919 = vmatprep.subr.bf16.mxu0 0
        %5920 = vmatpush1.bf16.msra.mxu0 %v5868
        %5921 = vmatprep.subr.bf16.mxu0 0
        %5922 = vmatpush1.bf16.msra.mxu0 %v5869
        %5923 = vmatprep.subr.bf16.mxu0 0
        %5924 = vmatpush1.bf16.msra.mxu0 %v5870
        %5925 = vmatprep.subr.bf16.mxu0 0
        %5926 = vmatpush1.bf16.msra.mxu0 %v5871
        %5927 = vmatprep.subr.bf16.mxu0 0
        %5928 = vmatpush1.bf16.msra.mxu0 %v5872
        %5929 = vmatprep.subr.bf16.mxu0 0
        %5930 = vmatpush1.bf16.msra.mxu0 %v5873
        %5931 = vmatprep.subr.bf16.mxu0 0
        %5932 = vmatpush1.bf16.msra.mxu0 %v5874
        %5933 = vmatprep.subr.bf16.mxu0 0
        %5934 = vmatpush1.bf16.msra.mxu0 %v5875
        %5935 = vmatprep.subr.bf16.mxu0 0
        %5936 = vmatpush1.bf16.msra.mxu0 %v5876
        %5937 = vmatprep.subr.bf16.mxu0 0
        %5938 = vmatpush1.bf16.msra.mxu0 %v5877
        %5939 = vmatprep.subr.bf16.mxu0 0
        %5940 = vmatpush1.bf16.msra.mxu0 %v5878
        %5941 = vmatprep.subr.bf16.mxu0 0
        %5942 = vmatpush1.bf16.msra.mxu0 %v5879
        %5943 = vmatprep.subr.bf16.mxu0 0
        %5944 = vmatpush1.bf16.msra.mxu0 %v5880
        %5945 = vmatprep.mubr.bf16.mxu0 %v5712
        %5946 = vmatmul.mubr.bf16.gmra.mrb[0].mxu0 %v5711
        %v5947 = vpop.f32.mrb[0].mxu0
        %v5948 = vadd.f32 %v5767, %v5947
        %v5949 = vpop.f32.mrb[0].mxu0
        %v5950 = vpop.f32.mrb[0].mxu0
        %v5951 = vpop.f32.mrb[0].mxu0
        %5952 = vdwg.mxu0
        %5953 = vmatprep.subr.bf16.mxu0 0
        %5954 = vmatpush1.bf16.msra.mxu0 %v5881
        %5955 = vmatprep.subr.bf16.mxu0 0
        %5956 = vmatpush1.bf16.msra.mxu0 %v5882
        %5957 = vmatprep.subr.bf16.mxu0 0
        %5958 = vmatpush1.bf16.msra.mxu0 %v5883
        %5959 = vmatprep.subr.bf16.mxu0 0
        %5960 = vmatpush1.bf16.msra.mxu0 %v5884
        %5961 = vmatprep.subr.bf16.mxu0 0
        %5962 = vmatpush1.bf16.msra.mxu0 %v5885
        %5963 = vmatprep.subr.bf16.mxu0 0
        %5964 = vmatpush1.bf16.msra.mxu0 %v5886
        %5965 = vmatprep.subr.bf16.mxu0 0
        %5966 = vmatpush1.bf16.msra.mxu0 %v5887
        %5967 = vmatprep.subr.bf16.mxu0 0
        %5968 = vmatpush1.bf16.msra.mxu0 %v5888
        %5969 = vmatprep.subr.bf16.mxu0 0
        %5970 = vmatpush1.bf16.msra.mxu0 0
        %5971 = vmatprep.subr.bf16.mxu0 0
        %5972 = vmatpush1.bf16.msra.mxu0 0
        %5973 = vmatprep.subr.bf16.mxu0 0
        %5974 = vmatpush1.bf16.msra.mxu0 0
        %5975 = vmatprep.subr.bf16.mxu0 0
        %5976 = vmatpush1.bf16.msra.mxu0 0
        %5977 = vmatprep.subr.bf16.mxu0 0
        %5978 = vmatpush1.bf16.msra.mxu0 0
        %5979 = vmatprep.subr.bf16.mxu0 0
        %5980 = vmatpush1.bf16.msra.mxu0 0
        %5981 = vmatprep.subr.bf16.mxu0 0
        %5982 = vmatpush1.bf16.msra.mxu0 0
        %5983 = vmatprep.subr.bf16.mxu0 0
        %5984 = vmatpush1.bf16.msra.mxu0 0
        %5985 = vmatprep.mubr.bf16.mxu0 0
        %5986 = vmatmul.mubr.bf16.gmra.mrb[0].mxu0 %v5713
        %v5987 = vpop.f32.mrb[0].mxu0
        %v5988 = vadd.f32 %v5948, %v5987
        %v5989 = vpop.f32.mrb[0].mxu0
        %v5990 = vpop.f32.mrb[0].mxu0
        %v5991 = vpop.f32.mrb[0].mxu0
        %5992 = vdwg.mxu0
        %5993 = vst [vmem:[%s588] sm:$0xff] %v5988
        %s5994 = sand.u32 %s382, 1
        %s5995 = scalar_lea.sflag [#allocation4], %s5994
        %s5996 = sand.u32 %s382, 1
        %s5997 = smul.addr %s5996, 8
        %s5998 = scalar_lea.vmem [#allocation11], %s5997
        // Predicated region
        $region105: #{tpu_custom_call.1} parent=83 // pred_check
          %p5999 = pneg %p392
        $region106: #{tpu_custom_call.1} parent=83 // pred_check_branch
          %6001 = sbr.rel (%p5999) target = $region108
        $region107: #{tpu_custom_call.1} parent=83 // pred_region
          %s6003 = ssub.s32 128, 128
          %6004 = vsyncadd %s5995, %s6003
          %s6005 = smul.addr %s33, 128
          %s6006 = scalar_lea.hbm %s16, %s6005
          %s6008 = sshll.u32 %s5998, 4
          %s6009 = int_to_ptr.vmem [resolvable:$true] %s6008
          %6011 = dma.vmem_to_hbm [thread:$0]  %s6009, 128, %s6006, %s5995
        $region108: #{tpu_custom_call.1} parent=83 // pred_fallthru
          _
      $region84: #{tpu_custom_call.1} parent=5 // pred_fallthru
        _
      %p6012 = scmp.le.s32.totalorder 2, %s28
      // Predicated region
      $region109: #{tpu_custom_call.1} parent=5 // pred_check
        %p6013 = pneg %p6012
      $region110: #{tpu_custom_call.1} parent=5 // pred_check_branch
        %6015 = sbr.rel (%p6013) target = $region112
      $region111: #{tpu_custom_call.1} parent=5 // pred_region
        %s6016 = ssub.s32 %s28, 2
        // Predicated region
        $region113: #{tpu_custom_call.1} parent=111 // pred_check
          %p6017 = pneg %p398
        $region114: #{tpu_custom_call.1} parent=111 // pred_check_branch
          %6019 = sbr.rel (%p6017) target = $region116
        $region115: #{tpu_custom_call.1} parent=111 // pred_region
          %s6020 = sand.u32 %s383, 1
          %s6021 = scalar_lea.sflag [#allocation4], %s6020
          %s6022 = sand.u32 %s383, 1
          %s6023 = smul.addr %s6022, 8
          %s6024 = scalar_lea.vmem [#allocation11], %s6023
          %6025 = dma.done %s6021, 128
        $region116: #{tpu_custom_call.1} parent=111 // pred_fallthru
          _
      $region112: #{tpu_custom_call.1} parent=5 // pred_fallthru
        _
    $region6: #{tpu_custom_call.1} parent=1 // loop_footer
      %s32 = sadd.s32 1, %s28
    $region7: #{tpu_custom_call.1} parent=1 // loop_footer_branch
      %27 = sbr.rel target = $region3
    $region8: #{tpu_custom_call.1} parent=1 // loop_exit
      _
    %6026 = vsyncpa [#allocation3], 1
    %s6027 = scalar_lea.sflag [#allocation3], 1
    %6028 = vsyncpa %s6027, 1
    %6029 = vsyncpa [#allocation6], 1
    %6030 = vsyncpa [#allocation9], 1
    %6031 = vsyncpa [#allocation4], 1
    %s6032 = scalar_lea.sflag [#allocation4], 1
    %6033 = vsyncpa %s6032, 1

</llo_original>
